<compile_context>
chip_gen: v6e
topology: v6e:2x2x1
jax: 0.10.0
libtpu: 0.0.40
codegen_flags: <defaults>
</compile_context>

<pallas_src>
import functools

import jax
import jax.numpy as jnp
from jax.experimental import pallas as pl
from jax.experimental.pallas import tpu as pltpu


# ---------------------------------------------------------------------------
# Chip / VMEM budgeting helpers (trace-time, host side)
# ---------------------------------------------------------------------------
def _chip_budget():
    """Returns (vmem_capacity_bytes, target_row_tile_bytes)."""
    vmem = 0
    try:
        vmem = int(getattr(pltpu.get_tpu_info(), "vmem_capacity_bytes", 0))
    except Exception:
        vmem = 0
    kind = ""
    try:
        kind = jax.devices()[0].device_kind.lower()
    except Exception:
        kind = ""
    if vmem <= 0:
        # Fallback by generation: v5e/v6e have 128 MiB of VMEM per TensorCore,
        # v7x has 64 MiB; unknown chips get the conservative 64 MiB.
        vmem = 128 * 1024 * 1024 if ("v5" in kind or "v6" in kind) else 64 * 1024 * 1024
    # Bandwidth-scaled row-tile target: on v7x (~3.2 TB/s HBM) a 1-2 MiB tile is
    # per-grid-step-overhead dominated, so aim for 4 MiB there; 2 MiB is already
    # past the measured roofline knee on v5e/v6e.
    is_v7x_class = ("v7" in kind) or (vmem <= 64 * 1024 * 1024)
    target = (4 if is_v7x_class else 2) * 1024 * 1024
    return vmem, target


def _pick_row_tile(n, h, itemsize, vmem_cap, n_bufs, target_bytes):
    """Largest sublane-aligned row tile fitting the VMEM budget & tile target.

    n_bufs = number of (tile, H)-sized buffers the pass keeps live: 2 for the
    reduction pass (double-buffered input only), 4 for the streaming pass
    (double-buffered input + output).
    """
    sub = max(8, 32 // itemsize)          # sublane packing: f32 8, bf16 16, int8 32
    row_bytes = h * itemsize
    by_budget = max((vmem_cap // 2) // (n_bufs * row_bytes), 1)
    by_target = max(target_bytes // row_bytes, 1)
    tn = min(by_budget, by_target)
    if tn >= n:
        return n                          # single full-extent block
    tn = max((tn // sub) * sub, sub)
    return min(tn, n)


# ---------------------------------------------------------------------------
# Fast path kernel (x resident in VMEM): mean -> fc1/relu/fc2/sigmoid -> x*gate
# ---------------------------------------------------------------------------
def _fused_kernel(x_ref, w1_ref, b1_ref, w2t_ref, b2_ref, o_ref, *, inv_n):
    # Column mean with f32 accumulation (safe even if x is bf16).
    pooled = jnp.sum(x_ref[...], axis=0, keepdims=True, dtype=jnp.float32) * inv_n  # (1, H)
    # Squeeze/excite gate.  R = H // reduction is tiny, so broadcast-mul + lane
    # reductions (VPU/XLU) beat waking the MXU at these sizes.
    # TODO(synk): switch h1/z to jnp.dot (MXU) if H grows into the multi-thousand range.
    h1 = jnp.sum(w1_ref[...] * pooled, axis=1, keepdims=True) + b1_ref[...]          # (R, 1)
    h1 = jnp.maximum(h1, 0.0)
    z = jnp.sum(w2t_ref[...] * h1, axis=0, keepdims=True) + b2_ref[...]              # (1, H)
    gate = jax.nn.sigmoid(z)                                                         # (1, H) f32
    # Multiply in x.dtype (gate rounded to x.dtype when x is bf16 - deliberate
    # precision choice; keeps v5e's store path minimal).
    o_ref[...] = x_ref[...] * gate.astype(o_ref.dtype)


# ---------------------------------------------------------------------------
# Pass 1 kernel: partial column sums (f32), one output row per parallel slice
# ---------------------------------------------------------------------------
def _colsum_kernel(x_ref, psum_ref, *, tn, n_rows, tiles_per, need_mask):
    i = pl.program_id(1)                  # reduction axis ("arbitrary", innermost)

    @pl.when(i == 0)
    def _():
        psum_ref[...] = jnp.zeros_like(psum_ref)

    xv = x_ref[...]
    if need_mask:                         # static: ragged trailing / overshoot tiles
        c = pl.program_id(0)
        row0 = (c * tiles_per + i) * tn   # intended (unclamped) global row offset
        rows = row0 + jax.lax.broadcasted_iota(jnp.int32, (xv.shape[0], 1), 0)
        xv = jnp.where(rows < n_rows, xv, 0)
    psum_ref[...] += jnp.sum(xv, axis=0, keepdims=True, dtype=jnp.float32)


# ---------------------------------------------------------------------------
# Pass 2 kernel: streaming excite (broadcast multiply over dim 0)
# ---------------------------------------------------------------------------
def _excite_kernel(x_ref, gate_ref, o_ref):
    # Single multiply in x.dtype - no f32 temporaries; the pass stays HBM-bound.
    o_ref[...] = x_ref[...] * gate_ref[...]


# ---------------------------------------------------------------------------
# Forward pass
# ---------------------------------------------------------------------------
def se_block(x, w1, b1, w2, b2, *, force_two_pass=False):
    """SEBlock forward.  x: (N, H).  Params in PyTorch nn.Linear layout:
    w1 (R, H), b1 (R,), w2 (H, R), b2 (H,) with R = H // reduction."""
    N, H = x.shape
    R = w1.shape[0]
    itemsize = jnp.dtype(x.dtype).itemsize

    vmem_cap, target_tile = _chip_budget()
    vmem_limit = int(min(vmem_cap * 3 // 4, 112 * 1024 * 1024))

    f32 = jnp.float32
    w1f = w1.astype(f32)
    b1f = b1.astype(f32)
    w2f = w2.astype(f32)
    b2f = b2.astype(f32)

    # ---------------- fast path: x resident in VMEM, one fused kernel --------
    x_bytes = N * H * itemsize
    param_bytes = 4 * (2 * R * H + R + H)
    if (not force_two_pass) and (2 * x_bytes + 4 * param_bytes <= vmem_cap // 2):
        return pl.pallas_call(
            functools.partial(_fused_kernel, inv_n=1.0 / N),
            out_shape=jax.ShapeDtypeStruct((N, H), x.dtype),
            compiler_params=pltpu.CompilerParams(vmem_limit_bytes=vmem_limit),
        )(x, w1f, b1f.reshape(R, 1), w2f.T, b2f.reshape(1, H))

    # ---------------- pass 1: partial column sums ----------------------------
    tn1 = _pick_row_tile(N, H, itemsize, vmem_cap, n_bufs=2, target_bytes=target_tile)
    n_tiles1 = pl.cdiv(N, tn1)
    n_par = 2 if n_tiles1 >= 2 else 1     # shards across both v7x TCs; harmless on 1-TC chips
    tiles_per = pl.cdiv(n_tiles1, n_par)
    overshoot = n_par * tiles_per > n_tiles1
    need_mask = overshoot or (N % tn1 != 0)

    def x1_map(c, i):
        g = c * tiles_per + i
        if overshoot:                     # static check; clamp to a valid block index
            g = jnp.minimum(g, n_tiles1 - 1)
        return (g, 0)

    psums = pl.pallas_call(
        functools.partial(_colsum_kernel, tn=tn1, n_rows=N, tiles_per=tiles_per,
                          need_mask=need_mask),
        out_shape=jax.ShapeDtypeStruct((n_par, H), f32),
        grid=(n_par, tiles_per),
        in_specs=[pl.BlockSpec((tn1, H), x1_map)],
        out_specs=pl.BlockSpec((1, H), lambda c, i: (c, 0)),
        compiler_params=pltpu.CompilerParams(
            dimension_semantics=("parallel", "arbitrary"),
            vmem_limit_bytes=vmem_limit,
        ),
    )(x)

    # ---------------- tiny epilogue: finish mean + squeeze/excite gate -------
    pooled = jnp.sum(psums, axis=0, keepdims=True) * (1.0 / N)       # (1, H) f32
    h1 = jnp.maximum(pooled @ w1f.T + b1f, 0.0)                      # (1, R)
    z = h1 @ w2f.T + b2f                                             # (1, H)
    gate = jax.nn.sigmoid(z).astype(x.dtype)                         # (1, H), x.dtype

    # ---------------- pass 2: streaming broadcast multiply -------------------
    tn2 = _pick_row_tile(N, H, itemsize, vmem_cap, n_bufs=4, target_bytes=target_tile)
    out = pl.pallas_call(
        _excite_kernel,
        out_shape=jax.ShapeDtypeStruct((N, H), x.dtype),
        grid=(pl.cdiv(N, tn2),),
        in_specs=[
            pl.BlockSpec((tn2, H), lambda i: (i, 0)),
            pl.BlockSpec((1, H), lambda i: (0, 0)),
        ],
        out_specs=pl.BlockSpec((tn2, H), lambda i: (i, 0)),
        compiler_params=pltpu.CompilerParams(
            dimension_semantics=("parallel",),
            vmem_limit_bytes=vmem_limit,
        ),
    )(x, gate)
    return out


# ---------------------------------------------------------------------------
# Pure-JAX reference (same math as the PyTorch module, f32)
# ---------------------------------------------------------------------------
def se_block_ref(x, w1, b1, w2, b2):
    pooled = jnp.mean(x, axis=0, keepdims=True)                      # (1, H)
    h = jnp.maximum(pooled @ w1.T + b1, 0.0)                         # (1, R)
    z = h @ w2.T + b2                                                # (1, H)
    return x * jax.nn.sigmoid(z)


if __name__ == "__main__":
    # Shapes consistent with the module: hidden_dim H (lane-dense multiple of
    # 128), reduction=16 -> R = H // 16.
    H, REDUCTION = 256, 16
    R = H // REDUCTION

    key = jax.random.PRNGKey(0)
    kx1, k1, k2, k3, k4, kx2 = jax.random.split(key, 6)

    # PyTorch nn.Linear parameter shapes: weight (out, in), bias (out,)
    w1 = jax.random.normal(k1, (R, H), dtype=jnp.float32) * 0.1
    b1 = jax.random.normal(k2, (R,), dtype=jnp.float32) * 0.1
    w2 = jax.random.normal(k3, (H, R), dtype=jnp.float32) * 0.1
    b2 = jax.random.normal(k4, (H,), dtype=jnp.float32) * 0.1

    # Case 1: VMEM-resident fast path (single fused kernel, 2x HBM traffic).
    x1 = jax.random.normal(kx1, (4096, H), dtype=jnp.float32)
    out1 = jax.block_until_ready(jax.jit(se_block)(x1, w1, b1, w2, b2))
    ref1 = se_block_ref(x1, w1, b1, w2, b2)
    assert out1.shape == x1.shape
    assert jnp.allclose(out1, ref1, atol=1e-4, rtol=1e-4), "fast path mismatch"

    # Case 2: force the tiled two-pass path (exercises the 2-way-parallel
    # partial-sum grid with ragged-tile masking and the streaming excite pass).
    x2 = jax.random.normal(kx2, (6001, H), dtype=jnp.float32)
    two_pass_fn = jax.jit(functools.partial(se_block, force_two_pass=True))
    out2 = jax.block_until_ready(two_pass_fn(x2, w1, b1, w2, b2))
    ref2 = se_block_ref(x2, w1, b1, w2, b2)
    assert out2.shape == x2.shape
    assert jnp.allclose(out2, ref2, atol=1e-4, rtol=1e-4), "two-pass mismatch"

    print("KERNEL_OK")
</pallas_src>

<mosaic_0001>
module attributes {stable_mosaic.version = 11 : i64} {
  func.func @_fused_kernel(%arg0: memref<4096x256xf32, #tpu.memory_space<vmem>>, %arg1: memref<16x256xf32, #tpu.memory_space<vmem>>, %arg2: memref<16x1xf32, #tpu.memory_space<vmem>>, %arg3: memref<16x256xf32, #tpu.memory_space<vmem>>, %arg4: memref<1x256xf32, #tpu.memory_space<vmem>>, %arg5: memref<4096x256xf32, #tpu.memory_space<vmem>>) attributes {dimension_semantics = [], scalar_prefetch = 0 : i64, scratch_operands = 0 : i64, tpu.core_type = #tpu.core_type<tc>} {
    %c0 = arith.constant 0 : index
    %c0_0 = arith.constant 0 : index
    %0 = vector.load %arg0[%c0, %c0_0] : memref<4096x256xf32, #tpu.memory_space<vmem>>, vector<4096x256xf32>
    %cst = arith.constant dense<0.000000e+00> : vector<256xf32>
    %1 = vector.multi_reduction <add>, %0, %cst [0] : vector<4096x256xf32> to vector<256xf32>
    %2 = vector.shape_cast %1 : vector<256xf32> to vector<1x256xf32>
    %cst_1 = arith.constant 2.44140625E-4 : f32
    %3 = vector.broadcast %cst_1 : f32 to vector<1x256xf32>
    %4 = arith.mulf %2, %3 : vector<1x256xf32>
    %c0_2 = arith.constant 0 : index
    %c0_3 = arith.constant 0 : index
    %5 = vector.load %arg1[%c0_2, %c0_3] : memref<16x256xf32, #tpu.memory_space<vmem>>, vector<16x256xf32>
    %6 = vector.broadcast %4 : vector<1x256xf32> to vector<16x256xf32>
    %7 = arith.mulf %5, %6 : vector<16x256xf32>
    %cst_4 = arith.constant dense<0.000000e+00> : vector<16xf32>
    %8 = vector.multi_reduction <add>, %7, %cst_4 [1] : vector<16x256xf32> to vector<16xf32>
    %9 = vector.shape_cast %8 : vector<16xf32> to vector<16x1xf32>
    %c0_5 = arith.constant 0 : index
    %c0_6 = arith.constant 0 : index
    %10 = vector.load %arg2[%c0_5, %c0_6] : memref<16x1xf32, #tpu.memory_space<vmem>>, vector<16x1xf32>
    %11 = arith.addf %9, %10 : vector<16x1xf32>
    %cst_7 = arith.constant 0.000000e+00 : f32
    %12 = vector.broadcast %cst_7 : f32 to vector<16x1xf32>
    %13 = arith.maximumf %11, %12 : vector<16x1xf32>
    %c0_8 = arith.constant 0 : index
    %c0_9 = arith.constant 0 : index
    %14 = vector.load %arg3[%c0_8, %c0_9] : memref<16x256xf32, #tpu.memory_space<vmem>>, vector<16x256xf32>
    %15 = vector.broadcast %13 : vector<16x1xf32> to vector<16x256xf32>
    %16 = arith.mulf %14, %15 : vector<16x256xf32>
    %cst_10 = arith.constant dense<0.000000e+00> : vector<256xf32>
    %17 = vector.multi_reduction <add>, %16, %cst_10 [0] : vector<16x256xf32> to vector<256xf32>
    %18 = vector.shape_cast %17 : vector<256xf32> to vector<1x256xf32>
    %c0_11 = arith.constant 0 : index
    %c0_12 = arith.constant 0 : index
    %19 = vector.load %arg4[%c0_11, %c0_12] : memref<1x256xf32, #tpu.memory_space<vmem>>, vector<1x256xf32>
    %20 = arith.addf %18, %19 : vector<1x256xf32>
    %21 = arith.negf %20 : vector<1x256xf32>
    %22 = math.exp %21 : vector<1x256xf32>
    %cst_13 = arith.constant 1.000000e+00 : f32
    %23 = vector.broadcast %cst_13 : f32 to vector<1x256xf32>
    %24 = arith.addf %23, %22 : vector<1x256xf32>
    %25 = arith.divf %23, %24 : vector<1x256xf32>
    %c0_14 = arith.constant 0 : index
    %c0_15 = arith.constant 0 : index
    %26 = vector.load %arg0[%c0_14, %c0_15] : memref<4096x256xf32, #tpu.memory_space<vmem>>, vector<4096x256xf32>
    %27 = vector.broadcast %25 : vector<1x256xf32> to vector<4096x256xf32>
    %28 = arith.mulf %26, %27 : vector<4096x256xf32>
    %c0_16 = arith.constant 0 : index
    %c0_17 = arith.constant 0 : index
    %29 = vector.load %arg5[%c0_16, %c0_17] : memref<4096x256xf32, #tpu.memory_space<vmem>>, vector<4096x256xf32>
    tpu.vector_store %arg5[%c0_16, %c0_17], %28 {strides = array<i32>} : memref<4096x256xf32, #tpu.memory_space<vmem>>, vector<4096x256xf32>,
    return
  }
}

</mosaic_0001>

<llo_original>
// kernel: se_block.1
$region0: #{se_block.1}
  #allocation0 [shape = 'u32[]', space=smem, size = 0x4, offset = 0x4, fixed_abs, tag = 'smem constant byte address 0x4 - core index']
  #allocation1 [shape = 'u32[144,128]{1,0:T(1,128)}', space=vmem, size = 0x12000, scoped, tag = 'internal scratch']
  %s0 = inlined_call_operand.hbm [shape: f32[4096,256], index: 0, kind: input, shape index: {}]
  %s1 = inlined_call_operand.hbm [shape: f32[16,256], index: 1, kind: input, shape index: {}]
  %s2 = inlined_call_operand.vmem [shape: f32[16,1], index: 2, kind: input, shape index: {}]
  %s3 = inlined_call_operand.hbm [shape: f32[16,256], index: 3, kind: input, shape index: {}]
  %s4 = inlined_call_operand.hbm [shape: f32[1,256], index: 4, kind: input, shape index: {}]
  %s5 = inlined_call_operand.hbm [shape: f32[4096,256], index: 5, kind: output, shape index: {}]
  %s6 = sld [smem:[#allocation0]]
  $region46: #{se_block.1} parent=0
    _
  %s8 = ssub.s32 1, %s6
  %s9 = scalar_select 0, %s8, %s6
  $region1: #{se_block.1} parent=0
    #allocation2 [shape = 'u8[4194304]{0}', space=vmem, size = 0x400000, scoped, tag = 'input window, operand 0, single buffered']
    #allocation3 [shape = 's32[1]{0}', space=sflag, size = 0x4, scoped, tag = 'scoped memory for se_block.1']
    #allocation4 [shape = 's32[1]{0}', space=sflag, size = 0x4, scoped, tag = 'scoped memory for se_block.1']
    #allocation5 [shape = 'u8[16384]{0}', space=vmem, size = 0x4000, scoped, tag = 'input window, operand 1, single buffered']
    #allocation6 [shape = 's32[1]{0}', space=sflag, size = 0x4, scoped, tag = 'scoped memory for se_block.1']
    #allocation7 [shape = 'u8[16384]{0}', space=vmem, size = 0x4000, scoped, tag = 'input window, operand 3, single buffered']
    #allocation8 [shape = 'u8[1024]{0}', space=vmem, size = 0x400, scoped, tag = 'input window, operand 4, single buffered']
    #allocation9 [shape = 's32[1]{0}', space=sflag, size = 0x4, scoped, tag = 'scoped memory for se_block.1']
    #allocation10 [shape = 'u8[4194304]{0}', space=vmem, size = 0x400000, scoped, tag = 'output window, operand 0, single buffered']
    %10 = vsyncpa [#allocation3], 0
    %11 = vsyncpa [#allocation6], 0
    %12 = vsyncpa [#allocation9], 0
    %13 = vsyncpa [#allocation4], 0
    // Predicated region
    $region2: #{se_block.1} parent=1 // pred_check
      _
    $region3: #{se_block.1} parent=1 // pred_check_branch
      %15 = sbr.rel (0) target = $region5
    $region4: #{se_block.1} parent=1 // pred_region
      %s17 = ssub.s32 131072, 131072
      %18 = vsyncadd [#allocation3], %s17
      %s19 = sshll.u32 [#allocation2], 4
      %s20 = int_to_ptr.vmem [resolvable:$true] %s19
      %25 = dma.hbm_to_vmem [thread:$0]  %s0, 131072, %s20, [#allocation3], 256, 256, 16
    $region5: #{se_block.1} parent=1 // pred_fallthru
      _
    // Predicated region
    $region6: #{se_block.1} parent=1 // pred_check
      _
    $region7: #{se_block.1} parent=1 // pred_check_branch
      %27 = sbr.rel (0) target = $region9
    $region8: #{se_block.1} parent=1 // pred_region
      %s29 = ssub.s32 512, 512
      %30 = vsyncadd [#allocation6], %s29
      %s31 = sshll.u32 [#allocation5], 4
      %s32 = int_to_ptr.vmem [resolvable:$true] %s31
      %37 = dma.hbm_to_vmem [thread:$0]  %s1, 512, %s32, [#allocation6], 256, 256, 16
    $region9: #{se_block.1} parent=1 // pred_fallthru
      _
    // Predicated region
    $region10: #{se_block.1} parent=1 // pred_check
      _
    $region11: #{se_block.1} parent=1 // pred_check_branch
      %39 = sbr.rel (0) target = $region13
    $region12: #{se_block.1} parent=1 // pred_region
      _
    $region13: #{se_block.1} parent=1 // pred_fallthru
      _
    // Predicated region
    $region14: #{se_block.1} parent=1 // pred_check
      _
    $region15: #{se_block.1} parent=1 // pred_check_branch
      %41 = sbr.rel (0) target = $region17
    $region16: #{se_block.1} parent=1 // pred_region
      %s43 = ssub.s32 512, 512
      %44 = vsyncadd [#allocation6], %s43
      %s45 = sshll.u32 [#allocation7], 4
      %s46 = int_to_ptr.vmem [resolvable:$true] %s45
      %51 = dma.hbm_to_vmem [thread:$0]  %s3, 512, %s46, [#allocation6], 256, 256, 16
    $region17: #{se_block.1} parent=1 // pred_fallthru
      _
    // Predicated region
    $region18: #{se_block.1} parent=1 // pred_check
      _
    $region19: #{se_block.1} parent=1 // pred_check_branch
      %53 = sbr.rel (0) target = $region21
    $region20: #{se_block.1} parent=1 // pred_region
      %s55 = ssub.s32 32, 32
      %56 = vsyncadd [#allocation9], %s55
      %s58 = sshll.u32 [#allocation8], 4
      %s59 = int_to_ptr.vmem [resolvable:$true] %s58
      %61 = dma.hbm_to_vmem [thread:$0]  %s4, 32, %s59, [#allocation9]
    $region21: #{se_block.1} parent=1 // pred_fallthru
      _
    // Predicated region
    $region22: #{se_block.1} parent=1 // pred_check
      _
    $region23: #{se_block.1} parent=1 // pred_check_branch
      %63 = sbr.rel (0) target = $region25
    $region24: #{se_block.1} parent=1 // pred_region
      %64 = dma.done [#allocation3], 131072
    $region25: #{se_block.1} parent=1 // pred_fallthru
      _
    // Predicated region
    $region26: #{se_block.1} parent=1 // pred_check
      _
    $region27: #{se_block.1} parent=1 // pred_check_branch
      %66 = sbr.rel (0) target = $region29
    $region28: #{se_block.1} parent=1 // pred_region
      %67 = dma.done [#allocation6], 512
    $region29: #{se_block.1} parent=1 // pred_fallthru
      _
    // Predicated region
    $region30: #{se_block.1} parent=1 // pred_check
      _
    $region31: #{se_block.1} parent=1 // pred_check_branch
      %69 = sbr.rel (0) target = $region33
    $region32: #{se_block.1} parent=1 // pred_region
      %70 = dma.done [#allocation6], 512
    $region33: #{se_block.1} parent=1 // pred_fallthru
      _
    // Predicated region
    $region34: #{se_block.1} parent=1 // pred_check
      _
    $region35: #{se_block.1} parent=1 // pred_check_branch
      %72 = sbr.rel (0) target = $region37
    $region36: #{se_block.1} parent=1 // pred_region
      %73 = dma.done [#allocation9], 32
    $region37: #{se_block.1} parent=1 // pred_fallthru
      _
    %v74 = vld [vmem:[#allocation2] sm:$0xff]
    %v75 = vld [vmem:[#allocation2 + $0x8] sm:$0xff]
    %v76 = vld [vmem:[#allocation2 + $0x10] sm:$0xff]
    %v77 = vld [vmem:[#allocation2 + $0x18] sm:$0xff]
    %v78 = vld [vmem:[#allocation2 + $0x20] sm:$0xff]
    %v79 = vld [vmem:[#allocation2 + $0x28] sm:$0xff]
    %v80 = vld [vmem:[#allocation2 + $0x30] sm:$0xff]
    %v81 = vld [vmem:[#allocation2 + $0x38] sm:$0xff]
    %v82 = vld [vmem:[#allocation2 + $0x40] sm:$0xff]
    %v83 = vld [vmem:[#allocation2 + $0x48] sm:$0xff]
    %v84 = vld [vmem:[#allocation2 + $0x50] sm:$0xff]
    %v85 = vld [vmem:[#allocation2 + $0x58] sm:$0xff]
    %v86 = vld [vmem:[#allocation2 + $0x60] sm:$0xff]
    %v87 = vld [vmem:[#allocation2 + $0x68] sm:$0xff]
    %v88 = vld [vmem:[#allocation2 + $0x70] sm:$0xff]
    %v89 = vld [vmem:[#allocation2 + $0x78] sm:$0xff]
    %v90 = vld [vmem:[#allocation2 + $0x80] sm:$0xff]
    %v91 = vld [vmem:[#allocation2 + $0x88] sm:$0xff]
    %v92 = vld [vmem:[#allocation2 + $0x90] sm:$0xff]
    %v93 = vld [vmem:[#allocation2 + $0x98] sm:$0xff]
    %v94 = vld [vmem:[#allocation2 + $0xa0] sm:$0xff]
    %v95 = vld [vmem:[#allocation2 + $0xa8] sm:$0xff]
    %v96 = vld [vmem:[#allocation2 + $0xb0] sm:$0xff]
    %v97 = vld [vmem:[#allocation2 + $0xb8] sm:$0xff]
    %v98 = vld [vmem:[#allocation2 + $0xc0] sm:$0xff]
    %v99 = vld [vmem:[#allocation2 + $0xc8] sm:$0xff]
    %v100 = vld [vmem:[#allocation2 + $0xd0] sm:$0xff]
    %v101 = vld [vmem:[#allocation2 + $0xd8] sm:$0xff]
    %v102 = vld [vmem:[#allocation2 + $0xe0] sm:$0xff]
    %v103 = vld [vmem:[#allocation2 + $0xe8] sm:$0xff]
    %v104 = vld [vmem:[#allocation2 + $0xf0] sm:$0xff]
    %v105 = vld [vmem:[#allocation2 + $0xf8] sm:$0xff]
    %v106 = vld [vmem:[#allocation2 + $0x100] sm:$0xff]
    %v107 = vld [vmem:[#allocation2 + $0x108] sm:$0xff]
    %v108 = vld [vmem:[#allocation2 + $0x110] sm:$0xff]
    %v109 = vld [vmem:[#allocation2 + $0x118] sm:$0xff]
    %v110 = vld [vmem:[#allocation2 + $0x120] sm:$0xff]
    %v111 = vld [vmem:[#allocation2 + $0x128] sm:$0xff]
    %v112 = vld [vmem:[#allocation2 + $0x130] sm:$0xff]
    %v113 = vld [vmem:[#allocation2 + $0x138] sm:$0xff]
    %v114 = vld [vmem:[#allocation2 + $0x140] sm:$0xff]
    %v115 = vld [vmem:[#allocation2 + $0x148] sm:$0xff]
    %v116 = vld [vmem:[#allocation2 + $0x150] sm:$0xff]
    %v117 = vld [vmem:[#allocation2 + $0x158] sm:$0xff]
    %v118 = vld [vmem:[#allocation2 + $0x160] sm:$0xff]
    %v119 = vld [vmem:[#allocation2 + $0x168] sm:$0xff]
    %v120 = vld [vmem:[#allocation2 + $0x170] sm:$0xff]
    %v121 = vld [vmem:[#allocation2 + $0x178] sm:$0xff]
    %v122 = vld [vmem:[#allocation2 + $0x180] sm:$0xff]
    %v123 = vld [vmem:[#allocation2 + $0x188] sm:$0xff]
    %v124 = vld [vmem:[#allocation2 + $0x190] sm:$0xff]
    %v125 = vld [vmem:[#allocation2 + $0x198] sm:$0xff]
    %v126 = vld [vmem:[#allocation2 + $0x1a0] sm:$0xff]
    %v127 = vld [vmem:[#allocation2 + $0x1a8] sm:$0xff]
    %v128 = vld [vmem:[#allocation2 + $0x1b0] sm:$0xff]
    %v129 = vld [vmem:[#allocation2 + $0x1b8] sm:$0xff]
    %v130 = vld [vmem:[#allocation2 + $0x1c0] sm:$0xff]
    %v131 = vld [vmem:[#allocation2 + $0x1c8] sm:$0xff]
    %v132 = vld [vmem:[#allocation2 + $0x1d0] sm:$0xff]
    %v133 = vld [vmem:[#allocation2 + $0x1d8] sm:$0xff]
    %v134 = vld [vmem:[#allocation2 + $0x1e0] sm:$0xff]
    %v135 = vld [vmem:[#allocation2 + $0x1e8] sm:$0xff]
    %v136 = vld [vmem:[#allocation2 + $0x1f0] sm:$0xff]
    %v137 = vld [vmem:[#allocation2 + $0x1f8] sm:$0xff]
    %v138 = vld [vmem:[#allocation2 + $0x200] sm:$0xff]
    %v139 = vld [vmem:[#allocation2 + $0x208] sm:$0xff]
    %v140 = vld [vmem:[#allocation2 + $0x210] sm:$0xff]
    %v141 = vld [vmem:[#allocation2 + $0x218] sm:$0xff]
    %v142 = vld [vmem:[#allocation2 + $0x220] sm:$0xff]
    %v143 = vld [vmem:[#allocation2 + $0x228] sm:$0xff]
    %v144 = vld [vmem:[#allocation2 + $0x230] sm:$0xff]
    %v145 = vld [vmem:[#allocation2 + $0x238] sm:$0xff]
    %v146 = vld [vmem:[#allocation2 + $0x240] sm:$0xff]
    %v147 = vld [vmem:[#allocation2 + $0x248] sm:$0xff]
    %v148 = vld [vmem:[#allocation2 + $0x250] sm:$0xff]
    %v149 = vld [vmem:[#allocation2 + $0x258] sm:$0xff]
    %v150 = vld [vmem:[#allocation2 + $0x260] sm:$0xff]
    %v151 = vld [vmem:[#allocation2 + $0x268] sm:$0xff]
    %v152 = vld [vmem:[#allocation2 + $0x270] sm:$0xff]
    %v153 = vld [vmem:[#allocation2 + $0x278] sm:$0xff]
    %v154 = vld [vmem:[#allocation2 + $0x280] sm:$0xff]
    %v155 = vld [vmem:[#allocation2 + $0x288] sm:$0xff]
    %v156 = vld [vmem:[#allocation2 + $0x290] sm:$0xff]
    %v157 = vld [vmem:[#allocation2 + $0x298] sm:$0xff]
    %v158 = vld [vmem:[#allocation2 + $0x2a0] sm:$0xff]
    %v159 = vld [vmem:[#allocation2 + $0x2a8] sm:$0xff]
    %v160 = vld [vmem:[#allocation2 + $0x2b0] sm:$0xff]
    %v161 = vld [vmem:[#allocation2 + $0x2b8] sm:$0xff]
    %v162 = vld [vmem:[#allocation2 + $0x2c0] sm:$0xff]
    %v163 = vld [vmem:[#allocation2 + $0x2c8] sm:$0xff]
    %v164 = vld [vmem:[#allocation2 + $0x2d0] sm:$0xff]
    %v165 = vld [vmem:[#allocation2 + $0x2d8] sm:$0xff]
    %v166 = vld [vmem:[#allocation2 + $0x2e0] sm:$0xff]
    %v167 = vld [vmem:[#allocation2 + $0x2e8] sm:$0xff]
    %v168 = vld [vmem:[#allocation2 + $0x2f0] sm:$0xff]
    %v169 = vld [vmem:[#allocation2 + $0x2f8] sm:$0xff]
    %v170 = vld [vmem:[#allocation2 + $0x300] sm:$0xff]
    %v171 = vld [vmem:[#allocation2 + $0x308] sm:$0xff]
    %v172 = vld [vmem:[#allocation2 + $0x310] sm:$0xff]
    %v173 = vld [vmem:[#allocation2 + $0x318] sm:$0xff]
    %v174 = vld [vmem:[#allocation2 + $0x320] sm:$0xff]
    %v175 = vld [vmem:[#allocation2 + $0x328] sm:$0xff]
    %v176 = vld [vmem:[#allocation2 + $0x330] sm:$0xff]
    %v177 = vld [vmem:[#allocation2 + $0x338] sm:$0xff]
    %v178 = vld [vmem:[#allocation2 + $0x340] sm:$0xff]
    %v179 = vld [vmem:[#allocation2 + $0x348] sm:$0xff]
    %v180 = vld [vmem:[#allocation2 + $0x350] sm:$0xff]
    %v181 = vld [vmem:[#allocation2 + $0x358] sm:$0xff]
    %v182 = vld [vmem:[#allocation2 + $0x360] sm:$0xff]
    %v183 = vld [vmem:[#allocation2 + $0x368] sm:$0xff]
    %v184 = vld [vmem:[#allocation2 + $0x370] sm:$0xff]
    %v185 = vld [vmem:[#allocation2 + $0x378] sm:$0xff]
    %v186 = vld [vmem:[#allocation2 + $0x380] sm:$0xff]
    %v187 = vld [vmem:[#allocation2 + $0x388] sm:$0xff]
    %v188 = vld [vmem:[#allocation2 + $0x390] sm:$0xff]
    %v189 = vld [vmem:[#allocation2 + $0x398] sm:$0xff]
    %v190 = vld [vmem:[#allocation2 + $0x3a0] sm:$0xff]
    %v191 = vld [vmem:[#allocation2 + $0x3a8] sm:$0xff]
    %v192 = vld [vmem:[#allocation2 + $0x3b0] sm:$0xff]
    %v193 = vld [vmem:[#allocation2 + $0x3b8] sm:$0xff]
    %v194 = vld [vmem:[#allocation2 + $0x3c0] sm:$0xff]
    %v195 = vld [vmem:[#allocation2 + $0x3c8] sm:$0xff]
    %v196 = vld [vmem:[#allocation2 + $0x3d0] sm:$0xff]
    %v197 = vld [vmem:[#allocation2 + $0x3d8] sm:$0xff]
    %v198 = vld [vmem:[#allocation2 + $0x3e0] sm:$0xff]
    %v199 = vld [vmem:[#allocation2 + $0x3e8] sm:$0xff]
    %v200 = vld [vmem:[#allocation2 + $0x3f0] sm:$0xff]
    %v201 = vld [vmem:[#allocation2 + $0x3f8] sm:$0xff]
    %v202 = vld [vmem:[#allocation2 + $0x400] sm:$0xff]
    %v203 = vld [vmem:[#allocation2 + $0x408] sm:$0xff]
    %v204 = vld [vmem:[#allocation2 + $0x410] sm:$0xff]
    %v205 = vld [vmem:[#allocation2 + $0x418] sm:$0xff]
    %v206 = vld [vmem:[#allocation2 + $0x420] sm:$0xff]
    %v207 = vld [vmem:[#allocation2 + $0x428] sm:$0xff]
    %v208 = vld [vmem:[#allocation2 + $0x430] sm:$0xff]
    %v209 = vld [vmem:[#allocation2 + $0x438] sm:$0xff]
    %v210 = vld [vmem:[#allocation2 + $0x440] sm:$0xff]
    %v211 = vld [vmem:[#allocation2 + $0x448] sm:$0xff]
    %v212 = vld [vmem:[#allocation2 + $0x450] sm:$0xff]
    %v213 = vld [vmem:[#allocation2 + $0x458] sm:$0xff]
    %v214 = vld [vmem:[#allocation2 + $0x460] sm:$0xff]
    %v215 = vld [vmem:[#allocation2 + $0x468] sm:$0xff]
    %v216 = vld [vmem:[#allocation2 + $0x470] sm:$0xff]
    %v217 = vld [vmem:[#allocation2 + $0x478] sm:$0xff]
    %v218 = vld [vmem:[#allocation2 + $0x480] sm:$0xff]
    %v219 = vld [vmem:[#allocation2 + $0x488] sm:$0xff]
    %v220 = vld [vmem:[#allocation2 + $0x490] sm:$0xff]
    %v221 = vld [vmem:[#allocation2 + $0x498] sm:$0xff]
    %v222 = vld [vmem:[#allocation2 + $0x4a0] sm:$0xff]
    %v223 = vld [vmem:[#allocation2 + $0x4a8] sm:$0xff]
    %v224 = vld [vmem:[#allocation2 + $0x4b0] sm:$0xff]
    %v225 = vld [vmem:[#allocation2 + $0x4b8] sm:$0xff]
    %v226 = vld [vmem:[#allocation2 + $0x4c0] sm:$0xff]
    %v227 = vld [vmem:[#allocation2 + $0x4c8] sm:$0xff]
    %v228 = vld [vmem:[#allocation2 + $0x4d0] sm:$0xff]
    %v229 = vld [vmem:[#allocation2 + $0x4d8] sm:$0xff]
    %v230 = vld [vmem:[#allocation2 + $0x4e0] sm:$0xff]
    %v231 = vld [vmem:[#allocation2 + $0x4e8] sm:$0xff]
    %v232 = vld [vmem:[#allocation2 + $0x4f0] sm:$0xff]
    %v233 = vld [vmem:[#allocation2 + $0x4f8] sm:$0xff]
    %v234 = vld [vmem:[#allocation2 + $0x500] sm:$0xff]
    %v235 = vld [vmem:[#allocation2 + $0x508] sm:$0xff]
    %v236 = vld [vmem:[#allocation2 + $0x510] sm:$0xff]
    %v237 = vld [vmem:[#allocation2 + $0x518] sm:$0xff]
    %v238 = vld [vmem:[#allocation2 + $0x520] sm:$0xff]
    %v239 = vld [vmem:[#allocation2 + $0x528] sm:$0xff]
    %v240 = vld [vmem:[#allocation2 + $0x530] sm:$0xff]
    %v241 = vld [vmem:[#allocation2 + $0x538] sm:$0xff]
    %v242 = vld [vmem:[#allocation2 + $0x540] sm:$0xff]
    %v243 = vld [vmem:[#allocation2 + $0x548] sm:$0xff]
    %v244 = vld [vmem:[#allocation2 + $0x550] sm:$0xff]
    %v245 = vld [vmem:[#allocation2 + $0x558] sm:$0xff]
    %v246 = vld [vmem:[#allocation2 + $0x560] sm:$0xff]
    %v247 = vld [vmem:[#allocation2 + $0x568] sm:$0xff]
    %v248 = vld [vmem:[#allocation2 + $0x570] sm:$0xff]
    %v249 = vld [vmem:[#allocation2 + $0x578] sm:$0xff]
    %v250 = vld [vmem:[#allocation2 + $0x580] sm:$0xff]
    %v251 = vld [vmem:[#allocation2 + $0x588] sm:$0xff]
    %v252 = vld [vmem:[#allocation2 + $0x590] sm:$0xff]
    %v253 = vld [vmem:[#allocation2 + $0x598] sm:$0xff]
    %v254 = vld [vmem:[#allocation2 + $0x5a0] sm:$0xff]
    %v255 = vld [vmem:[#allocation2 + $0x5a8] sm:$0xff]
    %v256 = vld [vmem:[#allocation2 + $0x5b0] sm:$0xff]
    %v257 = vld [vmem:[#allocation2 + $0x5b8] sm:$0xff]
    %v258 = vld [vmem:[#allocation2 + $0x5c0] sm:$0xff]
    %v259 = vld [vmem:[#allocation2 + $0x5c8] sm:$0xff]
    %v260 = vld [vmem:[#allocation2 + $0x5d0] sm:$0xff]
    %v261 = vld [vmem:[#allocation2 + $0x5d8] sm:$0xff]
    %v262 = vld [vmem:[#allocation2 + $0x5e0] sm:$0xff]
    %v263 = vld [vmem:[#allocation2 + $0x5e8] sm:$0xff]
    %v264 = vld [vmem:[#allocation2 + $0x5f0] sm:$0xff]
    %v265 = vld [vmem:[#allocation2 + $0x5f8] sm:$0xff]
    %v266 = vld [vmem:[#allocation2 + $0x600] sm:$0xff]
    %v267 = vld [vmem:[#allocation2 + $0x608] sm:$0xff]
    %v268 = vld [vmem:[#allocation2 + $0x610] sm:$0xff]
    %v269 = vld [vmem:[#allocation2 + $0x618] sm:$0xff]
    %v270 = vld [vmem:[#allocation2 + $0x620] sm:$0xff]
    %v271 = vld [vmem:[#allocation2 + $0x628] sm:$0xff]
    %v272 = vld [vmem:[#allocation2 + $0x630] sm:$0xff]
    %v273 = vld [vmem:[#allocation2 + $0x638] sm:$0xff]
    %v274 = vld [vmem:[#allocation2 + $0x640] sm:$0xff]
    %v275 = vld [vmem:[#allocation2 + $0x648] sm:$0xff]
    %v276 = vld [vmem:[#allocation2 + $0x650] sm:$0xff]
    %v277 = vld [vmem:[#allocation2 + $0x658] sm:$0xff]
    %v278 = vld [vmem:[#allocation2 + $0x660] sm:$0xff]
    %v279 = vld [vmem:[#allocation2 + $0x668] sm:$0xff]
    %v280 = vld [vmem:[#allocation2 + $0x670] sm:$0xff]
    %v281 = vld [vmem:[#allocation2 + $0x678] sm:$0xff]
    %v282 = vld [vmem:[#allocation2 + $0x680] sm:$0xff]
    %v283 = vld [vmem:[#allocation2 + $0x688] sm:$0xff]
    %v284 = vld [vmem:[#allocation2 + $0x690] sm:$0xff]
    %v285 = vld [vmem:[#allocation2 + $0x698] sm:$0xff]
    %v286 = vld [vmem:[#allocation2 + $0x6a0] sm:$0xff]
    %v287 = vld [vmem:[#allocation2 + $0x6a8] sm:$0xff]
    %v288 = vld [vmem:[#allocation2 + $0x6b0] sm:$0xff]
    %v289 = vld [vmem:[#allocation2 + $0x6b8] sm:$0xff]
    %v290 = vld [vmem:[#allocation2 + $0x6c0] sm:$0xff]
    %v291 = vld [vmem:[#allocation2 + $0x6c8] sm:$0xff]
    %v292 = vld [vmem:[#allocation2 + $0x6d0] sm:$0xff]
    %v293 = vld [vmem:[#allocation2 + $0x6d8] sm:$0xff]
    %v294 = vld [vmem:[#allocation2 + $0x6e0] sm:$0xff]
    %v295 = vld [vmem:[#allocation2 + $0x6e8] sm:$0xff]
    %v296 = vld [vmem:[#allocation2 + $0x6f0] sm:$0xff]
    %v297 = vld [vmem:[#allocation2 + $0x6f8] sm:$0xff]
    %v298 = vld [vmem:[#allocation2 + $0x700] sm:$0xff]
    %v299 = vld [vmem:[#allocation2 + $0x708] sm:$0xff]
    %v300 = vld [vmem:[#allocation2 + $0x710] sm:$0xff]
    %v301 = vld [vmem:[#allocation2 + $0x718] sm:$0xff]
    %v302 = vld [vmem:[#allocation2 + $0x720] sm:$0xff]
    %v303 = vld [vmem:[#allocation2 + $0x728] sm:$0xff]
    %v304 = vld [vmem:[#allocation2 + $0x730] sm:$0xff]
    %v305 = vld [vmem:[#allocation2 + $0x738] sm:$0xff]
    %v306 = vld [vmem:[#allocation2 + $0x740] sm:$0xff]
    %v307 = vld [vmem:[#allocation2 + $0x748] sm:$0xff]
    %v308 = vld [vmem:[#allocation2 + $0x750] sm:$0xff]
    %v309 = vld [vmem:[#allocation2 + $0x758] sm:$0xff]
    %v310 = vld [vmem:[#allocation2 + $0x760] sm:$0xff]
    %v311 = vld [vmem:[#allocation2 + $0x768] sm:$0xff]
    %v312 = vld [vmem:[#allocation2 + $0x770] sm:$0xff]
    %v313 = vld [vmem:[#allocation2 + $0x778] sm:$0xff]
    %v314 = vld [vmem:[#allocation2 + $0x780] sm:$0xff]
    %v315 = vld [vmem:[#allocation2 + $0x788] sm:$0xff]
    %v316 = vld [vmem:[#allocation2 + $0x790] sm:$0xff]
    %v317 = vld [vmem:[#allocation2 + $0x798] sm:$0xff]
    %v318 = vld [vmem:[#allocation2 + $0x7a0] sm:$0xff]
    %v319 = vld [vmem:[#allocation2 + $0x7a8] sm:$0xff]
    %v320 = vld [vmem:[#allocation2 + $0x7b0] sm:$0xff]
    %v321 = vld [vmem:[#allocation2 + $0x7b8] sm:$0xff]
    %v322 = vld [vmem:[#allocation2 + $0x7c0] sm:$0xff]
    %v323 = vld [vmem:[#allocation2 + $0x7c8] sm:$0xff]
    %v324 = vld [vmem:[#allocation2 + $0x7d0] sm:$0xff]
    %v325 = vld [vmem:[#allocation2 + $0x7d8] sm:$0xff]
    %v326 = vld [vmem:[#allocation2 + $0x7e0] sm:$0xff]
    %v327 = vld [vmem:[#allocation2 + $0x7e8] sm:$0xff]
    %v328 = vld [vmem:[#allocation2 + $0x7f0] sm:$0xff]
    %v329 = vld [vmem:[#allocation2 + $0x7f8] sm:$0xff]
    %v330 = vld [vmem:[#allocation2 + $0x800] sm:$0xff]
    %v331 = vld [vmem:[#allocation2 + $0x808] sm:$0xff]
    %v332 = vld [vmem:[#allocation2 + $0x810] sm:$0xff]
    %v333 = vld [vmem:[#allocation2 + $0x818] sm:$0xff]
    %v334 = vld [vmem:[#allocation2 + $0x820] sm:$0xff]
    %v335 = vld [vmem:[#allocation2 + $0x828] sm:$0xff]
    %v336 = vld [vmem:[#allocation2 + $0x830] sm:$0xff]
    %v337 = vld [vmem:[#allocation2 + $0x838] sm:$0xff]
    %v338 = vld [vmem:[#allocation2 + $0x840] sm:$0xff]
    %v339 = vld [vmem:[#allocation2 + $0x848] sm:$0xff]
    %v340 = vld [vmem:[#allocation2 + $0x850] sm:$0xff]
    %v341 = vld [vmem:[#allocation2 + $0x858] sm:$0xff]
    %v342 = vld [vmem:[#allocation2 + $0x860] sm:$0xff]
    %v343 = vld [vmem:[#allocation2 + $0x868] sm:$0xff]
    %v344 = vld [vmem:[#allocation2 + $0x870] sm:$0xff]
    %v345 = vld [vmem:[#allocation2 + $0x878] sm:$0xff]
    %v346 = vld [vmem:[#allocation2 + $0x880] sm:$0xff]
    %v347 = vld [vmem:[#allocation2 + $0x888] sm:$0xff]
    %v348 = vld [vmem:[#allocation2 + $0x890] sm:$0xff]
    %v349 = vld [vmem:[#allocation2 + $0x898] sm:$0xff]
    %v350 = vld [vmem:[#allocation2 + $0x8a0] sm:$0xff]
    %v351 = vld [vmem:[#allocation2 + $0x8a8] sm:$0xff]
    %v352 = vld [vmem:[#allocation2 + $0x8b0] sm:$0xff]
    %v353 = vld [vmem:[#allocation2 + $0x8b8] sm:$0xff]
    %v354 = vld [vmem:[#allocation2 + $0x8c0] sm:$0xff]
    %v355 = vld [vmem:[#allocation2 + $0x8c8] sm:$0xff]
    %v356 = vld [vmem:[#allocation2 + $0x8d0] sm:$0xff]
    %v357 = vld [vmem:[#allocation2 + $0x8d8] sm:$0xff]
    %v358 = vld [vmem:[#allocation2 + $0x8e0] sm:$0xff]
    %v359 = vld [vmem:[#allocation2 + $0x8e8] sm:$0xff]
    %v360 = vld [vmem:[#allocation2 + $0x8f0] sm:$0xff]
    %v361 = vld [vmem:[#allocation2 + $0x8f8] sm:$0xff]
    %v362 = vld [vmem:[#allocation2 + $0x900] sm:$0xff]
    %v363 = vld [vmem:[#allocation2 + $0x908] sm:$0xff]
    %v364 = vld [vmem:[#allocation2 + $0x910] sm:$0xff]
    %v365 = vld [vmem:[#allocation2 + $0x918] sm:$0xff]
    %v366 = vld [vmem:[#allocation2 + $0x920] sm:$0xff]
    %v367 = vld [vmem:[#allocation2 + $0x928] sm:$0xff]
    %v368 = vld [vmem:[#allocation2 + $0x930] sm:$0xff]
    %v369 = vld [vmem:[#allocation2 + $0x938] sm:$0xff]
    %v370 = vld [vmem:[#allocation2 + $0x940] sm:$0xff]
    %v371 = vld [vmem:[#allocation2 + $0x948] sm:$0xff]
    %v372 = vld [vmem:[#allocation2 + $0x950] sm:$0xff]
    %v373 = vld [vmem:[#allocation2 + $0x958] sm:$0xff]
    %v374 = vld [vmem:[#allocation2 + $0x960] sm:$0xff]
    %v375 = vld [vmem:[#allocation2 + $0x968] sm:$0xff]
    %v376 = vld [vmem:[#allocation2 + $0x970] sm:$0xff]
    %v377 = vld [vmem:[#allocation2 + $0x978] sm:$0xff]
    %v378 = vld [vmem:[#allocation2 + $0x980] sm:$0xff]
    %v379 = vld [vmem:[#allocation2 + $0x988] sm:$0xff]
    %v380 = vld [vmem:[#allocation2 + $0x990] sm:$0xff]
    %v381 = vld [vmem:[#allocation2 + $0x998] sm:$0xff]
    %v382 = vld [vmem:[#allocation2 + $0x9a0] sm:$0xff]
    %v383 = vld [vmem:[#allocation2 + $0x9a8] sm:$0xff]
    %v384 = vld [vmem:[#allocation2 + $0x9b0] sm:$0xff]
    %v385 = vld [vmem:[#allocation2 + $0x9b8] sm:$0xff]
    %v386 = vld [vmem:[#allocation2 + $0x9c0] sm:$0xff]
    %v387 = vld [vmem:[#allocation2 + $0x9c8] sm:$0xff]
    %v388 = vld [vmem:[#allocation2 + $0x9d0] sm:$0xff]
    %v389 = vld [vmem:[#allocation2 + $0x9d8] sm:$0xff]
    %v390 = vld [vmem:[#allocation2 + $0x9e0] sm:$0xff]
    %v391 = vld [vmem:[#allocation2 + $0x9e8] sm:$0xff]
    %v392 = vld [vmem:[#allocation2 + $0x9f0] sm:$0xff]
    %v393 = vld [vmem:[#allocation2 + $0x9f8] sm:$0xff]
    %v394 = vld [vmem:[#allocation2 + $0xa00] sm:$0xff]
    %v395 = vld [vmem:[#allocation2 + $0xa08] sm:$0xff]
    %v396 = vld [vmem:[#allocation2 + $0xa10] sm:$0xff]
    %v397 = vld [vmem:[#allocation2 + $0xa18] sm:$0xff]
    %v398 = vld [vmem:[#allocation2 + $0xa20] sm:$0xff]
    %v399 = vld [vmem:[#allocation2 + $0xa28] sm:$0xff]
    %v400 = vld [vmem:[#allocation2 + $0xa30] sm:$0xff]
    %v401 = vld [vmem:[#allocation2 + $0xa38] sm:$0xff]
    %v402 = vld [vmem:[#allocation2 + $0xa40] sm:$0xff]
    %v403 = vld [vmem:[#allocation2 + $0xa48] sm:$0xff]
    %v404 = vld [vmem:[#allocation2 + $0xa50] sm:$0xff]
    %v405 = vld [vmem:[#allocation2 + $0xa58] sm:$0xff]
    %v406 = vld [vmem:[#allocation2 + $0xa60] sm:$0xff]
    %v407 = vld [vmem:[#allocation2 + $0xa68] sm:$0xff]
    %v408 = vld [vmem:[#allocation2 + $0xa70] sm:$0xff]
    %v409 = vld [vmem:[#allocation2 + $0xa78] sm:$0xff]
    %v410 = vld [vmem:[#allocation2 + $0xa80] sm:$0xff]
    %v411 = vld [vmem:[#allocation2 + $0xa88] sm:$0xff]
    %v412 = vld [vmem:[#allocation2 + $0xa90] sm:$0xff]
    %v413 = vld [vmem:[#allocation2 + $0xa98] sm:$0xff]
    %v414 = vld [vmem:[#allocation2 + $0xaa0] sm:$0xff]
    %v415 = vld [vmem:[#allocation2 + $0xaa8] sm:$0xff]
    %v416 = vld [vmem:[#allocation2 + $0xab0] sm:$0xff]
    %v417 = vld [vmem:[#allocation2 + $0xab8] sm:$0xff]
    %v418 = vld [vmem:[#allocation2 + $0xac0] sm:$0xff]
    %v419 = vld [vmem:[#allocation2 + $0xac8] sm:$0xff]
    %v420 = vld [vmem:[#allocation2 + $0xad0] sm:$0xff]
    %v421 = vld [vmem:[#allocation2 + $0xad8] sm:$0xff]
    %v422 = vld [vmem:[#allocation2 + $0xae0] sm:$0xff]
    %v423 = vld [vmem:[#allocation2 + $0xae8] sm:$0xff]
    %v424 = vld [vmem:[#allocation2 + $0xaf0] sm:$0xff]
    %v425 = vld [vmem:[#allocation2 + $0xaf8] sm:$0xff]
    %v426 = vld [vmem:[#allocation2 + $0xb00] sm:$0xff]
    %v427 = vld [vmem:[#allocation2 + $0xb08] sm:$0xff]
    %v428 = vld [vmem:[#allocation2 + $0xb10] sm:$0xff]
    %v429 = vld [vmem:[#allocation2 + $0xb18] sm:$0xff]
    %v430 = vld [vmem:[#allocation2 + $0xb20] sm:$0xff]
    %v431 = vld [vmem:[#allocation2 + $0xb28] sm:$0xff]
    %v432 = vld [vmem:[#allocation2 + $0xb30] sm:$0xff]
    %v433 = vld [vmem:[#allocation2 + $0xb38] sm:$0xff]
    %v434 = vld [vmem:[#allocation2 + $0xb40] sm:$0xff]
    %v435 = vld [vmem:[#allocation2 + $0xb48] sm:$0xff]
    %v436 = vld [vmem:[#allocation2 + $0xb50] sm:$0xff]
    %v437 = vld [vmem:[#allocation2 + $0xb58] sm:$0xff]
    %v438 = vld [vmem:[#allocation2 + $0xb60] sm:$0xff]
    %v439 = vld [vmem:[#allocation2 + $0xb68] sm:$0xff]
    %v440 = vld [vmem:[#allocation2 + $0xb70] sm:$0xff]
    %v441 = vld [vmem:[#allocation2 + $0xb78] sm:$0xff]
    %v442 = vld [vmem:[#allocation2 + $0xb80] sm:$0xff]
    %v443 = vld [vmem:[#allocation2 + $0xb88] sm:$0xff]
    %v444 = vld [vmem:[#allocation2 + $0xb90] sm:$0xff]
    %v445 = vld [vmem:[#allocation2 + $0xb98] sm:$0xff]
    %v446 = vld [vmem:[#allocation2 + $0xba0] sm:$0xff]
    %v447 = vld [vmem:[#allocation2 + $0xba8] sm:$0xff]
    %v448 = vld [vmem:[#allocation2 + $0xbb0] sm:$0xff]
    %v449 = vld [vmem:[#allocation2 + $0xbb8] sm:$0xff]
    %v450 = vld [vmem:[#allocation2 + $0xbc0] sm:$0xff]
    %v451 = vld [vmem:[#allocation2 + $0xbc8] sm:$0xff]
    %v452 = vld [vmem:[#allocation2 + $0xbd0] sm:$0xff]
    %v453 = vld [vmem:[#allocation2 + $0xbd8] sm:$0xff]
    %v454 = vld [vmem:[#allocation2 + $0xbe0] sm:$0xff]
    %v455 = vld [vmem:[#allocation2 + $0xbe8] sm:$0xff]
    %v456 = vld [vmem:[#allocation2 + $0xbf0] sm:$0xff]
    %v457 = vld [vmem:[#allocation2 + $0xbf8] sm:$0xff]
    %v458 = vld [vmem:[#allocation2 + $0xc00] sm:$0xff]
    %v459 = vld [vmem:[#allocation2 + $0xc08] sm:$0xff]
    %v460 = vld [vmem:[#allocation2 + $0xc10] sm:$0xff]
    %v461 = vld [vmem:[#allocation2 + $0xc18] sm:$0xff]
    %v462 = vld [vmem:[#allocation2 + $0xc20] sm:$0xff]
    %v463 = vld [vmem:[#allocation2 + $0xc28] sm:$0xff]
    %v464 = vld [vmem:[#allocation2 + $0xc30] sm:$0xff]
    %v465 = vld [vmem:[#allocation2 + $0xc38] sm:$0xff]
    %v466 = vld [vmem:[#allocation2 + $0xc40] sm:$0xff]
    %v467 = vld [vmem:[#allocation2 + $0xc48] sm:$0xff]
    %v468 = vld [vmem:[#allocation2 + $0xc50] sm:$0xff]
    %v469 = vld [vmem:[#allocation2 + $0xc58] sm:$0xff]
    %v470 = vld [vmem:[#allocation2 + $0xc60] sm:$0xff]
    %v471 = vld [vmem:[#allocation2 + $0xc68] sm:$0xff]
    %v472 = vld [vmem:[#allocation2 + $0xc70] sm:$0xff]
    %v473 = vld [vmem:[#allocation2 + $0xc78] sm:$0xff]
    %v474 = vld [vmem:[#allocation2 + $0xc80] sm:$0xff]
    %v475 = vld [vmem:[#allocation2 + $0xc88] sm:$0xff]
    %v476 = vld [vmem:[#allocation2 + $0xc90] sm:$0xff]
    %v477 = vld [vmem:[#allocation2 + $0xc98] sm:$0xff]
    %v478 = vld [vmem:[#allocation2 + $0xca0] sm:$0xff]
    %v479 = vld [vmem:[#allocation2 + $0xca8] sm:$0xff]
    %v480 = vld [vmem:[#allocation2 + $0xcb0] sm:$0xff]
    %v481 = vld [vmem:[#allocation2 + $0xcb8] sm:$0xff]
    %v482 = vld [vmem:[#allocation2 + $0xcc0] sm:$0xff]
    %v483 = vld [vmem:[#allocation2 + $0xcc8] sm:$0xff]
    %v484 = vld [vmem:[#allocation2 + $0xcd0] sm:$0xff]
    %v485 = vld [vmem:[#allocation2 + $0xcd8] sm:$0xff]
    %v486 = vld [vmem:[#allocation2 + $0xce0] sm:$0xff]
    %v487 = vld [vmem:[#allocation2 + $0xce8] sm:$0xff]
    %v488 = vld [vmem:[#allocation2 + $0xcf0] sm:$0xff]
    %v489 = vld [vmem:[#allocation2 + $0xcf8] sm:$0xff]
    %v490 = vld [vmem:[#allocation2 + $0xd00] sm:$0xff]
    %v491 = vld [vmem:[#allocation2 + $0xd08] sm:$0xff]
    %v492 = vld [vmem:[#allocation2 + $0xd10] sm:$0xff]
    %v493 = vld [vmem:[#allocation2 + $0xd18] sm:$0xff]
    %v494 = vld [vmem:[#allocation2 + $0xd20] sm:$0xff]
    %v495 = vld [vmem:[#allocation2 + $0xd28] sm:$0xff]
    %v496 = vld [vmem:[#allocation2 + $0xd30] sm:$0xff]
    %v497 = vld [vmem:[#allocation2 + $0xd38] sm:$0xff]
    %v498 = vld [vmem:[#allocation2 + $0xd40] sm:$0xff]
    %v499 = vld [vmem:[#allocation2 + $0xd48] sm:$0xff]
    %v500 = vld [vmem:[#allocation2 + $0xd50] sm:$0xff]
    %v501 = vld [vmem:[#allocation2 + $0xd58] sm:$0xff]
    %v502 = vld [vmem:[#allocation2 + $0xd60] sm:$0xff]
    %v503 = vld [vmem:[#allocation2 + $0xd68] sm:$0xff]
    %v504 = vld [vmem:[#allocation2 + $0xd70] sm:$0xff]
    %v505 = vld [vmem:[#allocation2 + $0xd78] sm:$0xff]
    %v506 = vld [vmem:[#allocation2 + $0xd80] sm:$0xff]
    %v507 = vld [vmem:[#allocation2 + $0xd88] sm:$0xff]
    %v508 = vld [vmem:[#allocation2 + $0xd90] sm:$0xff]
    %v509 = vld [vmem:[#allocation2 + $0xd98] sm:$0xff]
    %v510 = vld [vmem:[#allocation2 + $0xda0] sm:$0xff]
    %v511 = vld [vmem:[#allocation2 + $0xda8] sm:$0xff]
    %v512 = vld [vmem:[#allocation2 + $0xdb0] sm:$0xff]
    %v513 = vld [vmem:[#allocation2 + $0xdb8] sm:$0xff]
    %v514 = vld [vmem:[#allocation2 + $0xdc0] sm:$0xff]
    %v515 = vld [vmem:[#allocation2 + $0xdc8] sm:$0xff]
    %v516 = vld [vmem:[#allocation2 + $0xdd0] sm:$0xff]
    %v517 = vld [vmem:[#allocation2 + $0xdd8] sm:$0xff]
    %v518 = vld [vmem:[#allocation2 + $0xde0] sm:$0xff]
    %v519 = vld [vmem:[#allocation2 + $0xde8] sm:$0xff]
    %v520 = vld [vmem:[#allocation2 + $0xdf0] sm:$0xff]
    %v521 = vld [vmem:[#allocation2 + $0xdf8] sm:$0xff]
    %v522 = vld [vmem:[#allocation2 + $0xe00] sm:$0xff]
    %v523 = vld [vmem:[#allocation2 + $0xe08] sm:$0xff]
    %v524 = vld [vmem:[#allocation2 + $0xe10] sm:$0xff]
    %v525 = vld [vmem:[#allocation2 + $0xe18] sm:$0xff]
    %v526 = vld [vmem:[#allocation2 + $0xe20] sm:$0xff]
    %v527 = vld [vmem:[#allocation2 + $0xe28] sm:$0xff]
    %v528 = vld [vmem:[#allocation2 + $0xe30] sm:$0xff]
    %v529 = vld [vmem:[#allocation2 + $0xe38] sm:$0xff]
    %v530 = vld [vmem:[#allocation2 + $0xe40] sm:$0xff]
    %v531 = vld [vmem:[#allocation2 + $0xe48] sm:$0xff]
    %v532 = vld [vmem:[#allocation2 + $0xe50] sm:$0xff]
    %v533 = vld [vmem:[#allocation2 + $0xe58] sm:$0xff]
    %v534 = vld [vmem:[#allocation2 + $0xe60] sm:$0xff]
    %v535 = vld [vmem:[#allocation2 + $0xe68] sm:$0xff]
    %v536 = vld [vmem:[#allocation2 + $0xe70] sm:$0xff]
    %v537 = vld [vmem:[#allocation2 + $0xe78] sm:$0xff]
    %v538 = vld [vmem:[#allocation2 + $0xe80] sm:$0xff]
    %v539 = vld [vmem:[#allocation2 + $0xe88] sm:$0xff]
    %v540 = vld [vmem:[#allocation2 + $0xe90] sm:$0xff]
    %v541 = vld [vmem:[#allocation2 + $0xe98] sm:$0xff]
    %v542 = vld [vmem:[#allocation2 + $0xea0] sm:$0xff]
    %v543 = vld [vmem:[#allocation2 + $0xea8] sm:$0xff]
    %v544 = vld [vmem:[#allocation2 + $0xeb0] sm:$0xff]
    %v545 = vld [vmem:[#allocation2 + $0xeb8] sm:$0xff]
    %v546 = vld [vmem:[#allocation2 + $0xec0] sm:$0xff]
    %v547 = vld [vmem:[#allocation2 + $0xec8] sm:$0xff]
    %v548 = vld [vmem:[#allocation2 + $0xed0] sm:$0xff]
    %v549 = vld [vmem:[#allocation2 + $0xed8] sm:$0xff]
    %v550 = vld [vmem:[#allocation2 + $0xee0] sm:$0xff]
    %v551 = vld [vmem:[#allocation2 + $0xee8] sm:$0xff]
    %v552 = vld [vmem:[#allocation2 + $0xef0] sm:$0xff]
    %v553 = vld [vmem:[#allocation2 + $0xef8] sm:$0xff]
    %v554 = vld [vmem:[#allocation2 + $0xf00] sm:$0xff]
    %v555 = vld [vmem:[#allocation2 + $0xf08] sm:$0xff]
    %v556 = vld [vmem:[#allocation2 + $0xf10] sm:$0xff]
    %v557 = vld [vmem:[#allocation2 + $0xf18] sm:$0xff]
    %v558 = vld [vmem:[#allocation2 + $0xf20] sm:$0xff]
    %v559 = vld [vmem:[#allocation2 + $0xf28] sm:$0xff]
    %v560 = vld [vmem:[#allocation2 + $0xf30] sm:$0xff]
    %v561 = vld [vmem:[#allocation2 + $0xf38] sm:$0xff]
    %v562 = vld [vmem:[#allocation2 + $0xf40] sm:$0xff]
    %v563 = vld [vmem:[#allocation2 + $0xf48] sm:$0xff]
    %v564 = vld [vmem:[#allocation2 + $0xf50] sm:$0xff]
    %v565 = vld [vmem:[#allocation2 + $0xf58] sm:$0xff]
    %v566 = vld [vmem:[#allocation2 + $0xf60] sm:$0xff]
    %v567 = vld [vmem:[#allocation2 + $0xf68] sm:$0xff]
    %v568 = vld [vmem:[#allocation2 + $0xf70] sm:$0xff]
    %v569 = vld [vmem:[#allocation2 + $0xf78] sm:$0xff]
    %v570 = vld [vmem:[#allocation2 + $0xf80] sm:$0xff]
    %v571 = vld [vmem:[#allocation2 + $0xf88] sm:$0xff]
    %v572 = vld [vmem:[#allocation2 + $0xf90] sm:$0xff]
    %v573 = vld [vmem:[#allocation2 + $0xf98] sm:$0xff]
    %v574 = vld [vmem:[#allocation2 + $0xfa0] sm:$0xff]
    %v575 = vld [vmem:[#allocation2 + $0xfa8] sm:$0xff]
    %v576 = vld [vmem:[#allocation2 + $0xfb0] sm:$0xff]
    %v577 = vld [vmem:[#allocation2 + $0xfb8] sm:$0xff]
    %v578 = vld [vmem:[#allocation2 + $0xfc0] sm:$0xff]
    %v579 = vld [vmem:[#allocation2 + $0xfc8] sm:$0xff]
    %v580 = vld [vmem:[#allocation2 + $0xfd0] sm:$0xff]
    %v581 = vld [vmem:[#allocation2 + $0xfd8] sm:$0xff]
    %v582 = vld [vmem:[#allocation2 + $0xfe0] sm:$0xff]
    %v583 = vld [vmem:[#allocation2 + $0xfe8] sm:$0xff]
    %v584 = vld [vmem:[#allocation2 + $0xff0] sm:$0xff]
    %v585 = vld [vmem:[#allocation2 + $0xff8] sm:$0xff]
    %v586 = vld [vmem:[#allocation2 + $0x1000] sm:$0xff]
    %v587 = vld [vmem:[#allocation2 + $0x1008] sm:$0xff]
    %v588 = vld [vmem:[#allocation2 + $0x1010] sm:$0xff]
    %v589 = vld [vmem:[#allocation2 + $0x1018] sm:$0xff]
    %v590 = vld [vmem:[#allocation2 + $0x1020] sm:$0xff]
    %v591 = vld [vmem:[#allocation2 + $0x1028] sm:$0xff]
    %v592 = vld [vmem:[#allocation2 + $0x1030] sm:$0xff]
    %v593 = vld [vmem:[#allocation2 + $0x1038] sm:$0xff]
    %v594 = vld [vmem:[#allocation2 + $0x1040] sm:$0xff]
    %v595 = vld [vmem:[#allocation2 + $0x1048] sm:$0xff]
    %v596 = vld [vmem:[#allocation2 + $0x1050] sm:$0xff]
    %v597 = vld [vmem:[#allocation2 + $0x1058] sm:$0xff]
    %v598 = vld [vmem:[#allocation2 + $0x1060] sm:$0xff]
    %v599 = vld [vmem:[#allocation2 + $0x1068] sm:$0xff]
    %v600 = vld [vmem:[#allocation2 + $0x1070] sm:$0xff]
    %v601 = vld [vmem:[#allocation2 + $0x1078] sm:$0xff]
    %v602 = vld [vmem:[#allocation2 + $0x1080] sm:$0xff]
    %v603 = vld [vmem:[#allocation2 + $0x1088] sm:$0xff]
    %v604 = vld [vmem:[#allocation2 + $0x1090] sm:$0xff]
    %v605 = vld [vmem:[#allocation2 + $0x1098] sm:$0xff]
    %v606 = vld [vmem:[#allocation2 + $0x10a0] sm:$0xff]
    %v607 = vld [vmem:[#allocation2 + $0x10a8] sm:$0xff]
    %v608 = vld [vmem:[#allocation2 + $0x10b0] sm:$0xff]
    %v609 = vld [vmem:[#allocation2 + $0x10b8] sm:$0xff]
    %v610 = vld [vmem:[#allocation2 + $0x10c0] sm:$0xff]
    %v611 = vld [vmem:[#allocation2 + $0x10c8] sm:$0xff]
    %v612 = vld [vmem:[#allocation2 + $0x10d0] sm:$0xff]
    %v613 = vld [vmem:[#allocation2 + $0x10d8] sm:$0xff]
    %v614 = vld [vmem:[#allocation2 + $0x10e0] sm:$0xff]
    %v615 = vld [vmem:[#allocation2 + $0x10e8] sm:$0xff]
    %v616 = vld [vmem:[#allocation2 + $0x10f0] sm:$0xff]
    %v617 = vld [vmem:[#allocation2 + $0x10f8] sm:$0xff]
    %v618 = vld [vmem:[#allocation2 + $0x1100] sm:$0xff]
    %v619 = vld [vmem:[#allocation2 + $0x1108] sm:$0xff]
    %v620 = vld [vmem:[#allocation2 + $0x1110] sm:$0xff]
    %v621 = vld [vmem:[#allocation2 + $0x1118] sm:$0xff]
    %v622 = vld [vmem:[#allocation2 + $0x1120] sm:$0xff]
    %v623 = vld [vmem:[#allocation2 + $0x1128] sm:$0xff]
    %v624 = vld [vmem:[#allocation2 + $0x1130] sm:$0xff]
    %v625 = vld [vmem:[#allocation2 + $0x1138] sm:$0xff]
    %v626 = vld [vmem:[#allocation2 + $0x1140] sm:$0xff]
    %v627 = vld [vmem:[#allocation2 + $0x1148] sm:$0xff]
    %v628 = vld [vmem:[#allocation2 + $0x1150] sm:$0xff]
    %v629 = vld [vmem:[#allocation2 + $0x1158] sm:$0xff]
    %v630 = vld [vmem:[#allocation2 + $0x1160] sm:$0xff]
    %v631 = vld [vmem:[#allocation2 + $0x1168] sm:$0xff]
    %v632 = vld [vmem:[#allocation2 + $0x1170] sm:$0xff]
    %v633 = vld [vmem:[#allocation2 + $0x1178] sm:$0xff]
    %v634 = vld [vmem:[#allocation2 + $0x1180] sm:$0xff]
    %v635 = vld [vmem:[#allocation2 + $0x1188] sm:$0xff]
    %v636 = vld [vmem:[#allocation2 + $0x1190] sm:$0xff]
    %v637 = vld [vmem:[#allocation2 + $0x1198] sm:$0xff]
    %v638 = vld [vmem:[#allocation2 + $0x11a0] sm:$0xff]
    %v639 = vld [vmem:[#allocation2 + $0x11a8] sm:$0xff]
    %v640 = vld [vmem:[#allocation2 + $0x11b0] sm:$0xff]
    %v641 = vld [vmem:[#allocation2 + $0x11b8] sm:$0xff]
    %v642 = vld [vmem:[#allocation2 + $0x11c0] sm:$0xff]
    %v643 = vld [vmem:[#allocation2 + $0x11c8] sm:$0xff]
    %v644 = vld [vmem:[#allocation2 + $0x11d0] sm:$0xff]
    %v645 = vld [vmem:[#allocation2 + $0x11d8] sm:$0xff]
    %v646 = vld [vmem:[#allocation2 + $0x11e0] sm:$0xff]
    %v647 = vld [vmem:[#allocation2 + $0x11e8] sm:$0xff]
    %v648 = vld [vmem:[#allocation2 + $0x11f0] sm:$0xff]
    %v649 = vld [vmem:[#allocation2 + $0x11f8] sm:$0xff]
    %v650 = vld [vmem:[#allocation2 + $0x1200] sm:$0xff]
    %v651 = vld [vmem:[#allocation2 + $0x1208] sm:$0xff]
    %v652 = vld [vmem:[#allocation2 + $0x1210] sm:$0xff]
    %v653 = vld [vmem:[#allocation2 + $0x1218] sm:$0xff]
    %v654 = vld [vmem:[#allocation2 + $0x1220] sm:$0xff]
    %v655 = vld [vmem:[#allocation2 + $0x1228] sm:$0xff]
    %v656 = vld [vmem:[#allocation2 + $0x1230] sm:$0xff]
    %v657 = vld [vmem:[#allocation2 + $0x1238] sm:$0xff]
    %v658 = vld [vmem:[#allocation2 + $0x1240] sm:$0xff]
    %v659 = vld [vmem:[#allocation2 + $0x1248] sm:$0xff]
    %v660 = vld [vmem:[#allocation2 + $0x1250] sm:$0xff]
    %v661 = vld [vmem:[#allocation2 + $0x1258] sm:$0xff]
    %v662 = vld [vmem:[#allocation2 + $0x1260] sm:$0xff]
    %v663 = vld [vmem:[#allocation2 + $0x1268] sm:$0xff]
    %v664 = vld [vmem:[#allocation2 + $0x1270] sm:$0xff]
    %v665 = vld [vmem:[#allocation2 + $0x1278] sm:$0xff]
    %v666 = vld [vmem:[#allocation2 + $0x1280] sm:$0xff]
    %v667 = vld [vmem:[#allocation2 + $0x1288] sm:$0xff]
    %v668 = vld [vmem:[#allocation2 + $0x1290] sm:$0xff]
    %v669 = vld [vmem:[#allocation2 + $0x1298] sm:$0xff]
    %v670 = vld [vmem:[#allocation2 + $0x12a0] sm:$0xff]
    %v671 = vld [vmem:[#allocation2 + $0x12a8] sm:$0xff]
    %v672 = vld [vmem:[#allocation2 + $0x12b0] sm:$0xff]
    %v673 = vld [vmem:[#allocation2 + $0x12b8] sm:$0xff]
    %v674 = vld [vmem:[#allocation2 + $0x12c0] sm:$0xff]
    %v675 = vld [vmem:[#allocation2 + $0x12c8] sm:$0xff]
    %v676 = vld [vmem:[#allocation2 + $0x12d0] sm:$0xff]
    %v677 = vld [vmem:[#allocation2 + $0x12d8] sm:$0xff]
    %v678 = vld [vmem:[#allocation2 + $0x12e0] sm:$0xff]
    %v679 = vld [vmem:[#allocation2 + $0x12e8] sm:$0xff]
    %v680 = vld [vmem:[#allocation2 + $0x12f0] sm:$0xff]
    %v681 = vld [vmem:[#allocation2 + $0x12f8] sm:$0xff]
    %v682 = vld [vmem:[#allocation2 + $0x1300] sm:$0xff]
    %v683 = vld [vmem:[#allocation2 + $0x1308] sm:$0xff]
    %v684 = vld [vmem:[#allocation2 + $0x1310] sm:$0xff]
    %v685 = vld [vmem:[#allocation2 + $0x1318] sm:$0xff]
    %v686 = vld [vmem:[#allocation2 + $0x1320] sm:$0xff]
    %v687 = vld [vmem:[#allocation2 + $0x1328] sm:$0xff]
    %v688 = vld [vmem:[#allocation2 + $0x1330] sm:$0xff]
    %v689 = vld [vmem:[#allocation2 + $0x1338] sm:$0xff]
    %v690 = vld [vmem:[#allocation2 + $0x1340] sm:$0xff]
    %v691 = vld [vmem:[#allocation2 + $0x1348] sm:$0xff]
    %v692 = vld [vmem:[#allocation2 + $0x1350] sm:$0xff]
    %v693 = vld [vmem:[#allocation2 + $0x1358] sm:$0xff]
    %v694 = vld [vmem:[#allocation2 + $0x1360] sm:$0xff]
    %v695 = vld [vmem:[#allocation2 + $0x1368] sm:$0xff]
    %v696 = vld [vmem:[#allocation2 + $0x1370] sm:$0xff]
    %v697 = vld [vmem:[#allocation2 + $0x1378] sm:$0xff]
    %v698 = vld [vmem:[#allocation2 + $0x1380] sm:$0xff]
    %v699 = vld [vmem:[#allocation2 + $0x1388] sm:$0xff]
    %v700 = vld [vmem:[#allocation2 + $0x1390] sm:$0xff]
    %v701 = vld [vmem:[#allocation2 + $0x1398] sm:$0xff]
    %v702 = vld [vmem:[#allocation2 + $0x13a0] sm:$0xff]
    %v703 = vld [vmem:[#allocation2 + $0x13a8] sm:$0xff]
    %v704 = vld [vmem:[#allocation2 + $0x13b0] sm:$0xff]
    %v705 = vld [vmem:[#allocation2 + $0x13b8] sm:$0xff]
    %v706 = vld [vmem:[#allocation2 + $0x13c0] sm:$0xff]
    %v707 = vld [vmem:[#allocation2 + $0x13c8] sm:$0xff]
    %v708 = vld [vmem:[#allocation2 + $0x13d0] sm:$0xff]
    %v709 = vld [vmem:[#allocation2 + $0x13d8] sm:$0xff]
    %v710 = vld [vmem:[#allocation2 + $0x13e0] sm:$0xff]
    %v711 = vld [vmem:[#allocation2 + $0x13e8] sm:$0xff]
    %v712 = vld [vmem:[#allocation2 + $0x13f0] sm:$0xff]
    %v713 = vld [vmem:[#allocation2 + $0x13f8] sm:$0xff]
    %v714 = vld [vmem:[#allocation2 + $0x1400] sm:$0xff]
    %v715 = vld [vmem:[#allocation2 + $0x1408] sm:$0xff]
    %v716 = vld [vmem:[#allocation2 + $0x1410] sm:$0xff]
    %v717 = vld [vmem:[#allocation2 + $0x1418] sm:$0xff]
    %v718 = vld [vmem:[#allocation2 + $0x1420] sm:$0xff]
    %v719 = vld [vmem:[#allocation2 + $0x1428] sm:$0xff]
    %v720 = vld [vmem:[#allocation2 + $0x1430] sm:$0xff]
    %v721 = vld [vmem:[#allocation2 + $0x1438] sm:$0xff]
    %v722 = vld [vmem:[#allocation2 + $0x1440] sm:$0xff]
    %v723 = vld [vmem:[#allocation2 + $0x1448] sm:$0xff]
    %v724 = vld [vmem:[#allocation2 + $0x1450] sm:$0xff]
    %v725 = vld [vmem:[#allocation2 + $0x1458] sm:$0xff]
    %v726 = vld [vmem:[#allocation2 + $0x1460] sm:$0xff]
    %v727 = vld [vmem:[#allocation2 + $0x1468] sm:$0xff]
    %v728 = vld [vmem:[#allocation2 + $0x1470] sm:$0xff]
    %v729 = vld [vmem:[#allocation2 + $0x1478] sm:$0xff]
    %v730 = vld [vmem:[#allocation2 + $0x1480] sm:$0xff]
    %v731 = vld [vmem:[#allocation2 + $0x1488] sm:$0xff]
    %v732 = vld [vmem:[#allocation2 + $0x1490] sm:$0xff]
    %v733 = vld [vmem:[#allocation2 + $0x1498] sm:$0xff]
    %v734 = vld [vmem:[#allocation2 + $0x14a0] sm:$0xff]
    %v735 = vld [vmem:[#allocation2 + $0x14a8] sm:$0xff]
    %v736 = vld [vmem:[#allocation2 + $0x14b0] sm:$0xff]
    %v737 = vld [vmem:[#allocation2 + $0x14b8] sm:$0xff]
    %v738 = vld [vmem:[#allocation2 + $0x14c0] sm:$0xff]
    %v739 = vld [vmem:[#allocation2 + $0x14c8] sm:$0xff]
    %v740 = vld [vmem:[#allocation2 + $0x14d0] sm:$0xff]
    %v741 = vld [vmem:[#allocation2 + $0x14d8] sm:$0xff]
    %v742 = vld [vmem:[#allocation2 + $0x14e0] sm:$0xff]
    %v743 = vld [vmem:[#allocation2 + $0x14e8] sm:$0xff]
    %v744 = vld [vmem:[#allocation2 + $0x14f0] sm:$0xff]
    %v745 = vld [vmem:[#allocation2 + $0x14f8] sm:$0xff]
    %v746 = vld [vmem:[#allocation2 + $0x1500] sm:$0xff]
    %v747 = vld [vmem:[#allocation2 + $0x1508] sm:$0xff]
    %v748 = vld [vmem:[#allocation2 + $0x1510] sm:$0xff]
    %v749 = vld [vmem:[#allocation2 + $0x1518] sm:$0xff]
    %v750 = vld [vmem:[#allocation2 + $0x1520] sm:$0xff]
    %v751 = vld [vmem:[#allocation2 + $0x1528] sm:$0xff]
    %v752 = vld [vmem:[#allocation2 + $0x1530] sm:$0xff]
    %v753 = vld [vmem:[#allocation2 + $0x1538] sm:$0xff]
    %v754 = vld [vmem:[#allocation2 + $0x1540] sm:$0xff]
    %v755 = vld [vmem:[#allocation2 + $0x1548] sm:$0xff]
    %v756 = vld [vmem:[#allocation2 + $0x1550] sm:$0xff]
    %v757 = vld [vmem:[#allocation2 + $0x1558] sm:$0xff]
    %v758 = vld [vmem:[#allocation2 + $0x1560] sm:$0xff]
    %v759 = vld [vmem:[#allocation2 + $0x1568] sm:$0xff]
    %v760 = vld [vmem:[#allocation2 + $0x1570] sm:$0xff]
    %v761 = vld [vmem:[#allocation2 + $0x1578] sm:$0xff]
    %v762 = vld [vmem:[#allocation2 + $0x1580] sm:$0xff]
    %v763 = vld [vmem:[#allocation2 + $0x1588] sm:$0xff]
    %v764 = vld [vmem:[#allocation2 + $0x1590] sm:$0xff]
    %v765 = vld [vmem:[#allocation2 + $0x1598] sm:$0xff]
    %v766 = vld [vmem:[#allocation2 + $0x15a0] sm:$0xff]
    %v767 = vld [vmem:[#allocation2 + $0x15a8] sm:$0xff]
    %v768 = vld [vmem:[#allocation2 + $0x15b0] sm:$0xff]
    %v769 = vld [vmem:[#allocation2 + $0x15b8] sm:$0xff]
    %v770 = vld [vmem:[#allocation2 + $0x15c0] sm:$0xff]
    %v771 = vld [vmem:[#allocation2 + $0x15c8] sm:$0xff]
    %v772 = vld [vmem:[#allocation2 + $0x15d0] sm:$0xff]
    %v773 = vld [vmem:[#allocation2 + $0x15d8] sm:$0xff]
    %v774 = vld [vmem:[#allocation2 + $0x15e0] sm:$0xff]
    %v775 = vld [vmem:[#allocation2 + $0x15e8] sm:$0xff]
    %v776 = vld [vmem:[#allocation2 + $0x15f0] sm:$0xff]
    %v777 = vld [vmem:[#allocation2 + $0x15f8] sm:$0xff]
    %v778 = vld [vmem:[#allocation2 + $0x1600] sm:$0xff]
    %v779 = vld [vmem:[#allocation2 + $0x1608] sm:$0xff]
    %v780 = vld [vmem:[#allocation2 + $0x1610] sm:$0xff]
    %v781 = vld [vmem:[#allocation2 + $0x1618] sm:$0xff]
    %v782 = vld [vmem:[#allocation2 + $0x1620] sm:$0xff]
    %v783 = vld [vmem:[#allocation2 + $0x1628] sm:$0xff]
    %v784 = vld [vmem:[#allocation2 + $0x1630] sm:$0xff]
    %v785 = vld [vmem:[#allocation2 + $0x1638] sm:$0xff]
    %v786 = vld [vmem:[#allocation2 + $0x1640] sm:$0xff]
    %v787 = vld [vmem:[#allocation2 + $0x1648] sm:$0xff]
    %v788 = vld [vmem:[#allocation2 + $0x1650] sm:$0xff]
    %v789 = vld [vmem:[#allocation2 + $0x1658] sm:$0xff]
    %v790 = vld [vmem:[#allocation2 + $0x1660] sm:$0xff]
    %v791 = vld [vmem:[#allocation2 + $0x1668] sm:$0xff]
    %v792 = vld [vmem:[#allocation2 + $0x1670] sm:$0xff]
    %v793 = vld [vmem:[#allocation2 + $0x1678] sm:$0xff]
    %v794 = vld [vmem:[#allocation2 + $0x1680] sm:$0xff]
    %v795 = vld [vmem:[#allocation2 + $0x1688] sm:$0xff]
    %v796 = vld [vmem:[#allocation2 + $0x1690] sm:$0xff]
    %v797 = vld [vmem:[#allocation2 + $0x1698] sm:$0xff]
    %v798 = vld [vmem:[#allocation2 + $0x16a0] sm:$0xff]
    %v799 = vld [vmem:[#allocation2 + $0x16a8] sm:$0xff]
    %v800 = vld [vmem:[#allocation2 + $0x16b0] sm:$0xff]
    %v801 = vld [vmem:[#allocation2 + $0x16b8] sm:$0xff]
    %v802 = vld [vmem:[#allocation2 + $0x16c0] sm:$0xff]
    %v803 = vld [vmem:[#allocation2 + $0x16c8] sm:$0xff]
    %v804 = vld [vmem:[#allocation2 + $0x16d0] sm:$0xff]
    %v805 = vld [vmem:[#allocation2 + $0x16d8] sm:$0xff]
    %v806 = vld [vmem:[#allocation2 + $0x16e0] sm:$0xff]
    %v807 = vld [vmem:[#allocation2 + $0x16e8] sm:$0xff]
    %v808 = vld [vmem:[#allocation2 + $0x16f0] sm:$0xff]
    %v809 = vld [vmem:[#allocation2 + $0x16f8] sm:$0xff]
    %v810 = vld [vmem:[#allocation2 + $0x1700] sm:$0xff]
    %v811 = vld [vmem:[#allocation2 + $0x1708] sm:$0xff]
    %v812 = vld [vmem:[#allocation2 + $0x1710] sm:$0xff]
    %v813 = vld [vmem:[#allocation2 + $0x1718] sm:$0xff]
    %v814 = vld [vmem:[#allocation2 + $0x1720] sm:$0xff]
    %v815 = vld [vmem:[#allocation2 + $0x1728] sm:$0xff]
    %v816 = vld [vmem:[#allocation2 + $0x1730] sm:$0xff]
    %v817 = vld [vmem:[#allocation2 + $0x1738] sm:$0xff]
    %v818 = vld [vmem:[#allocation2 + $0x1740] sm:$0xff]
    %v819 = vld [vmem:[#allocation2 + $0x1748] sm:$0xff]
    %v820 = vld [vmem:[#allocation2 + $0x1750] sm:$0xff]
    %v821 = vld [vmem:[#allocation2 + $0x1758] sm:$0xff]
    %v822 = vld [vmem:[#allocation2 + $0x1760] sm:$0xff]
    %v823 = vld [vmem:[#allocation2 + $0x1768] sm:$0xff]
    %v824 = vld [vmem:[#allocation2 + $0x1770] sm:$0xff]
    %v825 = vld [vmem:[#allocation2 + $0x1778] sm:$0xff]
    %v826 = vld [vmem:[#allocation2 + $0x1780] sm:$0xff]
    %v827 = vld [vmem:[#allocation2 + $0x1788] sm:$0xff]
    %v828 = vld [vmem:[#allocation2 + $0x1790] sm:$0xff]
    %v829 = vld [vmem:[#allocation2 + $0x1798] sm:$0xff]
    %v830 = vld [vmem:[#allocation2 + $0x17a0] sm:$0xff]
    %v831 = vld [vmem:[#allocation2 + $0x17a8] sm:$0xff]
    %v832 = vld [vmem:[#allocation2 + $0x17b0] sm:$0xff]
    %v833 = vld [vmem:[#allocation2 + $0x17b8] sm:$0xff]
    %v834 = vld [vmem:[#allocation2 + $0x17c0] sm:$0xff]
    %v835 = vld [vmem:[#allocation2 + $0x17c8] sm:$0xff]
    %v836 = vld [vmem:[#allocation2 + $0x17d0] sm:$0xff]
    %v837 = vld [vmem:[#allocation2 + $0x17d8] sm:$0xff]
    %v838 = vld [vmem:[#allocation2 + $0x17e0] sm:$0xff]
    %v839 = vld [vmem:[#allocation2 + $0x17e8] sm:$0xff]
    %v840 = vld [vmem:[#allocation2 + $0x17f0] sm:$0xff]
    %v841 = vld [vmem:[#allocation2 + $0x17f8] sm:$0xff]
    %v842 = vld [vmem:[#allocation2 + $0x1800] sm:$0xff]
    %v843 = vld [vmem:[#allocation2 + $0x1808] sm:$0xff]
    %v844 = vld [vmem:[#allocation2 + $0x1810] sm:$0xff]
    %v845 = vld [vmem:[#allocation2 + $0x1818] sm:$0xff]
    %v846 = vld [vmem:[#allocation2 + $0x1820] sm:$0xff]
    %v847 = vld [vmem:[#allocation2 + $0x1828] sm:$0xff]
    %v848 = vld [vmem:[#allocation2 + $0x1830] sm:$0xff]
    %v849 = vld [vmem:[#allocation2 + $0x1838] sm:$0xff]
    %v850 = vld [vmem:[#allocation2 + $0x1840] sm:$0xff]
    %v851 = vld [vmem:[#allocation2 + $0x1848] sm:$0xff]
    %v852 = vld [vmem:[#allocation2 + $0x1850] sm:$0xff]
    %v853 = vld [vmem:[#allocation2 + $0x1858] sm:$0xff]
    %v854 = vld [vmem:[#allocation2 + $0x1860] sm:$0xff]
    %v855 = vld [vmem:[#allocation2 + $0x1868] sm:$0xff]
    %v856 = vld [vmem:[#allocation2 + $0x1870] sm:$0xff]
    %v857 = vld [vmem:[#allocation2 + $0x1878] sm:$0xff]
    %v858 = vld [vmem:[#allocation2 + $0x1880] sm:$0xff]
    %v859 = vld [vmem:[#allocation2 + $0x1888] sm:$0xff]
    %v860 = vld [vmem:[#allocation2 + $0x1890] sm:$0xff]
    %v861 = vld [vmem:[#allocation2 + $0x1898] sm:$0xff]
    %v862 = vld [vmem:[#allocation2 + $0x18a0] sm:$0xff]
    %v863 = vld [vmem:[#allocation2 + $0x18a8] sm:$0xff]
    %v864 = vld [vmem:[#allocation2 + $0x18b0] sm:$0xff]
    %v865 = vld [vmem:[#allocation2 + $0x18b8] sm:$0xff]
    %v866 = vld [vmem:[#allocation2 + $0x18c0] sm:$0xff]
    %v867 = vld [vmem:[#allocation2 + $0x18c8] sm:$0xff]
    %v868 = vld [vmem:[#allocation2 + $0x18d0] sm:$0xff]
    %v869 = vld [vmem:[#allocation2 + $0x18d8] sm:$0xff]
    %v870 = vld [vmem:[#allocation2 + $0x18e0] sm:$0xff]
    %v871 = vld [vmem:[#allocation2 + $0x18e8] sm:$0xff]
    %v872 = vld [vmem:[#allocation2 + $0x18f0] sm:$0xff]
    %v873 = vld [vmem:[#allocation2 + $0x18f8] sm:$0xff]
    %v874 = vld [vmem:[#allocation2 + $0x1900] sm:$0xff]
    %v875 = vld [vmem:[#allocation2 + $0x1908] sm:$0xff]
    %v876 = vld [vmem:[#allocation2 + $0x1910] sm:$0xff]
    %v877 = vld [vmem:[#allocation2 + $0x1918] sm:$0xff]
    %v878 = vld [vmem:[#allocation2 + $0x1920] sm:$0xff]
    %v879 = vld [vmem:[#allocation2 + $0x1928] sm:$0xff]
    %v880 = vld [vmem:[#allocation2 + $0x1930] sm:$0xff]
    %v881 = vld [vmem:[#allocation2 + $0x1938] sm:$0xff]
    %v882 = vld [vmem:[#allocation2 + $0x1940] sm:$0xff]
    %v883 = vld [vmem:[#allocation2 + $0x1948] sm:$0xff]
    %v884 = vld [vmem:[#allocation2 + $0x1950] sm:$0xff]
    %v885 = vld [vmem:[#allocation2 + $0x1958] sm:$0xff]
    %v886 = vld [vmem:[#allocation2 + $0x1960] sm:$0xff]
    %v887 = vld [vmem:[#allocation2 + $0x1968] sm:$0xff]
    %v888 = vld [vmem:[#allocation2 + $0x1970] sm:$0xff]
    %v889 = vld [vmem:[#allocation2 + $0x1978] sm:$0xff]
    %v890 = vld [vmem:[#allocation2 + $0x1980] sm:$0xff]
    %v891 = vld [vmem:[#allocation2 + $0x1988] sm:$0xff]
    %v892 = vld [vmem:[#allocation2 + $0x1990] sm:$0xff]
    %v893 = vld [vmem:[#allocation2 + $0x1998] sm:$0xff]
    %v894 = vld [vmem:[#allocation2 + $0x19a0] sm:$0xff]
    %v895 = vld [vmem:[#allocation2 + $0x19a8] sm:$0xff]
    %v896 = vld [vmem:[#allocation2 + $0x19b0] sm:$0xff]
    %v897 = vld [vmem:[#allocation2 + $0x19b8] sm:$0xff]
    %v898 = vld [vmem:[#allocation2 + $0x19c0] sm:$0xff]
    %v899 = vld [vmem:[#allocation2 + $0x19c8] sm:$0xff]
    %v900 = vld [vmem:[#allocation2 + $0x19d0] sm:$0xff]
    %v901 = vld [vmem:[#allocation2 + $0x19d8] sm:$0xff]
    %v902 = vld [vmem:[#allocation2 + $0x19e0] sm:$0xff]
    %v903 = vld [vmem:[#allocation2 + $0x19e8] sm:$0xff]
    %v904 = vld [vmem:[#allocation2 + $0x19f0] sm:$0xff]
    %v905 = vld [vmem:[#allocation2 + $0x19f8] sm:$0xff]
    %v906 = vld [vmem:[#allocation2 + $0x1a00] sm:$0xff]
    %v907 = vld [vmem:[#allocation2 + $0x1a08] sm:$0xff]
    %v908 = vld [vmem:[#allocation2 + $0x1a10] sm:$0xff]
    %v909 = vld [vmem:[#allocation2 + $0x1a18] sm:$0xff]
    %v910 = vld [vmem:[#allocation2 + $0x1a20] sm:$0xff]
    %v911 = vld [vmem:[#allocation2 + $0x1a28] sm:$0xff]
    %v912 = vld [vmem:[#allocation2 + $0x1a30] sm:$0xff]
    %v913 = vld [vmem:[#allocation2 + $0x1a38] sm:$0xff]
    %v914 = vld [vmem:[#allocation2 + $0x1a40] sm:$0xff]
    %v915 = vld [vmem:[#allocation2 + $0x1a48] sm:$0xff]
    %v916 = vld [vmem:[#allocation2 + $0x1a50] sm:$0xff]
    %v917 = vld [vmem:[#allocation2 + $0x1a58] sm:$0xff]
    %v918 = vld [vmem:[#allocation2 + $0x1a60] sm:$0xff]
    %v919 = vld [vmem:[#allocation2 + $0x1a68] sm:$0xff]
    %v920 = vld [vmem:[#allocation2 + $0x1a70] sm:$0xff]
    %v921 = vld [vmem:[#allocation2 + $0x1a78] sm:$0xff]
    %v922 = vld [vmem:[#allocation2 + $0x1a80] sm:$0xff]
    %v923 = vld [vmem:[#allocation2 + $0x1a88] sm:$0xff]
    %v924 = vld [vmem:[#allocation2 + $0x1a90] sm:$0xff]
    %v925 = vld [vmem:[#allocation2 + $0x1a98] sm:$0xff]
    %v926 = vld [vmem:[#allocation2 + $0x1aa0] sm:$0xff]
    %v927 = vld [vmem:[#allocation2 + $0x1aa8] sm:$0xff]
    %v928 = vld [vmem:[#allocation2 + $0x1ab0] sm:$0xff]
    %v929 = vld [vmem:[#allocation2 + $0x1ab8] sm:$0xff]
    %v930 = vld [vmem:[#allocation2 + $0x1ac0] sm:$0xff]
    %v931 = vld [vmem:[#allocation2 + $0x1ac8] sm:$0xff]
    %v932 = vld [vmem:[#allocation2 + $0x1ad0] sm:$0xff]
    %v933 = vld [vmem:[#allocation2 + $0x1ad8] sm:$0xff]
    %v934 = vld [vmem:[#allocation2 + $0x1ae0] sm:$0xff]
    %v935 = vld [vmem:[#allocation2 + $0x1ae8] sm:$0xff]
    %v936 = vld [vmem:[#allocation2 + $0x1af0] sm:$0xff]
    %v937 = vld [vmem:[#allocation2 + $0x1af8] sm:$0xff]
    %v938 = vld [vmem:[#allocation2 + $0x1b00] sm:$0xff]
    %v939 = vld [vmem:[#allocation2 + $0x1b08] sm:$0xff]
    %v940 = vld [vmem:[#allocation2 + $0x1b10] sm:$0xff]
    %v941 = vld [vmem:[#allocation2 + $0x1b18] sm:$0xff]
    %v942 = vld [vmem:[#allocation2 + $0x1b20] sm:$0xff]
    %v943 = vld [vmem:[#allocation2 + $0x1b28] sm:$0xff]
    %v944 = vld [vmem:[#allocation2 + $0x1b30] sm:$0xff]
    %v945 = vld [vmem:[#allocation2 + $0x1b38] sm:$0xff]
    %v946 = vld [vmem:[#allocation2 + $0x1b40] sm:$0xff]
    %v947 = vld [vmem:[#allocation2 + $0x1b48] sm:$0xff]
    %v948 = vld [vmem:[#allocation2 + $0x1b50] sm:$0xff]
    %v949 = vld [vmem:[#allocation2 + $0x1b58] sm:$0xff]
    %v950 = vld [vmem:[#allocation2 + $0x1b60] sm:$0xff]
    %v951 = vld [vmem:[#allocation2 + $0x1b68] sm:$0xff]
    %v952 = vld [vmem:[#allocation2 + $0x1b70] sm:$0xff]
    %v953 = vld [vmem:[#allocation2 + $0x1b78] sm:$0xff]
    %v954 = vld [vmem:[#allocation2 + $0x1b80] sm:$0xff]
    %v955 = vld [vmem:[#allocation2 + $0x1b88] sm:$0xff]
    %v956 = vld [vmem:[#allocation2 + $0x1b90] sm:$0xff]
    %v957 = vld [vmem:[#allocation2 + $0x1b98] sm:$0xff]
    %v958 = vld [vmem:[#allocation2 + $0x1ba0] sm:$0xff]
    %v959 = vld [vmem:[#allocation2 + $0x1ba8] sm:$0xff]
    %v960 = vld [vmem:[#allocation2 + $0x1bb0] sm:$0xff]
    %v961 = vld [vmem:[#allocation2 + $0x1bb8] sm:$0xff]
    %v962 = vld [vmem:[#allocation2 + $0x1bc0] sm:$0xff]
    %v963 = vld [vmem:[#allocation2 + $0x1bc8] sm:$0xff]
    %v964 = vld [vmem:[#allocation2 + $0x1bd0] sm:$0xff]
    %v965 = vld [vmem:[#allocation2 + $0x1bd8] sm:$0xff]
    %v966 = vld [vmem:[#allocation2 + $0x1be0] sm:$0xff]
    %v967 = vld [vmem:[#allocation2 + $0x1be8] sm:$0xff]
    %v968 = vld [vmem:[#allocation2 + $0x1bf0] sm:$0xff]
    %v969 = vld [vmem:[#allocation2 + $0x1bf8] sm:$0xff]
    %v970 = vld [vmem:[#allocation2 + $0x1c00] sm:$0xff]
    %v971 = vld [vmem:[#allocation2 + $0x1c08] sm:$0xff]
    %v972 = vld [vmem:[#allocation2 + $0x1c10] sm:$0xff]
    %v973 = vld [vmem:[#allocation2 + $0x1c18] sm:$0xff]
    %v974 = vld [vmem:[#allocation2 + $0x1c20] sm:$0xff]
    %v975 = vld [vmem:[#allocation2 + $0x1c28] sm:$0xff]
    %v976 = vld [vmem:[#allocation2 + $0x1c30] sm:$0xff]
    %v977 = vld [vmem:[#allocation2 + $0x1c38] sm:$0xff]
    %v978 = vld [vmem:[#allocation2 + $0x1c40] sm:$0xff]
    %v979 = vld [vmem:[#allocation2 + $0x1c48] sm:$0xff]
    %v980 = vld [vmem:[#allocation2 + $0x1c50] sm:$0xff]
    %v981 = vld [vmem:[#allocation2 + $0x1c58] sm:$0xff]
    %v982 = vld [vmem:[#allocation2 + $0x1c60] sm:$0xff]
    %v983 = vld [vmem:[#allocation2 + $0x1c68] sm:$0xff]
    %v984 = vld [vmem:[#allocation2 + $0x1c70] sm:$0xff]
    %v985 = vld [vmem:[#allocation2 + $0x1c78] sm:$0xff]
    %v986 = vld [vmem:[#allocation2 + $0x1c80] sm:$0xff]
    %v987 = vld [vmem:[#allocation2 + $0x1c88] sm:$0xff]
    %v988 = vld [vmem:[#allocation2 + $0x1c90] sm:$0xff]
    %v989 = vld [vmem:[#allocation2 + $0x1c98] sm:$0xff]
    %v990 = vld [vmem:[#allocation2 + $0x1ca0] sm:$0xff]
    %v991 = vld [vmem:[#allocation2 + $0x1ca8] sm:$0xff]
    %v992 = vld [vmem:[#allocation2 + $0x1cb0] sm:$0xff]
    %v993 = vld [vmem:[#allocation2 + $0x1cb8] sm:$0xff]
    %v994 = vld [vmem:[#allocation2 + $0x1cc0] sm:$0xff]
    %v995 = vld [vmem:[#allocation2 + $0x1cc8] sm:$0xff]
    %v996 = vld [vmem:[#allocation2 + $0x1cd0] sm:$0xff]
    %v997 = vld [vmem:[#allocation2 + $0x1cd8] sm:$0xff]
    %v998 = vld [vmem:[#allocation2 + $0x1ce0] sm:$0xff]
    %v999 = vld [vmem:[#allocation2 + $0x1ce8] sm:$0xff]
    %v1000 = vld [vmem:[#allocation2 + $0x1cf0] sm:$0xff]
    %v1001 = vld [vmem:[#allocation2 + $0x1cf8] sm:$0xff]
    %v1002 = vld [vmem:[#allocation2 + $0x1d00] sm:$0xff]
    %v1003 = vld [vmem:[#allocation2 + $0x1d08] sm:$0xff]
    %v1004 = vld [vmem:[#allocation2 + $0x1d10] sm:$0xff]
    %v1005 = vld [vmem:[#allocation2 + $0x1d18] sm:$0xff]
    %v1006 = vld [vmem:[#allocation2 + $0x1d20] sm:$0xff]
    %v1007 = vld [vmem:[#allocation2 + $0x1d28] sm:$0xff]
    %v1008 = vld [vmem:[#allocation2 + $0x1d30] sm:$0xff]
    %v1009 = vld [vmem:[#allocation2 + $0x1d38] sm:$0xff]
    %v1010 = vld [vmem:[#allocation2 + $0x1d40] sm:$0xff]
    %v1011 = vld [vmem:[#allocation2 + $0x1d48] sm:$0xff]
    %v1012 = vld [vmem:[#allocation2 + $0x1d50] sm:$0xff]
    %v1013 = vld [vmem:[#allocation2 + $0x1d58] sm:$0xff]
    %v1014 = vld [vmem:[#allocation2 + $0x1d60] sm:$0xff]
    %v1015 = vld [vmem:[#allocation2 + $0x1d68] sm:$0xff]
    %v1016 = vld [vmem:[#allocation2 + $0x1d70] sm:$0xff]
    %v1017 = vld [vmem:[#allocation2 + $0x1d78] sm:$0xff]
    %v1018 = vld [vmem:[#allocation2 + $0x1d80] sm:$0xff]
    %v1019 = vld [vmem:[#allocation2 + $0x1d88] sm:$0xff]
    %v1020 = vld [vmem:[#allocation2 + $0x1d90] sm:$0xff]
    %v1021 = vld [vmem:[#allocation2 + $0x1d98] sm:$0xff]
    %v1022 = vld [vmem:[#allocation2 + $0x1da0] sm:$0xff]
    %v1023 = vld [vmem:[#allocation2 + $0x1da8] sm:$0xff]
    %v1024 = vld [vmem:[#allocation2 + $0x1db0] sm:$0xff]
    %v1025 = vld [vmem:[#allocation2 + $0x1db8] sm:$0xff]
    %v1026 = vld [vmem:[#allocation2 + $0x1dc0] sm:$0xff]
    %v1027 = vld [vmem:[#allocation2 + $0x1dc8] sm:$0xff]
    %v1028 = vld [vmem:[#allocation2 + $0x1dd0] sm:$0xff]
    %v1029 = vld [vmem:[#allocation2 + $0x1dd8] sm:$0xff]
    %v1030 = vld [vmem:[#allocation2 + $0x1de0] sm:$0xff]
    %v1031 = vld [vmem:[#allocation2 + $0x1de8] sm:$0xff]
    %v1032 = vld [vmem:[#allocation2 + $0x1df0] sm:$0xff]
    %v1033 = vld [vmem:[#allocation2 + $0x1df8] sm:$0xff]
    %v1034 = vld [vmem:[#allocation2 + $0x1e00] sm:$0xff]
    %v1035 = vld [vmem:[#allocation2 + $0x1e08] sm:$0xff]
    %v1036 = vld [vmem:[#allocation2 + $0x1e10] sm:$0xff]
    %v1037 = vld [vmem:[#allocation2 + $0x1e18] sm:$0xff]
    %v1038 = vld [vmem:[#allocation2 + $0x1e20] sm:$0xff]
    %v1039 = vld [vmem:[#allocation2 + $0x1e28] sm:$0xff]
    %v1040 = vld [vmem:[#allocation2 + $0x1e30] sm:$0xff]
    %v1041 = vld [vmem:[#allocation2 + $0x1e38] sm:$0xff]
    %v1042 = vld [vmem:[#allocation2 + $0x1e40] sm:$0xff]
    %v1043 = vld [vmem:[#allocation2 + $0x1e48] sm:$0xff]
    %v1044 = vld [vmem:[#allocation2 + $0x1e50] sm:$0xff]
    %v1045 = vld [vmem:[#allocation2 + $0x1e58] sm:$0xff]
    %v1046 = vld [vmem:[#allocation2 + $0x1e60] sm:$0xff]
    %v1047 = vld [vmem:[#allocation2 + $0x1e68] sm:$0xff]
    %v1048 = vld [vmem:[#allocation2 + $0x1e70] sm:$0xff]
    %v1049 = vld [vmem:[#allocation2 + $0x1e78] sm:$0xff]
    %v1050 = vld [vmem:[#allocation2 + $0x1e80] sm:$0xff]
    %v1051 = vld [vmem:[#allocation2 + $0x1e88] sm:$0xff]
    %v1052 = vld [vmem:[#allocation2 + $0x1e90] sm:$0xff]
    %v1053 = vld [vmem:[#allocation2 + $0x1e98] sm:$0xff]
    %v1054 = vld [vmem:[#allocation2 + $0x1ea0] sm:$0xff]
    %v1055 = vld [vmem:[#allocation2 + $0x1ea8] sm:$0xff]
    %v1056 = vld [vmem:[#allocation2 + $0x1eb0] sm:$0xff]
    %v1057 = vld [vmem:[#allocation2 + $0x1eb8] sm:$0xff]
    %v1058 = vld [vmem:[#allocation2 + $0x1ec0] sm:$0xff]
    %v1059 = vld [vmem:[#allocation2 + $0x1ec8] sm:$0xff]
    %v1060 = vld [vmem:[#allocation2 + $0x1ed0] sm:$0xff]
    %v1061 = vld [vmem:[#allocation2 + $0x1ed8] sm:$0xff]
    %v1062 = vld [vmem:[#allocation2 + $0x1ee0] sm:$0xff]
    %v1063 = vld [vmem:[#allocation2 + $0x1ee8] sm:$0xff]
    %v1064 = vld [vmem:[#allocation2 + $0x1ef0] sm:$0xff]
    %v1065 = vld [vmem:[#allocation2 + $0x1ef8] sm:$0xff]
    %v1066 = vld [vmem:[#allocation2 + $0x1f00] sm:$0xff]
    %v1067 = vld [vmem:[#allocation2 + $0x1f08] sm:$0xff]
    %v1068 = vld [vmem:[#allocation2 + $0x1f10] sm:$0xff]
    %v1069 = vld [vmem:[#allocation2 + $0x1f18] sm:$0xff]
    %v1070 = vld [vmem:[#allocation2 + $0x1f20] sm:$0xff]
    %v1071 = vld [vmem:[#allocation2 + $0x1f28] sm:$0xff]
    %v1072 = vld [vmem:[#allocation2 + $0x1f30] sm:$0xff]
    %v1073 = vld [vmem:[#allocation2 + $0x1f38] sm:$0xff]
    %v1074 = vld [vmem:[#allocation2 + $0x1f40] sm:$0xff]
    %v1075 = vld [vmem:[#allocation2 + $0x1f48] sm:$0xff]
    %v1076 = vld [vmem:[#allocation2 + $0x1f50] sm:$0xff]
    %v1077 = vld [vmem:[#allocation2 + $0x1f58] sm:$0xff]
    %v1078 = vld [vmem:[#allocation2 + $0x1f60] sm:$0xff]
    %v1079 = vld [vmem:[#allocation2 + $0x1f68] sm:$0xff]
    %v1080 = vld [vmem:[#allocation2 + $0x1f70] sm:$0xff]
    %v1081 = vld [vmem:[#allocation2 + $0x1f78] sm:$0xff]
    %v1082 = vld [vmem:[#allocation2 + $0x1f80] sm:$0xff]
    %v1083 = vld [vmem:[#allocation2 + $0x1f88] sm:$0xff]
    %v1084 = vld [vmem:[#allocation2 + $0x1f90] sm:$0xff]
    %v1085 = vld [vmem:[#allocation2 + $0x1f98] sm:$0xff]
    %v1086 = vld [vmem:[#allocation2 + $0x1fa0] sm:$0xff]
    %v1087 = vld [vmem:[#allocation2 + $0x1fa8] sm:$0xff]
    %v1088 = vld [vmem:[#allocation2 + $0x1fb0] sm:$0xff]
    %v1089 = vld [vmem:[#allocation2 + $0x1fb8] sm:$0xff]
    %v1090 = vld [vmem:[#allocation2 + $0x1fc0] sm:$0xff]
    %v1091 = vld [vmem:[#allocation2 + $0x1fc8] sm:$0xff]
    %v1092 = vld [vmem:[#allocation2 + $0x1fd0] sm:$0xff]
    %v1093 = vld [vmem:[#allocation2 + $0x1fd8] sm:$0xff]
    %v1094 = vld [vmem:[#allocation2 + $0x1fe0] sm:$0xff]
    %v1095 = vld [vmem:[#allocation2 + $0x1fe8] sm:$0xff]
    %v1096 = vld [vmem:[#allocation2 + $0x1ff0] sm:$0xff]
    %v1097 = vld [vmem:[#allocation2 + $0x1ff8] sm:$0xff]
    %v1098 = vadd.f32 %v74, %v76
    %v1099 = vadd.f32 %v1098, %v78
    %v1100 = vadd.f32 %v1099, %v80
    %v1101 = vadd.f32 %v1100, %v82
    %v1102 = vadd.f32 %v1101, %v84
    %v1103 = vadd.f32 %v1102, %v86
    %v1104 = vadd.f32 %v1103, %v88
    %v1105 = vadd.f32 %v1104, %v90
    %v1106 = vadd.f32 %v1105, %v92
    %v1107 = vadd.f32 %v1106, %v94
    %v1108 = vadd.f32 %v1107, %v96
    %v1109 = vadd.f32 %v1108, %v98
    %v1110 = vadd.f32 %v1109, %v100
    %v1111 = vadd.f32 %v1110, %v102
    %v1112 = vadd.f32 %v1111, %v104
    %v1113 = vadd.f32 %v1112, %v106
    %v1114 = vadd.f32 %v1113, %v108
    %v1115 = vadd.f32 %v1114, %v110
    %v1116 = vadd.f32 %v1115, %v112
    %v1117 = vadd.f32 %v1116, %v114
    %v1118 = vadd.f32 %v1117, %v116
    %v1119 = vadd.f32 %v1118, %v118
    %v1120 = vadd.f32 %v1119, %v120
    %v1121 = vadd.f32 %v1120, %v122
    %v1122 = vadd.f32 %v1121, %v124
    %v1123 = vadd.f32 %v1122, %v126
    %v1124 = vadd.f32 %v1123, %v128
    %v1125 = vadd.f32 %v1124, %v130
    %v1126 = vadd.f32 %v1125, %v132
    %v1127 = vadd.f32 %v1126, %v134
    %v1128 = vadd.f32 %v1127, %v136
    %v1129 = vadd.f32 %v1128, %v138
    %v1130 = vadd.f32 %v1129, %v140
    %v1131 = vadd.f32 %v1130, %v142
    %v1132 = vadd.f32 %v1131, %v144
    %v1133 = vadd.f32 %v1132, %v146
    %v1134 = vadd.f32 %v1133, %v148
    %v1135 = vadd.f32 %v1134, %v150
    %v1136 = vadd.f32 %v1135, %v152
    %v1137 = vadd.f32 %v1136, %v154
    %v1138 = vadd.f32 %v1137, %v156
    %v1139 = vadd.f32 %v1138, %v158
    %v1140 = vadd.f32 %v1139, %v160
    %v1141 = vadd.f32 %v1140, %v162
    %v1142 = vadd.f32 %v1141, %v164
    %v1143 = vadd.f32 %v1142, %v166
    %v1144 = vadd.f32 %v1143, %v168
    %v1145 = vadd.f32 %v1144, %v170
    %v1146 = vadd.f32 %v1145, %v172
    %v1147 = vadd.f32 %v1146, %v174
    %v1148 = vadd.f32 %v1147, %v176
    %v1149 = vadd.f32 %v1148, %v178
    %v1150 = vadd.f32 %v1149, %v180
    %v1151 = vadd.f32 %v1150, %v182
    %v1152 = vadd.f32 %v1151, %v184
    %v1153 = vadd.f32 %v1152, %v186
    %v1154 = vadd.f32 %v1153, %v188
    %v1155 = vadd.f32 %v1154, %v190
    %v1156 = vadd.f32 %v1155, %v192
    %v1157 = vadd.f32 %v1156, %v194
    %v1158 = vadd.f32 %v1157, %v196
    %v1159 = vadd.f32 %v1158, %v198
    %v1160 = vadd.f32 %v1159, %v200
    %v1161 = vadd.f32 %v1160, %v202
    %v1162 = vadd.f32 %v1161, %v204
    %v1163 = vadd.f32 %v1162, %v206
    %v1164 = vadd.f32 %v1163, %v208
    %v1165 = vadd.f32 %v1164, %v210
    %v1166 = vadd.f32 %v1165, %v212
    %v1167 = vadd.f32 %v1166, %v214
    %v1168 = vadd.f32 %v1167, %v216
    %v1169 = vadd.f32 %v1168, %v218
    %v1170 = vadd.f32 %v1169, %v220
    %v1171 = vadd.f32 %v1170, %v222
    %v1172 = vadd.f32 %v1171, %v224
    %v1173 = vadd.f32 %v1172, %v226
    %v1174 = vadd.f32 %v1173, %v228
    %v1175 = vadd.f32 %v1174, %v230
    %v1176 = vadd.f32 %v1175, %v232
    %v1177 = vadd.f32 %v1176, %v234
    %v1178 = vadd.f32 %v1177, %v236
    %v1179 = vadd.f32 %v1178, %v238
    %v1180 = vadd.f32 %v1179, %v240
    %v1181 = vadd.f32 %v1180, %v242
    %v1182 = vadd.f32 %v1181, %v244
    %v1183 = vadd.f32 %v1182, %v246
    %v1184 = vadd.f32 %v1183, %v248
    %v1185 = vadd.f32 %v1184, %v250
    %v1186 = vadd.f32 %v1185, %v252
    %v1187 = vadd.f32 %v1186, %v254
    %v1188 = vadd.f32 %v1187, %v256
    %v1189 = vadd.f32 %v1188, %v258
    %v1190 = vadd.f32 %v1189, %v260
    %v1191 = vadd.f32 %v1190, %v262
    %v1192 = vadd.f32 %v1191, %v264
    %v1193 = vadd.f32 %v1192, %v266
    %v1194 = vadd.f32 %v1193, %v268
    %v1195 = vadd.f32 %v1194, %v270
    %v1196 = vadd.f32 %v1195, %v272
    %v1197 = vadd.f32 %v1196, %v274
    %v1198 = vadd.f32 %v1197, %v276
    %v1199 = vadd.f32 %v1198, %v278
    %v1200 = vadd.f32 %v1199, %v280
    %v1201 = vadd.f32 %v1200, %v282
    %v1202 = vadd.f32 %v1201, %v284
    %v1203 = vadd.f32 %v1202, %v286
    %v1204 = vadd.f32 %v1203, %v288
    %v1205 = vadd.f32 %v1204, %v290
    %v1206 = vadd.f32 %v1205, %v292
    %v1207 = vadd.f32 %v1206, %v294
    %v1208 = vadd.f32 %v1207, %v296
    %v1209 = vadd.f32 %v1208, %v298
    %v1210 = vadd.f32 %v1209, %v300
    %v1211 = vadd.f32 %v1210, %v302
    %v1212 = vadd.f32 %v1211, %v304
    %v1213 = vadd.f32 %v1212, %v306
    %v1214 = vadd.f32 %v1213, %v308
    %v1215 = vadd.f32 %v1214, %v310
    %v1216 = vadd.f32 %v1215, %v312
    %v1217 = vadd.f32 %v1216, %v314
    %v1218 = vadd.f32 %v1217, %v316
    %v1219 = vadd.f32 %v1218, %v318
    %v1220 = vadd.f32 %v1219, %v320
    %v1221 = vadd.f32 %v1220, %v322
    %v1222 = vadd.f32 %v1221, %v324
    %v1223 = vadd.f32 %v1222, %v326
    %v1224 = vadd.f32 %v1223, %v328
    %v1225 = vadd.f32 %v1224, %v330
    %v1226 = vadd.f32 %v1225, %v332
    %v1227 = vadd.f32 %v1226, %v334
    %v1228 = vadd.f32 %v1227, %v336
    %v1229 = vadd.f32 %v1228, %v338
    %v1230 = vadd.f32 %v1229, %v340
    %v1231 = vadd.f32 %v1230, %v342
    %v1232 = vadd.f32 %v1231, %v344
    %v1233 = vadd.f32 %v1232, %v346
    %v1234 = vadd.f32 %v1233, %v348
    %v1235 = vadd.f32 %v1234, %v350
    %v1236 = vadd.f32 %v1235, %v352
    %v1237 = vadd.f32 %v1236, %v354
    %v1238 = vadd.f32 %v1237, %v356
    %v1239 = vadd.f32 %v1238, %v358
    %v1240 = vadd.f32 %v1239, %v360
    %v1241 = vadd.f32 %v1240, %v362
    %v1242 = vadd.f32 %v1241, %v364
    %v1243 = vadd.f32 %v1242, %v366
    %v1244 = vadd.f32 %v1243, %v368
    %v1245 = vadd.f32 %v1244, %v370
    %v1246 = vadd.f32 %v1245, %v372
    %v1247 = vadd.f32 %v1246, %v374
    %v1248 = vadd.f32 %v1247, %v376
    %v1249 = vadd.f32 %v1248, %v378
    %v1250 = vadd.f32 %v1249, %v380
    %v1251 = vadd.f32 %v1250, %v382
    %v1252 = vadd.f32 %v1251, %v384
    %v1253 = vadd.f32 %v1252, %v386
    %v1254 = vadd.f32 %v1253, %v388
    %v1255 = vadd.f32 %v1254, %v390
    %v1256 = vadd.f32 %v1255, %v392
    %v1257 = vadd.f32 %v1256, %v394
    %v1258 = vadd.f32 %v1257, %v396
    %v1259 = vadd.f32 %v1258, %v398
    %v1260 = vadd.f32 %v1259, %v400
    %v1261 = vadd.f32 %v1260, %v402
    %v1262 = vadd.f32 %v1261, %v404
    %v1263 = vadd.f32 %v1262, %v406
    %v1264 = vadd.f32 %v1263, %v408
    %v1265 = vadd.f32 %v1264, %v410
    %v1266 = vadd.f32 %v1265, %v412
    %v1267 = vadd.f32 %v1266, %v414
    %v1268 = vadd.f32 %v1267, %v416
    %v1269 = vadd.f32 %v1268, %v418
    %v1270 = vadd.f32 %v1269, %v420
    %v1271 = vadd.f32 %v1270, %v422
    %v1272 = vadd.f32 %v1271, %v424
    %v1273 = vadd.f32 %v1272, %v426
    %v1274 = vadd.f32 %v1273, %v428
    %v1275 = vadd.f32 %v1274, %v430
    %v1276 = vadd.f32 %v1275, %v432
    %v1277 = vadd.f32 %v1276, %v434
    %v1278 = vadd.f32 %v1277, %v436
    %v1279 = vadd.f32 %v1278, %v438
    %v1280 = vadd.f32 %v1279, %v440
    %v1281 = vadd.f32 %v1280, %v442
    %v1282 = vadd.f32 %v1281, %v444
    %v1283 = vadd.f32 %v1282, %v446
    %v1284 = vadd.f32 %v1283, %v448
    %v1285 = vadd.f32 %v1284, %v450
    %v1286 = vadd.f32 %v1285, %v452
    %v1287 = vadd.f32 %v1286, %v454
    %v1288 = vadd.f32 %v1287, %v456
    %v1289 = vadd.f32 %v1288, %v458
    %v1290 = vadd.f32 %v1289, %v460
    %v1291 = vadd.f32 %v1290, %v462
    %v1292 = vadd.f32 %v1291, %v464
    %v1293 = vadd.f32 %v1292, %v466
    %v1294 = vadd.f32 %v1293, %v468
    %v1295 = vadd.f32 %v1294, %v470
    %v1296 = vadd.f32 %v1295, %v472
    %v1297 = vadd.f32 %v1296, %v474
    %v1298 = vadd.f32 %v1297, %v476
    %v1299 = vadd.f32 %v1298, %v478
    %v1300 = vadd.f32 %v1299, %v480
    %v1301 = vadd.f32 %v1300, %v482
    %v1302 = vadd.f32 %v1301, %v484
    %v1303 = vadd.f32 %v1302, %v486
    %v1304 = vadd.f32 %v1303, %v488
    %v1305 = vadd.f32 %v1304, %v490
    %v1306 = vadd.f32 %v1305, %v492
    %v1307 = vadd.f32 %v1306, %v494
    %v1308 = vadd.f32 %v1307, %v496
    %v1309 = vadd.f32 %v1308, %v498
    %v1310 = vadd.f32 %v1309, %v500
    %v1311 = vadd.f32 %v1310, %v502
    %v1312 = vadd.f32 %v1311, %v504
    %v1313 = vadd.f32 %v1312, %v506
    %v1314 = vadd.f32 %v1313, %v508
    %v1315 = vadd.f32 %v1314, %v510
    %v1316 = vadd.f32 %v1315, %v512
    %v1317 = vadd.f32 %v1316, %v514
    %v1318 = vadd.f32 %v1317, %v516
    %v1319 = vadd.f32 %v1318, %v518
    %v1320 = vadd.f32 %v1319, %v520
    %v1321 = vadd.f32 %v1320, %v522
    %v1322 = vadd.f32 %v1321, %v524
    %v1323 = vadd.f32 %v1322, %v526
    %v1324 = vadd.f32 %v1323, %v528
    %v1325 = vadd.f32 %v1324, %v530
    %v1326 = vadd.f32 %v1325, %v532
    %v1327 = vadd.f32 %v1326, %v534
    %v1328 = vadd.f32 %v1327, %v536
    %v1329 = vadd.f32 %v1328, %v538
    %v1330 = vadd.f32 %v1329, %v540
    %v1331 = vadd.f32 %v1330, %v542
    %v1332 = vadd.f32 %v1331, %v544
    %v1333 = vadd.f32 %v1332, %v546
    %v1334 = vadd.f32 %v1333, %v548
    %v1335 = vadd.f32 %v1334, %v550
    %v1336 = vadd.f32 %v1335, %v552
    %v1337 = vadd.f32 %v1336, %v554
    %v1338 = vadd.f32 %v1337, %v556
    %v1339 = vadd.f32 %v1338, %v558
    %v1340 = vadd.f32 %v1339, %v560
    %v1341 = vadd.f32 %v1340, %v562
    %v1342 = vadd.f32 %v1341, %v564
    %v1343 = vadd.f32 %v1342, %v566
    %v1344 = vadd.f32 %v1343, %v568
    %v1345 = vadd.f32 %v1344, %v570
    %v1346 = vadd.f32 %v1345, %v572
    %v1347 = vadd.f32 %v1346, %v574
    %v1348 = vadd.f32 %v1347, %v576
    %v1349 = vadd.f32 %v1348, %v578
    %v1350 = vadd.f32 %v1349, %v580
    %v1351 = vadd.f32 %v1350, %v582
    %v1352 = vadd.f32 %v1351, %v584
    %v1353 = vadd.f32 %v1352, %v586
    %v1354 = vadd.f32 %v1353, %v588
    %v1355 = vadd.f32 %v1354, %v590
    %v1356 = vadd.f32 %v1355, %v592
    %v1357 = vadd.f32 %v1356, %v594
    %v1358 = vadd.f32 %v1357, %v596
    %v1359 = vadd.f32 %v1358, %v598
    %v1360 = vadd.f32 %v1359, %v600
    %v1361 = vadd.f32 %v1360, %v602
    %v1362 = vadd.f32 %v1361, %v604
    %v1363 = vadd.f32 %v1362, %v606
    %v1364 = vadd.f32 %v1363, %v608
    %v1365 = vadd.f32 %v1364, %v610
    %v1366 = vadd.f32 %v1365, %v612
    %v1367 = vadd.f32 %v1366, %v614
    %v1368 = vadd.f32 %v1367, %v616
    %v1369 = vadd.f32 %v1368, %v618
    %v1370 = vadd.f32 %v1369, %v620
    %v1371 = vadd.f32 %v1370, %v622
    %v1372 = vadd.f32 %v1371, %v624
    %v1373 = vadd.f32 %v1372, %v626
    %v1374 = vadd.f32 %v1373, %v628
    %v1375 = vadd.f32 %v1374, %v630
    %v1376 = vadd.f32 %v1375, %v632
    %v1377 = vadd.f32 %v1376, %v634
    %v1378 = vadd.f32 %v1377, %v636
    %v1379 = vadd.f32 %v1378, %v638
    %v1380 = vadd.f32 %v1379, %v640
    %v1381 = vadd.f32 %v1380, %v642
    %v1382 = vadd.f32 %v1381, %v644
    %v1383 = vadd.f32 %v1382, %v646
    %v1384 = vadd.f32 %v1383, %v648
    %v1385 = vadd.f32 %v1384, %v650
    %v1386 = vadd.f32 %v1385, %v652
    %v1387 = vadd.f32 %v1386, %v654
    %v1388 = vadd.f32 %v1387, %v656
    %v1389 = vadd.f32 %v1388, %v658
    %v1390 = vadd.f32 %v1389, %v660
    %v1391 = vadd.f32 %v1390, %v662
    %v1392 = vadd.f32 %v1391, %v664
    %v1393 = vadd.f32 %v1392, %v666
    %v1394 = vadd.f32 %v1393, %v668
    %v1395 = vadd.f32 %v1394, %v670
    %v1396 = vadd.f32 %v1395, %v672
    %v1397 = vadd.f32 %v1396, %v674
    %v1398 = vadd.f32 %v1397, %v676
    %v1399 = vadd.f32 %v1398, %v678
    %v1400 = vadd.f32 %v1399, %v680
    %v1401 = vadd.f32 %v1400, %v682
    %v1402 = vadd.f32 %v1401, %v684
    %v1403 = vadd.f32 %v1402, %v686
    %v1404 = vadd.f32 %v1403, %v688
    %v1405 = vadd.f32 %v1404, %v690
    %v1406 = vadd.f32 %v1405, %v692
    %v1407 = vadd.f32 %v1406, %v694
    %v1408 = vadd.f32 %v1407, %v696
    %v1409 = vadd.f32 %v1408, %v698
    %v1410 = vadd.f32 %v1409, %v700
    %v1411 = vadd.f32 %v1410, %v702
    %v1412 = vadd.f32 %v1411, %v704
    %v1413 = vadd.f32 %v1412, %v706
    %v1414 = vadd.f32 %v1413, %v708
    %v1415 = vadd.f32 %v1414, %v710
    %v1416 = vadd.f32 %v1415, %v712
    %v1417 = vadd.f32 %v1416, %v714
    %v1418 = vadd.f32 %v1417, %v716
    %v1419 = vadd.f32 %v1418, %v718
    %v1420 = vadd.f32 %v1419, %v720
    %v1421 = vadd.f32 %v1420, %v722
    %v1422 = vadd.f32 %v1421, %v724
    %v1423 = vadd.f32 %v1422, %v726
    %v1424 = vadd.f32 %v1423, %v728
    %v1425 = vadd.f32 %v1424, %v730
    %v1426 = vadd.f32 %v1425, %v732
    %v1427 = vadd.f32 %v1426, %v734
    %v1428 = vadd.f32 %v1427, %v736
    %v1429 = vadd.f32 %v1428, %v738
    %v1430 = vadd.f32 %v1429, %v740
    %v1431 = vadd.f32 %v1430, %v742
    %v1432 = vadd.f32 %v1431, %v744
    %v1433 = vadd.f32 %v1432, %v746
    %v1434 = vadd.f32 %v1433, %v748
    %v1435 = vadd.f32 %v1434, %v750
    %v1436 = vadd.f32 %v1435, %v752
    %v1437 = vadd.f32 %v1436, %v754
    %v1438 = vadd.f32 %v1437, %v756
    %v1439 = vadd.f32 %v1438, %v758
    %v1440 = vadd.f32 %v1439, %v760
    %v1441 = vadd.f32 %v1440, %v762
    %v1442 = vadd.f32 %v1441, %v764
    %v1443 = vadd.f32 %v1442, %v766
    %v1444 = vadd.f32 %v1443, %v768
    %v1445 = vadd.f32 %v1444, %v770
    %v1446 = vadd.f32 %v1445, %v772
    %v1447 = vadd.f32 %v1446, %v774
    %v1448 = vadd.f32 %v1447, %v776
    %v1449 = vadd.f32 %v1448, %v778
    %v1450 = vadd.f32 %v1449, %v780
    %v1451 = vadd.f32 %v1450, %v782
    %v1452 = vadd.f32 %v1451, %v784
    %v1453 = vadd.f32 %v1452, %v786
    %v1454 = vadd.f32 %v1453, %v788
    %v1455 = vadd.f32 %v1454, %v790
    %v1456 = vadd.f32 %v1455, %v792
    %v1457 = vadd.f32 %v1456, %v794
    %v1458 = vadd.f32 %v1457, %v796
    %v1459 = vadd.f32 %v1458, %v798
    %v1460 = vadd.f32 %v1459, %v800
    %v1461 = vadd.f32 %v1460, %v802
    %v1462 = vadd.f32 %v1461, %v804
    %v1463 = vadd.f32 %v1462, %v806
    %v1464 = vadd.f32 %v1463, %v808
    %v1465 = vadd.f32 %v1464, %v810
    %v1466 = vadd.f32 %v1465, %v812
    %v1467 = vadd.f32 %v1466, %v814
    %v1468 = vadd.f32 %v1467, %v816
    %v1469 = vadd.f32 %v1468, %v818
    %v1470 = vadd.f32 %v1469, %v820
    %v1471 = vadd.f32 %v1470, %v822
    %v1472 = vadd.f32 %v1471, %v824
    %v1473 = vadd.f32 %v1472, %v826
    %v1474 = vadd.f32 %v1473, %v828
    %v1475 = vadd.f32 %v1474, %v830
    %v1476 = vadd.f32 %v1475, %v832
    %v1477 = vadd.f32 %v1476, %v834
    %v1478 = vadd.f32 %v1477, %v836
    %v1479 = vadd.f32 %v1478, %v838
    %v1480 = vadd.f32 %v1479, %v840
    %v1481 = vadd.f32 %v1480, %v842
    %v1482 = vadd.f32 %v1481, %v844
    %v1483 = vadd.f32 %v1482, %v846
    %v1484 = vadd.f32 %v1483, %v848
    %v1485 = vadd.f32 %v1484, %v850
    %v1486 = vadd.f32 %v1485, %v852
    %v1487 = vadd.f32 %v1486, %v854
    %v1488 = vadd.f32 %v1487, %v856
    %v1489 = vadd.f32 %v1488, %v858
    %v1490 = vadd.f32 %v1489, %v860
    %v1491 = vadd.f32 %v1490, %v862
    %v1492 = vadd.f32 %v1491, %v864
    %v1493 = vadd.f32 %v1492, %v866
    %v1494 = vadd.f32 %v1493, %v868
    %v1495 = vadd.f32 %v1494, %v870
    %v1496 = vadd.f32 %v1495, %v872
    %v1497 = vadd.f32 %v1496, %v874
    %v1498 = vadd.f32 %v1497, %v876
    %v1499 = vadd.f32 %v1498, %v878
    %v1500 = vadd.f32 %v1499, %v880
    %v1501 = vadd.f32 %v1500, %v882
    %v1502 = vadd.f32 %v1501, %v884
    %v1503 = vadd.f32 %v1502, %v886
    %v1504 = vadd.f32 %v1503, %v888
    %v1505 = vadd.f32 %v1504, %v890
    %v1506 = vadd.f32 %v1505, %v892
    %v1507 = vadd.f32 %v1506, %v894
    %v1508 = vadd.f32 %v1507, %v896
    %v1509 = vadd.f32 %v1508, %v898
    %v1510 = vadd.f32 %v1509, %v900
    %v1511 = vadd.f32 %v1510, %v902
    %v1512 = vadd.f32 %v1511, %v904
    %v1513 = vadd.f32 %v1512, %v906
    %v1514 = vadd.f32 %v1513, %v908
    %v1515 = vadd.f32 %v1514, %v910
    %v1516 = vadd.f32 %v1515, %v912
    %v1517 = vadd.f32 %v1516, %v914
    %v1518 = vadd.f32 %v1517, %v916
    %v1519 = vadd.f32 %v1518, %v918
    %v1520 = vadd.f32 %v1519, %v920
    %v1521 = vadd.f32 %v1520, %v922
    %v1522 = vadd.f32 %v1521, %v924
    %v1523 = vadd.f32 %v1522, %v926
    %v1524 = vadd.f32 %v1523, %v928
    %v1525 = vadd.f32 %v1524, %v930
    %v1526 = vadd.f32 %v1525, %v932
    %v1527 = vadd.f32 %v1526, %v934
    %v1528 = vadd.f32 %v1527, %v936
    %v1529 = vadd.f32 %v1528, %v938
    %v1530 = vadd.f32 %v1529, %v940
    %v1531 = vadd.f32 %v1530, %v942
    %v1532 = vadd.f32 %v1531, %v944
    %v1533 = vadd.f32 %v1532, %v946
    %v1534 = vadd.f32 %v1533, %v948
    %v1535 = vadd.f32 %v1534, %v950
    %v1536 = vadd.f32 %v1535, %v952
    %v1537 = vadd.f32 %v1536, %v954
    %v1538 = vadd.f32 %v1537, %v956
    %v1539 = vadd.f32 %v1538, %v958
    %v1540 = vadd.f32 %v1539, %v960
    %v1541 = vadd.f32 %v1540, %v962
    %v1542 = vadd.f32 %v1541, %v964
    %v1543 = vadd.f32 %v1542, %v966
    %v1544 = vadd.f32 %v1543, %v968
    %v1545 = vadd.f32 %v1544, %v970
    %v1546 = vadd.f32 %v1545, %v972
    %v1547 = vadd.f32 %v1546, %v974
    %v1548 = vadd.f32 %v1547, %v976
    %v1549 = vadd.f32 %v1548, %v978
    %v1550 = vadd.f32 %v1549, %v980
    %v1551 = vadd.f32 %v1550, %v982
    %v1552 = vadd.f32 %v1551, %v984
    %v1553 = vadd.f32 %v1552, %v986
    %v1554 = vadd.f32 %v1553, %v988
    %v1555 = vadd.f32 %v1554, %v990
    %v1556 = vadd.f32 %v1555, %v992
    %v1557 = vadd.f32 %v1556, %v994
    %v1558 = vadd.f32 %v1557, %v996
    %v1559 = vadd.f32 %v1558, %v998
    %v1560 = vadd.f32 %v1559, %v1000
    %v1561 = vadd.f32 %v1560, %v1002
    %v1562 = vadd.f32 %v1561, %v1004
    %v1563 = vadd.f32 %v1562, %v1006
    %v1564 = vadd.f32 %v1563, %v1008
    %v1565 = vadd.f32 %v1564, %v1010
    %v1566 = vadd.f32 %v1565, %v1012
    %v1567 = vadd.f32 %v1566, %v1014
    %v1568 = vadd.f32 %v1567, %v1016
    %v1569 = vadd.f32 %v1568, %v1018
    %v1570 = vadd.f32 %v1569, %v1020
    %v1571 = vadd.f32 %v1570, %v1022
    %v1572 = vadd.f32 %v1571, %v1024
    %v1573 = vadd.f32 %v1572, %v1026
    %v1574 = vadd.f32 %v1573, %v1028
    %v1575 = vadd.f32 %v1574, %v1030
    %v1576 = vadd.f32 %v1575, %v1032
    %v1577 = vadd.f32 %v1576, %v1034
    %v1578 = vadd.f32 %v1577, %v1036
    %v1579 = vadd.f32 %v1578, %v1038
    %v1580 = vadd.f32 %v1579, %v1040
    %v1581 = vadd.f32 %v1580, %v1042
    %v1582 = vadd.f32 %v1581, %v1044
    %v1583 = vadd.f32 %v1582, %v1046
    %v1584 = vadd.f32 %v1583, %v1048
    %v1585 = vadd.f32 %v1584, %v1050
    %v1586 = vadd.f32 %v1585, %v1052
    %v1587 = vadd.f32 %v1586, %v1054
    %v1588 = vadd.f32 %v1587, %v1056
    %v1589 = vadd.f32 %v1588, %v1058
    %v1590 = vadd.f32 %v1589, %v1060
    %v1591 = vadd.f32 %v1590, %v1062
    %v1592 = vadd.f32 %v1591, %v1064
    %v1593 = vadd.f32 %v1592, %v1066
    %v1594 = vadd.f32 %v1593, %v1068
    %v1595 = vadd.f32 %v1594, %v1070
    %v1596 = vadd.f32 %v1595, %v1072
    %v1597 = vadd.f32 %v1596, %v1074
    %v1598 = vadd.f32 %v1597, %v1076
    %v1599 = vadd.f32 %v1598, %v1078
    %v1600 = vadd.f32 %v1599, %v1080
    %v1601 = vadd.f32 %v1600, %v1082
    %v1602 = vadd.f32 %v1601, %v1084
    %v1603 = vadd.f32 %v1602, %v1086
    %v1604 = vadd.f32 %v1603, %v1088
    %v1605 = vadd.f32 %v1604, %v1090
    %v1606 = vadd.f32 %v1605, %v1092
    %v1607 = vadd.f32 %v1606, %v1094
    %v1608 = vadd.f32 %v1607, %v1096
    %v1609 = vrot.slane %v1608, 4
    %v1610 = vadd.f32 %v1608, %v1609
    %v1611 = vrot.slane %v1610, 2
    %v1612 = vadd.f32 %v1610, %v1611
    %v1613 = vrot.slane %v1612, 1
    %v1614 = vadd.f32 %v1612, %v1613
    %v1615 = vadd.f32 %v75, %v77
    %v1616 = vadd.f32 %v1615, %v79
    %v1617 = vadd.f32 %v1616, %v81
    %v1618 = vadd.f32 %v1617, %v83
    %v1619 = vadd.f32 %v1618, %v85
    %v1620 = vadd.f32 %v1619, %v87
    %v1621 = vadd.f32 %v1620, %v89
    %v1622 = vadd.f32 %v1621, %v91
    %v1623 = vadd.f32 %v1622, %v93
    %v1624 = vadd.f32 %v1623, %v95
    %v1625 = vadd.f32 %v1624, %v97
    %v1626 = vadd.f32 %v1625, %v99
    %v1627 = vadd.f32 %v1626, %v101
    %v1628 = vadd.f32 %v1627, %v103
    %v1629 = vadd.f32 %v1628, %v105
    %v1630 = vadd.f32 %v1629, %v107
    %v1631 = vadd.f32 %v1630, %v109
    %v1632 = vadd.f32 %v1631, %v111
    %v1633 = vadd.f32 %v1632, %v113
    %v1634 = vadd.f32 %v1633, %v115
    %v1635 = vadd.f32 %v1634, %v117
    %v1636 = vadd.f32 %v1635, %v119
    %v1637 = vadd.f32 %v1636, %v121
    %v1638 = vadd.f32 %v1637, %v123
    %v1639 = vadd.f32 %v1638, %v125
    %v1640 = vadd.f32 %v1639, %v127
    %v1641 = vadd.f32 %v1640, %v129
    %v1642 = vadd.f32 %v1641, %v131
    %v1643 = vadd.f32 %v1642, %v133
    %v1644 = vadd.f32 %v1643, %v135
    %v1645 = vadd.f32 %v1644, %v137
    %v1646 = vadd.f32 %v1645, %v139
    %v1647 = vadd.f32 %v1646, %v141
    %v1648 = vadd.f32 %v1647, %v143
    %v1649 = vadd.f32 %v1648, %v145
    %v1650 = vadd.f32 %v1649, %v147
    %v1651 = vadd.f32 %v1650, %v149
    %v1652 = vadd.f32 %v1651, %v151
    %v1653 = vadd.f32 %v1652, %v153
    %v1654 = vadd.f32 %v1653, %v155
    %v1655 = vadd.f32 %v1654, %v157
    %v1656 = vadd.f32 %v1655, %v159
    %v1657 = vadd.f32 %v1656, %v161
    %v1658 = vadd.f32 %v1657, %v163
    %v1659 = vadd.f32 %v1658, %v165
    %v1660 = vadd.f32 %v1659, %v167
    %v1661 = vadd.f32 %v1660, %v169
    %v1662 = vadd.f32 %v1661, %v171
    %v1663 = vadd.f32 %v1662, %v173
    %v1664 = vadd.f32 %v1663, %v175
    %v1665 = vadd.f32 %v1664, %v177
    %v1666 = vadd.f32 %v1665, %v179
    %v1667 = vadd.f32 %v1666, %v181
    %v1668 = vadd.f32 %v1667, %v183
    %v1669 = vadd.f32 %v1668, %v185
    %v1670 = vadd.f32 %v1669, %v187
    %v1671 = vadd.f32 %v1670, %v189
    %v1672 = vadd.f32 %v1671, %v191
    %v1673 = vadd.f32 %v1672, %v193
    %v1674 = vadd.f32 %v1673, %v195
    %v1675 = vadd.f32 %v1674, %v197
    %v1676 = vadd.f32 %v1675, %v199
    %v1677 = vadd.f32 %v1676, %v201
    %v1678 = vadd.f32 %v1677, %v203
    %v1679 = vadd.f32 %v1678, %v205
    %v1680 = vadd.f32 %v1679, %v207
    %v1681 = vadd.f32 %v1680, %v209
    %v1682 = vadd.f32 %v1681, %v211
    %v1683 = vadd.f32 %v1682, %v213
    %v1684 = vadd.f32 %v1683, %v215
    %v1685 = vadd.f32 %v1684, %v217
    %v1686 = vadd.f32 %v1685, %v219
    %v1687 = vadd.f32 %v1686, %v221
    %v1688 = vadd.f32 %v1687, %v223
    %v1689 = vadd.f32 %v1688, %v225
    %v1690 = vadd.f32 %v1689, %v227
    %v1691 = vadd.f32 %v1690, %v229
    %v1692 = vadd.f32 %v1691, %v231
    %v1693 = vadd.f32 %v1692, %v233
    %v1694 = vadd.f32 %v1693, %v235
    %v1695 = vadd.f32 %v1694, %v237
    %v1696 = vadd.f32 %v1695, %v239
    %v1697 = vadd.f32 %v1696, %v241
    %v1698 = vadd.f32 %v1697, %v243
    %v1699 = vadd.f32 %v1698, %v245
    %v1700 = vadd.f32 %v1699, %v247
    %v1701 = vadd.f32 %v1700, %v249
    %v1702 = vadd.f32 %v1701, %v251
    %v1703 = vadd.f32 %v1702, %v253
    %v1704 = vadd.f32 %v1703, %v255
    %v1705 = vadd.f32 %v1704, %v257
    %v1706 = vadd.f32 %v1705, %v259
    %v1707 = vadd.f32 %v1706, %v261
    %v1708 = vadd.f32 %v1707, %v263
    %v1709 = vadd.f32 %v1708, %v265
    %v1710 = vadd.f32 %v1709, %v267
    %v1711 = vadd.f32 %v1710, %v269
    %v1712 = vadd.f32 %v1711, %v271
    %v1713 = vadd.f32 %v1712, %v273
    %v1714 = vadd.f32 %v1713, %v275
    %v1715 = vadd.f32 %v1714, %v277
    %v1716 = vadd.f32 %v1715, %v279
    %v1717 = vadd.f32 %v1716, %v281
    %v1718 = vadd.f32 %v1717, %v283
    %v1719 = vadd.f32 %v1718, %v285
    %v1720 = vadd.f32 %v1719, %v287
    %v1721 = vadd.f32 %v1720, %v289
    %v1722 = vadd.f32 %v1721, %v291
    %v1723 = vadd.f32 %v1722, %v293
    %v1724 = vadd.f32 %v1723, %v295
    %v1725 = vadd.f32 %v1724, %v297
    %v1726 = vadd.f32 %v1725, %v299
    %v1727 = vadd.f32 %v1726, %v301
    %v1728 = vadd.f32 %v1727, %v303
    %v1729 = vadd.f32 %v1728, %v305
    %v1730 = vadd.f32 %v1729, %v307
    %v1731 = vadd.f32 %v1730, %v309
    %v1732 = vadd.f32 %v1731, %v311
    %v1733 = vadd.f32 %v1732, %v313
    %v1734 = vadd.f32 %v1733, %v315
    %v1735 = vadd.f32 %v1734, %v317
    %v1736 = vadd.f32 %v1735, %v319
    %v1737 = vadd.f32 %v1736, %v321
    %v1738 = vadd.f32 %v1737, %v323
    %v1739 = vadd.f32 %v1738, %v325
    %v1740 = vadd.f32 %v1739, %v327
    %v1741 = vadd.f32 %v1740, %v329
    %v1742 = vadd.f32 %v1741, %v331
    %v1743 = vadd.f32 %v1742, %v333
    %v1744 = vadd.f32 %v1743, %v335
    %v1745 = vadd.f32 %v1744, %v337
    %v1746 = vadd.f32 %v1745, %v339
    %v1747 = vadd.f32 %v1746, %v341
    %v1748 = vadd.f32 %v1747, %v343
    %v1749 = vadd.f32 %v1748, %v345
    %v1750 = vadd.f32 %v1749, %v347
    %v1751 = vadd.f32 %v1750, %v349
    %v1752 = vadd.f32 %v1751, %v351
    %v1753 = vadd.f32 %v1752, %v353
    %v1754 = vadd.f32 %v1753, %v355
    %v1755 = vadd.f32 %v1754, %v357
    %v1756 = vadd.f32 %v1755, %v359
    %v1757 = vadd.f32 %v1756, %v361
    %v1758 = vadd.f32 %v1757, %v363
    %v1759 = vadd.f32 %v1758, %v365
    %v1760 = vadd.f32 %v1759, %v367
    %v1761 = vadd.f32 %v1760, %v369
    %v1762 = vadd.f32 %v1761, %v371
    %v1763 = vadd.f32 %v1762, %v373
    %v1764 = vadd.f32 %v1763, %v375
    %v1765 = vadd.f32 %v1764, %v377
    %v1766 = vadd.f32 %v1765, %v379
    %v1767 = vadd.f32 %v1766, %v381
    %v1768 = vadd.f32 %v1767, %v383
    %v1769 = vadd.f32 %v1768, %v385
    %v1770 = vadd.f32 %v1769, %v387
    %v1771 = vadd.f32 %v1770, %v389
    %v1772 = vadd.f32 %v1771, %v391
    %v1773 = vadd.f32 %v1772, %v393
    %v1774 = vadd.f32 %v1773, %v395
    %v1775 = vadd.f32 %v1774, %v397
    %v1776 = vadd.f32 %v1775, %v399
    %v1777 = vadd.f32 %v1776, %v401
    %v1778 = vadd.f32 %v1777, %v403
    %v1779 = vadd.f32 %v1778, %v405
    %v1780 = vadd.f32 %v1779, %v407
    %v1781 = vadd.f32 %v1780, %v409
    %v1782 = vadd.f32 %v1781, %v411
    %v1783 = vadd.f32 %v1782, %v413
    %v1784 = vadd.f32 %v1783, %v415
    %v1785 = vadd.f32 %v1784, %v417
    %v1786 = vadd.f32 %v1785, %v419
    %v1787 = vadd.f32 %v1786, %v421
    %v1788 = vadd.f32 %v1787, %v423
    %v1789 = vadd.f32 %v1788, %v425
    %v1790 = vadd.f32 %v1789, %v427
    %v1791 = vadd.f32 %v1790, %v429
    %v1792 = vadd.f32 %v1791, %v431
    %v1793 = vadd.f32 %v1792, %v433
    %v1794 = vadd.f32 %v1793, %v435
    %v1795 = vadd.f32 %v1794, %v437
    %v1796 = vadd.f32 %v1795, %v439
    %v1797 = vadd.f32 %v1796, %v441
    %v1798 = vadd.f32 %v1797, %v443
    %v1799 = vadd.f32 %v1798, %v445
    %v1800 = vadd.f32 %v1799, %v447
    %v1801 = vadd.f32 %v1800, %v449
    %v1802 = vadd.f32 %v1801, %v451
    %v1803 = vadd.f32 %v1802, %v453
    %v1804 = vadd.f32 %v1803, %v455
    %v1805 = vadd.f32 %v1804, %v457
    %v1806 = vadd.f32 %v1805, %v459
    %v1807 = vadd.f32 %v1806, %v461
    %v1808 = vadd.f32 %v1807, %v463
    %v1809 = vadd.f32 %v1808, %v465
    %v1810 = vadd.f32 %v1809, %v467
    %v1811 = vadd.f32 %v1810, %v469
    %v1812 = vadd.f32 %v1811, %v471
    %v1813 = vadd.f32 %v1812, %v473
    %v1814 = vadd.f32 %v1813, %v475
    %v1815 = vadd.f32 %v1814, %v477
    %v1816 = vadd.f32 %v1815, %v479
    %v1817 = vadd.f32 %v1816, %v481
    %v1818 = vadd.f32 %v1817, %v483
    %v1819 = vadd.f32 %v1818, %v485
    %v1820 = vadd.f32 %v1819, %v487
    %v1821 = vadd.f32 %v1820, %v489
    %v1822 = vadd.f32 %v1821, %v491
    %v1823 = vadd.f32 %v1822, %v493
    %v1824 = vadd.f32 %v1823, %v495
    %v1825 = vadd.f32 %v1824, %v497
    %v1826 = vadd.f32 %v1825, %v499
    %v1827 = vadd.f32 %v1826, %v501
    %v1828 = vadd.f32 %v1827, %v503
    %v1829 = vadd.f32 %v1828, %v505
    %v1830 = vadd.f32 %v1829, %v507
    %v1831 = vadd.f32 %v1830, %v509
    %v1832 = vadd.f32 %v1831, %v511
    %v1833 = vadd.f32 %v1832, %v513
    %v1834 = vadd.f32 %v1833, %v515
    %v1835 = vadd.f32 %v1834, %v517
    %v1836 = vadd.f32 %v1835, %v519
    %v1837 = vadd.f32 %v1836, %v521
    %v1838 = vadd.f32 %v1837, %v523
    %v1839 = vadd.f32 %v1838, %v525
    %v1840 = vadd.f32 %v1839, %v527
    %v1841 = vadd.f32 %v1840, %v529
    %v1842 = vadd.f32 %v1841, %v531
    %v1843 = vadd.f32 %v1842, %v533
    %v1844 = vadd.f32 %v1843, %v535
    %v1845 = vadd.f32 %v1844, %v537
    %v1846 = vadd.f32 %v1845, %v539
    %v1847 = vadd.f32 %v1846, %v541
    %v1848 = vadd.f32 %v1847, %v543
    %v1849 = vadd.f32 %v1848, %v545
    %v1850 = vadd.f32 %v1849, %v547
    %v1851 = vadd.f32 %v1850, %v549
    %v1852 = vadd.f32 %v1851, %v551
    %v1853 = vadd.f32 %v1852, %v553
    %v1854 = vadd.f32 %v1853, %v555
    %v1855 = vadd.f32 %v1854, %v557
    %v1856 = vadd.f32 %v1855, %v559
    %v1857 = vadd.f32 %v1856, %v561
    %v1858 = vadd.f32 %v1857, %v563
    %v1859 = vadd.f32 %v1858, %v565
    %v1860 = vadd.f32 %v1859, %v567
    %v1861 = vadd.f32 %v1860, %v569
    %v1862 = vadd.f32 %v1861, %v571
    %v1863 = vadd.f32 %v1862, %v573
    %v1864 = vadd.f32 %v1863, %v575
    %v1865 = vadd.f32 %v1864, %v577
    %v1866 = vadd.f32 %v1865, %v579
    %v1867 = vadd.f32 %v1866, %v581
    %v1868 = vadd.f32 %v1867, %v583
    %v1869 = vadd.f32 %v1868, %v585
    %v1870 = vadd.f32 %v1869, %v587
    %v1871 = vadd.f32 %v1870, %v589
    %v1872 = vadd.f32 %v1871, %v591
    %v1873 = vadd.f32 %v1872, %v593
    %v1874 = vadd.f32 %v1873, %v595
    %v1875 = vadd.f32 %v1874, %v597
    %v1876 = vadd.f32 %v1875, %v599
    %v1877 = vadd.f32 %v1876, %v601
    %v1878 = vadd.f32 %v1877, %v603
    %v1879 = vadd.f32 %v1878, %v605
    %v1880 = vadd.f32 %v1879, %v607
    %v1881 = vadd.f32 %v1880, %v609
    %v1882 = vadd.f32 %v1881, %v611
    %v1883 = vadd.f32 %v1882, %v613
    %v1884 = vadd.f32 %v1883, %v615
    %v1885 = vadd.f32 %v1884, %v617
    %v1886 = vadd.f32 %v1885, %v619
    %v1887 = vadd.f32 %v1886, %v621
    %v1888 = vadd.f32 %v1887, %v623
    %v1889 = vadd.f32 %v1888, %v625
    %v1890 = vadd.f32 %v1889, %v627
    %v1891 = vadd.f32 %v1890, %v629
    %v1892 = vadd.f32 %v1891, %v631
    %v1893 = vadd.f32 %v1892, %v633
    %v1894 = vadd.f32 %v1893, %v635
    %v1895 = vadd.f32 %v1894, %v637
    %v1896 = vadd.f32 %v1895, %v639
    %v1897 = vadd.f32 %v1896, %v641
    %v1898 = vadd.f32 %v1897, %v643
    %v1899 = vadd.f32 %v1898, %v645
    %v1900 = vadd.f32 %v1899, %v647
    %v1901 = vadd.f32 %v1900, %v649
    %v1902 = vadd.f32 %v1901, %v651
    %v1903 = vadd.f32 %v1902, %v653
    %v1904 = vadd.f32 %v1903, %v655
    %v1905 = vadd.f32 %v1904, %v657
    %v1906 = vadd.f32 %v1905, %v659
    %v1907 = vadd.f32 %v1906, %v661
    %v1908 = vadd.f32 %v1907, %v663
    %v1909 = vadd.f32 %v1908, %v665
    %v1910 = vadd.f32 %v1909, %v667
    %v1911 = vadd.f32 %v1910, %v669
    %v1912 = vadd.f32 %v1911, %v671
    %v1913 = vadd.f32 %v1912, %v673
    %v1914 = vadd.f32 %v1913, %v675
    %v1915 = vadd.f32 %v1914, %v677
    %v1916 = vadd.f32 %v1915, %v679
    %v1917 = vadd.f32 %v1916, %v681
    %v1918 = vadd.f32 %v1917, %v683
    %v1919 = vadd.f32 %v1918, %v685
    %v1920 = vadd.f32 %v1919, %v687
    %v1921 = vadd.f32 %v1920, %v689
    %v1922 = vadd.f32 %v1921, %v691
    %v1923 = vadd.f32 %v1922, %v693
    %v1924 = vadd.f32 %v1923, %v695
    %v1925 = vadd.f32 %v1924, %v697
    %v1926 = vadd.f32 %v1925, %v699
    %v1927 = vadd.f32 %v1926, %v701
    %v1928 = vadd.f32 %v1927, %v703
    %v1929 = vadd.f32 %v1928, %v705
    %v1930 = vadd.f32 %v1929, %v707
    %v1931 = vadd.f32 %v1930, %v709
    %v1932 = vadd.f32 %v1931, %v711
    %v1933 = vadd.f32 %v1932, %v713
    %v1934 = vadd.f32 %v1933, %v715
    %v1935 = vadd.f32 %v1934, %v717
    %v1936 = vadd.f32 %v1935, %v719
    %v1937 = vadd.f32 %v1936, %v721
    %v1938 = vadd.f32 %v1937, %v723
    %v1939 = vadd.f32 %v1938, %v725
    %v1940 = vadd.f32 %v1939, %v727
    %v1941 = vadd.f32 %v1940, %v729
    %v1942 = vadd.f32 %v1941, %v731
    %v1943 = vadd.f32 %v1942, %v733
    %v1944 = vadd.f32 %v1943, %v735
    %v1945 = vadd.f32 %v1944, %v737
    %v1946 = vadd.f32 %v1945, %v739
    %v1947 = vadd.f32 %v1946, %v741
    %v1948 = vadd.f32 %v1947, %v743
    %v1949 = vadd.f32 %v1948, %v745
    %v1950 = vadd.f32 %v1949, %v747
    %v1951 = vadd.f32 %v1950, %v749
    %v1952 = vadd.f32 %v1951, %v751
    %v1953 = vadd.f32 %v1952, %v753
    %v1954 = vadd.f32 %v1953, %v755
    %v1955 = vadd.f32 %v1954, %v757
    %v1956 = vadd.f32 %v1955, %v759
    %v1957 = vadd.f32 %v1956, %v761
    %v1958 = vadd.f32 %v1957, %v763
    %v1959 = vadd.f32 %v1958, %v765
    %v1960 = vadd.f32 %v1959, %v767
    %v1961 = vadd.f32 %v1960, %v769
    %v1962 = vadd.f32 %v1961, %v771
    %v1963 = vadd.f32 %v1962, %v773
    %v1964 = vadd.f32 %v1963, %v775
    %v1965 = vadd.f32 %v1964, %v777
    %v1966 = vadd.f32 %v1965, %v779
    %v1967 = vadd.f32 %v1966, %v781
    %v1968 = vadd.f32 %v1967, %v783
    %v1969 = vadd.f32 %v1968, %v785
    %v1970 = vadd.f32 %v1969, %v787
    %v1971 = vadd.f32 %v1970, %v789
    %v1972 = vadd.f32 %v1971, %v791
    %v1973 = vadd.f32 %v1972, %v793
    %v1974 = vadd.f32 %v1973, %v795
    %v1975 = vadd.f32 %v1974, %v797
    %v1976 = vadd.f32 %v1975, %v799
    %v1977 = vadd.f32 %v1976, %v801
    %v1978 = vadd.f32 %v1977, %v803
    %v1979 = vadd.f32 %v1978, %v805
    %v1980 = vadd.f32 %v1979, %v807
    %v1981 = vadd.f32 %v1980, %v809
    %v1982 = vadd.f32 %v1981, %v811
    %v1983 = vadd.f32 %v1982, %v813
    %v1984 = vadd.f32 %v1983, %v815
    %v1985 = vadd.f32 %v1984, %v817
    %v1986 = vadd.f32 %v1985, %v819
    %v1987 = vadd.f32 %v1986, %v821
    %v1988 = vadd.f32 %v1987, %v823
    %v1989 = vadd.f32 %v1988, %v825
    %v1990 = vadd.f32 %v1989, %v827
    %v1991 = vadd.f32 %v1990, %v829
    %v1992 = vadd.f32 %v1991, %v831
    %v1993 = vadd.f32 %v1992, %v833
    %v1994 = vadd.f32 %v1993, %v835
    %v1995 = vadd.f32 %v1994, %v837
    %v1996 = vadd.f32 %v1995, %v839
    %v1997 = vadd.f32 %v1996, %v841
    %v1998 = vadd.f32 %v1997, %v843
    %v1999 = vadd.f32 %v1998, %v845
    %v2000 = vadd.f32 %v1999, %v847
    %v2001 = vadd.f32 %v2000, %v849
    %v2002 = vadd.f32 %v2001, %v851
    %v2003 = vadd.f32 %v2002, %v853
    %v2004 = vadd.f32 %v2003, %v855
    %v2005 = vadd.f32 %v2004, %v857
    %v2006 = vadd.f32 %v2005, %v859
    %v2007 = vadd.f32 %v2006, %v861
    %v2008 = vadd.f32 %v2007, %v863
    %v2009 = vadd.f32 %v2008, %v865
    %v2010 = vadd.f32 %v2009, %v867
    %v2011 = vadd.f32 %v2010, %v869
    %v2012 = vadd.f32 %v2011, %v871
    %v2013 = vadd.f32 %v2012, %v873
    %v2014 = vadd.f32 %v2013, %v875
    %v2015 = vadd.f32 %v2014, %v877
    %v2016 = vadd.f32 %v2015, %v879
    %v2017 = vadd.f32 %v2016, %v881
    %v2018 = vadd.f32 %v2017, %v883
    %v2019 = vadd.f32 %v2018, %v885
    %v2020 = vadd.f32 %v2019, %v887
    %v2021 = vadd.f32 %v2020, %v889
    %v2022 = vadd.f32 %v2021, %v891
    %v2023 = vadd.f32 %v2022, %v893
    %v2024 = vadd.f32 %v2023, %v895
    %v2025 = vadd.f32 %v2024, %v897
    %v2026 = vadd.f32 %v2025, %v899
    %v2027 = vadd.f32 %v2026, %v901
    %v2028 = vadd.f32 %v2027, %v903
    %v2029 = vadd.f32 %v2028, %v905
    %v2030 = vadd.f32 %v2029, %v907
    %v2031 = vadd.f32 %v2030, %v909
    %v2032 = vadd.f32 %v2031, %v911
    %v2033 = vadd.f32 %v2032, %v913
    %v2034 = vadd.f32 %v2033, %v915
    %v2035 = vadd.f32 %v2034, %v917
    %v2036 = vadd.f32 %v2035, %v919
    %v2037 = vadd.f32 %v2036, %v921
    %v2038 = vadd.f32 %v2037, %v923
    %v2039 = vadd.f32 %v2038, %v925
    %v2040 = vadd.f32 %v2039, %v927
    %v2041 = vadd.f32 %v2040, %v929
    %v2042 = vadd.f32 %v2041, %v931
    %v2043 = vadd.f32 %v2042, %v933
    %v2044 = vadd.f32 %v2043, %v935
    %v2045 = vadd.f32 %v2044, %v937
    %v2046 = vadd.f32 %v2045, %v939
    %v2047 = vadd.f32 %v2046, %v941
    %v2048 = vadd.f32 %v2047, %v943
    %v2049 = vadd.f32 %v2048, %v945
    %v2050 = vadd.f32 %v2049, %v947
    %v2051 = vadd.f32 %v2050, %v949
    %v2052 = vadd.f32 %v2051, %v951
    %v2053 = vadd.f32 %v2052, %v953
    %v2054 = vadd.f32 %v2053, %v955
    %v2055 = vadd.f32 %v2054, %v957
    %v2056 = vadd.f32 %v2055, %v959
    %v2057 = vadd.f32 %v2056, %v961
    %v2058 = vadd.f32 %v2057, %v963
    %v2059 = vadd.f32 %v2058, %v965
    %v2060 = vadd.f32 %v2059, %v967
    %v2061 = vadd.f32 %v2060, %v969
    %v2062 = vadd.f32 %v2061, %v971
    %v2063 = vadd.f32 %v2062, %v973
    %v2064 = vadd.f32 %v2063, %v975
    %v2065 = vadd.f32 %v2064, %v977
    %v2066 = vadd.f32 %v2065, %v979
    %v2067 = vadd.f32 %v2066, %v981
    %v2068 = vadd.f32 %v2067, %v983
    %v2069 = vadd.f32 %v2068, %v985
    %v2070 = vadd.f32 %v2069, %v987
    %v2071 = vadd.f32 %v2070, %v989
    %v2072 = vadd.f32 %v2071, %v991
    %v2073 = vadd.f32 %v2072, %v993
    %v2074 = vadd.f32 %v2073, %v995
    %v2075 = vadd.f32 %v2074, %v997
    %v2076 = vadd.f32 %v2075, %v999
    %v2077 = vadd.f32 %v2076, %v1001
    %v2078 = vadd.f32 %v2077, %v1003
    %v2079 = vadd.f32 %v2078, %v1005
    %v2080 = vadd.f32 %v2079, %v1007
    %v2081 = vadd.f32 %v2080, %v1009
    %v2082 = vadd.f32 %v2081, %v1011
    %v2083 = vadd.f32 %v2082, %v1013
    %v2084 = vadd.f32 %v2083, %v1015
    %v2085 = vadd.f32 %v2084, %v1017
    %v2086 = vadd.f32 %v2085, %v1019
    %v2087 = vadd.f32 %v2086, %v1021
    %v2088 = vadd.f32 %v2087, %v1023
    %v2089 = vadd.f32 %v2088, %v1025
    %v2090 = vadd.f32 %v2089, %v1027
    %v2091 = vadd.f32 %v2090, %v1029
    %v2092 = vadd.f32 %v2091, %v1031
    %v2093 = vadd.f32 %v2092, %v1033
    %v2094 = vadd.f32 %v2093, %v1035
    %v2095 = vadd.f32 %v2094, %v1037
    %v2096 = vadd.f32 %v2095, %v1039
    %v2097 = vadd.f32 %v2096, %v1041
    %v2098 = vadd.f32 %v2097, %v1043
    %v2099 = vadd.f32 %v2098, %v1045
    %v2100 = vadd.f32 %v2099, %v1047
    %v2101 = vadd.f32 %v2100, %v1049
    %v2102 = vadd.f32 %v2101, %v1051
    %v2103 = vadd.f32 %v2102, %v1053
    %v2104 = vadd.f32 %v2103, %v1055
    %v2105 = vadd.f32 %v2104, %v1057
    %v2106 = vadd.f32 %v2105, %v1059
    %v2107 = vadd.f32 %v2106, %v1061
    %v2108 = vadd.f32 %v2107, %v1063
    %v2109 = vadd.f32 %v2108, %v1065
    %v2110 = vadd.f32 %v2109, %v1067
    %v2111 = vadd.f32 %v2110, %v1069
    %v2112 = vadd.f32 %v2111, %v1071
    %v2113 = vadd.f32 %v2112, %v1073
    %v2114 = vadd.f32 %v2113, %v1075
    %v2115 = vadd.f32 %v2114, %v1077
    %v2116 = vadd.f32 %v2115, %v1079
    %v2117 = vadd.f32 %v2116, %v1081
    %v2118 = vadd.f32 %v2117, %v1083
    %v2119 = vadd.f32 %v2118, %v1085
    %v2120 = vadd.f32 %v2119, %v1087
    %v2121 = vadd.f32 %v2120, %v1089
    %v2122 = vadd.f32 %v2121, %v1091
    %v2123 = vadd.f32 %v2122, %v1093
    %v2124 = vadd.f32 %v2123, %v1095
    %v2125 = vadd.f32 %v2124, %v1097
    %v2126 = vrot.slane %v2125, 4
    %v2127 = vadd.f32 %v2125, %v2126
    %v2128 = vrot.slane %v2127, 2
    %v2129 = vadd.f32 %v2127, %v2128
    %v2130 = vrot.slane %v2129, 1
    %v2131 = vadd.f32 %v2129, %v2130
    %v2132 = vmul.f32 %v1614, 0.00024414063
    %v2133 = vmul.f32 %v2131, 0.00024414063
    %v2134 = vld [vmem:[#allocation5] sm:$0xff]
    %v2135 = vld [vmem:[#allocation5 + $0x8] sm:$0xff]
    %v2136 = vld [vmem:[#allocation5 + $0x10] sm:$0xff]
    %v2137 = vld [vmem:[#allocation5 + $0x18] sm:$0xff]
    %v2138 = vmul.f32 %v2134, %v2132
    %v2139 = vmul.f32 %v2135, %v2133
    %v2140 = vmul.f32 %v2136, %v2132
    %v2141 = vmul.f32 %v2137, %v2133
    %v2142 = vadd.f32 %v2138, %v2139
    %2143 = vadd.xlane.f32.xlu0 %v2142
    %v2144 = vpop.xlane.xlu0 %2143
    %v2145 = vadd.f32 %v2140, %v2141
    %2146 = vadd.xlane.f32.xlu0 %v2145
    %v2147 = vpop.xlane.xlu0 %2146
    %v2148 = vld [vmem:[%s2] sm:$0xff]
    %v2149 = vld [vmem:[%s2 + $0x8] sm:$0xff]
    %v2150 = vadd.f32 %v2144, %v2148
    %v2151 = vadd.f32 %v2147, %v2149
    %v2152 = vmax.f32 %v2150, 0.0
    %v2153 = vmax.f32 %v2151, 0.0
    %v2154 = vld [vmem:[#allocation7] sm:$0xff]
    %v2155 = vld [vmem:[#allocation7 + $0x8] sm:$0xff]
    %v2156 = vld [vmem:[#allocation7 + $0x10] sm:$0xff]
    %v2157 = vld [vmem:[#allocation7 + $0x18] sm:$0xff]
    %2159 = vset.pattern.permute.xlu0 0
    %2160 = vperm.xlu0 %2159, %v2152
    %v2161 = vpop.permute.xlu0 %2160
    %2164 = vset.pattern.permute.xlu0 0
    %2165 = vperm.xlu0 %2164, %v2153
    %v2166 = vpop.permute.xlu0 %2165
    %v2168 = vmul.f32 %v2154, %v2161
    %v2169 = vmul.f32 %v2155, %v2161
    %v2170 = vmul.f32 %v2156, %v2166
    %v2171 = vmul.f32 %v2157, %v2166
    %v2172 = vadd.f32 %v2168, %v2170
    %v2173 = vrot.slane %v2172, 4
    %v2174 = vadd.f32 %v2172, %v2173
    %v2175 = vrot.slane %v2174, 2
    %v2176 = vadd.f32 %v2174, %v2175
    %v2177 = vrot.slane %v2176, 1
    %v2178 = vadd.f32 %v2176, %v2177
    %v2179 = vadd.f32 %v2169, %v2171
    %v2180 = vrot.slane %v2179, 4
    %v2181 = vadd.f32 %v2179, %v2180
    %v2182 = vrot.slane %v2181, 2
    %v2183 = vadd.f32 %v2181, %v2182
    %v2184 = vrot.slane %v2183, 1
    %v2185 = vadd.f32 %v2183, %v2184
    %v2186 = vld [vmem:[#allocation8] sm:$0x3]
    %v2188 = vlaneseq
    %v2189 = vshrl.u32 %v2188, 7
    %v2190 = vsub.s32 0, %v2189
    %v2191 = vrot.slane %v2186, %v2190
    %v2192 = vlaneseq
    %v2193 = vshrl.u32 %v2192, 7
    %v2194 = vsub.s32 1, %v2193
    %v2195 = vrot.slane %v2186, %v2194
    %v2198 = vadd.f32 %v2178, %v2191
    %v2199 = vadd.f32 %v2185, %v2195
    %v2200 = vxor.u32 %v2198, 2147483648
    %v2201 = vxor.u32 %v2199, 2147483648
    %v2202 = vmul.f32 %v2200, 1.442695
    %v2203 = vpow.pop %v2202
    %v2204 = vmul.f32 %v2201, 1.442695
    %v2205 = vpow.pop %v2204
    %v2206 = vadd.f32 %v2203, 1.0
    %v2207 = vadd.f32 %v2205, 1.0
    %v2208 = vrcp.pop %v2206
    %v2209 = vmul.f32 1.0, %v2208
    %v2210 = vrcp.pop %v2207
    %v2211 = vmul.f32 1.0, %v2210
    %v2212 = vlaneseq
    %v2213 = vshrl.u32 %v2212, 7
    %v2214 = vsub.s32 0, %v2213
    %v2215 = vrot.slane %v2209, %v2214
    %v2216 = vlaneseq
    %v2217 = vshrl.u32 %v2216, 7
    %v2218 = vsub.s32 0, %v2217
    %v2219 = vrot.slane %v2211, %v2218
    %v2220 = vmul.f32 %v74, %v2215
    %v2221 = vmul.f32 %v75, %v2219
    %v2222 = vmul.f32 %v76, %v2215
    %v2223 = vmul.f32 %v77, %v2219
    %v2224 = vmul.f32 %v78, %v2215
    %v2225 = vmul.f32 %v79, %v2219
    %v2226 = vmul.f32 %v80, %v2215
    %v2227 = vmul.f32 %v81, %v2219
    %v2228 = vmul.f32 %v82, %v2215
    %v2229 = vmul.f32 %v83, %v2219
    %v2230 = vmul.f32 %v84, %v2215
    %v2231 = vmul.f32 %v85, %v2219
    %v2232 = vmul.f32 %v86, %v2215
    %v2233 = vmul.f32 %v87, %v2219
    %v2234 = vmul.f32 %v88, %v2215
    %v2235 = vmul.f32 %v89, %v2219
    %v2236 = vmul.f32 %v90, %v2215
    %v2237 = vmul.f32 %v91, %v2219
    %v2238 = vmul.f32 %v92, %v2215
    %v2239 = vmul.f32 %v93, %v2219
    %v2240 = vmul.f32 %v94, %v2215
    %v2241 = vmul.f32 %v95, %v2219
    %v2242 = vmul.f32 %v96, %v2215
    %v2243 = vmul.f32 %v97, %v2219
    %v2244 = vmul.f32 %v98, %v2215
    %v2245 = vmul.f32 %v99, %v2219
    %v2246 = vmul.f32 %v100, %v2215
    %v2247 = vmul.f32 %v101, %v2219
    %v2248 = vmul.f32 %v102, %v2215
    %v2249 = vmul.f32 %v103, %v2219
    %v2250 = vmul.f32 %v104, %v2215
    %v2251 = vmul.f32 %v105, %v2219
    %v2252 = vmul.f32 %v106, %v2215
    %v2253 = vmul.f32 %v107, %v2219
    %v2254 = vmul.f32 %v108, %v2215
    %v2255 = vmul.f32 %v109, %v2219
    %v2256 = vmul.f32 %v110, %v2215
    %v2257 = vmul.f32 %v111, %v2219
    %v2258 = vmul.f32 %v112, %v2215
    %v2259 = vmul.f32 %v113, %v2219
    %v2260 = vmul.f32 %v114, %v2215
    %v2261 = vmul.f32 %v115, %v2219
    %v2262 = vmul.f32 %v116, %v2215
    %v2263 = vmul.f32 %v117, %v2219
    %v2264 = vmul.f32 %v118, %v2215
    %v2265 = vmul.f32 %v119, %v2219
    %v2266 = vmul.f32 %v120, %v2215
    %v2267 = vmul.f32 %v121, %v2219
    %v2268 = vmul.f32 %v122, %v2215
    %v2269 = vmul.f32 %v123, %v2219
    %v2270 = vmul.f32 %v124, %v2215
    %v2271 = vmul.f32 %v125, %v2219
    %v2272 = vmul.f32 %v126, %v2215
    %v2273 = vmul.f32 %v127, %v2219
    %v2274 = vmul.f32 %v128, %v2215
    %v2275 = vmul.f32 %v129, %v2219
    %v2276 = vmul.f32 %v130, %v2215
    %v2277 = vmul.f32 %v131, %v2219
    %v2278 = vmul.f32 %v132, %v2215
    %v2279 = vmul.f32 %v133, %v2219
    %v2280 = vmul.f32 %v134, %v2215
    %v2281 = vmul.f32 %v135, %v2219
    %v2282 = vmul.f32 %v136, %v2215
    %v2283 = vmul.f32 %v137, %v2219
    %v2284 = vmul.f32 %v138, %v2215
    %v2285 = vmul.f32 %v139, %v2219
    %v2286 = vmul.f32 %v140, %v2215
    %v2287 = vmul.f32 %v141, %v2219
    %v2288 = vmul.f32 %v142, %v2215
    %v2289 = vmul.f32 %v143, %v2219
    %v2290 = vmul.f32 %v144, %v2215
    %v2291 = vmul.f32 %v145, %v2219
    %v2292 = vmul.f32 %v146, %v2215
    %v2293 = vmul.f32 %v147, %v2219
    %v2294 = vmul.f32 %v148, %v2215
    %v2295 = vmul.f32 %v149, %v2219
    %v2296 = vmul.f32 %v150, %v2215
    %v2297 = vmul.f32 %v151, %v2219
    %v2298 = vmul.f32 %v152, %v2215
    %v2299 = vmul.f32 %v153, %v2219
    %v2300 = vmul.f32 %v154, %v2215
    %v2301 = vmul.f32 %v155, %v2219
    %v2302 = vmul.f32 %v156, %v2215
    %v2303 = vmul.f32 %v157, %v2219
    %v2304 = vmul.f32 %v158, %v2215
    %v2305 = vmul.f32 %v159, %v2219
    %v2306 = vmul.f32 %v160, %v2215
    %v2307 = vmul.f32 %v161, %v2219
    %v2308 = vmul.f32 %v162, %v2215
    %v2309 = vmul.f32 %v163, %v2219
    %v2310 = vmul.f32 %v164, %v2215
    %v2311 = vmul.f32 %v165, %v2219
    %v2312 = vmul.f32 %v166, %v2215
    %v2313 = vmul.f32 %v167, %v2219
    %v2314 = vmul.f32 %v168, %v2215
    %v2315 = vmul.f32 %v169, %v2219
    %v2316 = vmul.f32 %v170, %v2215
    %v2317 = vmul.f32 %v171, %v2219
    %v2318 = vmul.f32 %v172, %v2215
    %v2319 = vmul.f32 %v173, %v2219
    %v2320 = vmul.f32 %v174, %v2215
    %v2321 = vmul.f32 %v175, %v2219
    %v2322 = vmul.f32 %v176, %v2215
    %v2323 = vmul.f32 %v177, %v2219
    %v2324 = vmul.f32 %v178, %v2215
    %v2325 = vmul.f32 %v179, %v2219
    %v2326 = vmul.f32 %v180, %v2215
    %v2327 = vmul.f32 %v181, %v2219
    %v2328 = vmul.f32 %v182, %v2215
    %v2329 = vmul.f32 %v183, %v2219
    %v2330 = vmul.f32 %v184, %v2215
    %v2331 = vmul.f32 %v185, %v2219
    %v2332 = vmul.f32 %v186, %v2215
    %v2333 = vmul.f32 %v187, %v2219
    %v2334 = vmul.f32 %v188, %v2215
    %v2335 = vmul.f32 %v189, %v2219
    %v2336 = vmul.f32 %v190, %v2215
    %v2337 = vmul.f32 %v191, %v2219
    %v2338 = vmul.f32 %v192, %v2215
    %v2339 = vmul.f32 %v193, %v2219
    %v2340 = vmul.f32 %v194, %v2215
    %v2341 = vmul.f32 %v195, %v2219
    %v2342 = vmul.f32 %v196, %v2215
    %v2343 = vmul.f32 %v197, %v2219
    %v2344 = vmul.f32 %v198, %v2215
    %v2345 = vmul.f32 %v199, %v2219
    %v2346 = vmul.f32 %v200, %v2215
    %v2347 = vmul.f32 %v201, %v2219
    %v2348 = vmul.f32 %v202, %v2215
    %v2349 = vmul.f32 %v203, %v2219
    %v2350 = vmul.f32 %v204, %v2215
    %v2351 = vmul.f32 %v205, %v2219
    %v2352 = vmul.f32 %v206, %v2215
    %v2353 = vmul.f32 %v207, %v2219
    %v2354 = vmul.f32 %v208, %v2215
    %v2355 = vmul.f32 %v209, %v2219
    %v2356 = vmul.f32 %v210, %v2215
    %v2357 = vmul.f32 %v211, %v2219
    %v2358 = vmul.f32 %v212, %v2215
    %v2359 = vmul.f32 %v213, %v2219
    %v2360 = vmul.f32 %v214, %v2215
    %v2361 = vmul.f32 %v215, %v2219
    %v2362 = vmul.f32 %v216, %v2215
    %v2363 = vmul.f32 %v217, %v2219
    %v2364 = vmul.f32 %v218, %v2215
    %v2365 = vmul.f32 %v219, %v2219
    %v2366 = vmul.f32 %v220, %v2215
    %v2367 = vmul.f32 %v221, %v2219
    %v2368 = vmul.f32 %v222, %v2215
    %v2369 = vmul.f32 %v223, %v2219
    %v2370 = vmul.f32 %v224, %v2215
    %v2371 = vmul.f32 %v225, %v2219
    %v2372 = vmul.f32 %v226, %v2215
    %v2373 = vmul.f32 %v227, %v2219
    %v2374 = vmul.f32 %v228, %v2215
    %v2375 = vmul.f32 %v229, %v2219
    %v2376 = vmul.f32 %v230, %v2215
    %v2377 = vmul.f32 %v231, %v2219
    %v2378 = vmul.f32 %v232, %v2215
    %v2379 = vmul.f32 %v233, %v2219
    %v2380 = vmul.f32 %v234, %v2215
    %v2381 = vmul.f32 %v235, %v2219
    %v2382 = vmul.f32 %v236, %v2215
    %v2383 = vmul.f32 %v237, %v2219
    %v2384 = vmul.f32 %v238, %v2215
    %v2385 = vmul.f32 %v239, %v2219
    %v2386 = vmul.f32 %v240, %v2215
    %v2387 = vmul.f32 %v241, %v2219
    %v2388 = vmul.f32 %v242, %v2215
    %v2389 = vmul.f32 %v243, %v2219
    %v2390 = vmul.f32 %v244, %v2215
    %v2391 = vmul.f32 %v245, %v2219
    %v2392 = vmul.f32 %v246, %v2215
    %v2393 = vmul.f32 %v247, %v2219
    %v2394 = vmul.f32 %v248, %v2215
    %v2395 = vmul.f32 %v249, %v2219
    %v2396 = vmul.f32 %v250, %v2215
    %v2397 = vmul.f32 %v251, %v2219
    %v2398 = vmul.f32 %v252, %v2215
    %v2399 = vmul.f32 %v253, %v2219
    %v2400 = vmul.f32 %v254, %v2215
    %v2401 = vmul.f32 %v255, %v2219
    %v2402 = vmul.f32 %v256, %v2215
    %v2403 = vmul.f32 %v257, %v2219
    %v2404 = vmul.f32 %v258, %v2215
    %v2405 = vmul.f32 %v259, %v2219
    %v2406 = vmul.f32 %v260, %v2215
    %v2407 = vmul.f32 %v261, %v2219
    %v2408 = vmul.f32 %v262, %v2215
    %v2409 = vmul.f32 %v263, %v2219
    %v2410 = vmul.f32 %v264, %v2215
    %v2411 = vmul.f32 %v265, %v2219
    %v2412 = vmul.f32 %v266, %v2215
    %v2413 = vmul.f32 %v267, %v2219
    %v2414 = vmul.f32 %v268, %v2215
    %v2415 = vmul.f32 %v269, %v2219
    %v2416 = vmul.f32 %v270, %v2215
    %v2417 = vmul.f32 %v271, %v2219
    %v2418 = vmul.f32 %v272, %v2215
    %v2419 = vmul.f32 %v273, %v2219
    %v2420 = vmul.f32 %v274, %v2215
    %v2421 = vmul.f32 %v275, %v2219
    %v2422 = vmul.f32 %v276, %v2215
    %v2423 = vmul.f32 %v277, %v2219
    %v2424 = vmul.f32 %v278, %v2215
    %v2425 = vmul.f32 %v279, %v2219
    %v2426 = vmul.f32 %v280, %v2215
    %v2427 = vmul.f32 %v281, %v2219
    %v2428 = vmul.f32 %v282, %v2215
    %v2429 = vmul.f32 %v283, %v2219
    %v2430 = vmul.f32 %v284, %v2215
    %v2431 = vmul.f32 %v285, %v2219
    %v2432 = vmul.f32 %v286, %v2215
    %v2433 = vmul.f32 %v287, %v2219
    %v2434 = vmul.f32 %v288, %v2215
    %v2435 = vmul.f32 %v289, %v2219
    %v2436 = vmul.f32 %v290, %v2215
    %v2437 = vmul.f32 %v291, %v2219
    %v2438 = vmul.f32 %v292, %v2215
    %v2439 = vmul.f32 %v293, %v2219
    %v2440 = vmul.f32 %v294, %v2215
    %v2441 = vmul.f32 %v295, %v2219
    %v2442 = vmul.f32 %v296, %v2215
    %v2443 = vmul.f32 %v297, %v2219
    %v2444 = vmul.f32 %v298, %v2215
    %v2445 = vmul.f32 %v299, %v2219
    %v2446 = vmul.f32 %v300, %v2215
    %v2447 = vmul.f32 %v301, %v2219
    %v2448 = vmul.f32 %v302, %v2215
    %v2449 = vmul.f32 %v303, %v2219
    %v2450 = vmul.f32 %v304, %v2215
    %v2451 = vmul.f32 %v305, %v2219
    %v2452 = vmul.f32 %v306, %v2215
    %v2453 = vmul.f32 %v307, %v2219
    %v2454 = vmul.f32 %v308, %v2215
    %v2455 = vmul.f32 %v309, %v2219
    %v2456 = vmul.f32 %v310, %v2215
    %v2457 = vmul.f32 %v311, %v2219
    %v2458 = vmul.f32 %v312, %v2215
    %v2459 = vmul.f32 %v313, %v2219
    %v2460 = vmul.f32 %v314, %v2215
    %v2461 = vmul.f32 %v315, %v2219
    %v2462 = vmul.f32 %v316, %v2215
    %v2463 = vmul.f32 %v317, %v2219
    %v2464 = vmul.f32 %v318, %v2215
    %v2465 = vmul.f32 %v319, %v2219
    %v2466 = vmul.f32 %v320, %v2215
    %v2467 = vmul.f32 %v321, %v2219
    %v2468 = vmul.f32 %v322, %v2215
    %v2469 = vmul.f32 %v323, %v2219
    %v2470 = vmul.f32 %v324, %v2215
    %v2471 = vmul.f32 %v325, %v2219
    %v2472 = vmul.f32 %v326, %v2215
    %v2473 = vmul.f32 %v327, %v2219
    %v2474 = vmul.f32 %v328, %v2215
    %v2475 = vmul.f32 %v329, %v2219
    %v2476 = vmul.f32 %v330, %v2215
    %v2477 = vmul.f32 %v331, %v2219
    %v2478 = vmul.f32 %v332, %v2215
    %v2479 = vmul.f32 %v333, %v2219
    %v2480 = vmul.f32 %v334, %v2215
    %v2481 = vmul.f32 %v335, %v2219
    %v2482 = vmul.f32 %v336, %v2215
    %v2483 = vmul.f32 %v337, %v2219
    %v2484 = vmul.f32 %v338, %v2215
    %v2485 = vmul.f32 %v339, %v2219
    %v2486 = vmul.f32 %v340, %v2215
    %v2487 = vmul.f32 %v341, %v2219
    %v2488 = vmul.f32 %v342, %v2215
    %v2489 = vmul.f32 %v343, %v2219
    %v2490 = vmul.f32 %v344, %v2215
    %v2491 = vmul.f32 %v345, %v2219
    %v2492 = vmul.f32 %v346, %v2215
    %v2493 = vmul.f32 %v347, %v2219
    %v2494 = vmul.f32 %v348, %v2215
    %v2495 = vmul.f32 %v349, %v2219
    %v2496 = vmul.f32 %v350, %v2215
    %v2497 = vmul.f32 %v351, %v2219
    %v2498 = vmul.f32 %v352, %v2215
    %v2499 = vmul.f32 %v353, %v2219
    %v2500 = vmul.f32 %v354, %v2215
    %v2501 = vmul.f32 %v355, %v2219
    %v2502 = vmul.f32 %v356, %v2215
    %v2503 = vmul.f32 %v357, %v2219
    %v2504 = vmul.f32 %v358, %v2215
    %v2505 = vmul.f32 %v359, %v2219
    %v2506 = vmul.f32 %v360, %v2215
    %v2507 = vmul.f32 %v361, %v2219
    %v2508 = vmul.f32 %v362, %v2215
    %v2509 = vmul.f32 %v363, %v2219
    %v2510 = vmul.f32 %v364, %v2215
    %v2511 = vmul.f32 %v365, %v2219
    %v2512 = vmul.f32 %v366, %v2215
    %v2513 = vmul.f32 %v367, %v2219
    %v2514 = vmul.f32 %v368, %v2215
    %v2515 = vmul.f32 %v369, %v2219
    %v2516 = vmul.f32 %v370, %v2215
    %v2517 = vmul.f32 %v371, %v2219
    %v2518 = vmul.f32 %v372, %v2215
    %v2519 = vmul.f32 %v373, %v2219
    %v2520 = vmul.f32 %v374, %v2215
    %v2521 = vmul.f32 %v375, %v2219
    %v2522 = vmul.f32 %v376, %v2215
    %v2523 = vmul.f32 %v377, %v2219
    %v2524 = vmul.f32 %v378, %v2215
    %v2525 = vmul.f32 %v379, %v2219
    %v2526 = vmul.f32 %v380, %v2215
    %v2527 = vmul.f32 %v381, %v2219
    %v2528 = vmul.f32 %v382, %v2215
    %v2529 = vmul.f32 %v383, %v2219
    %v2530 = vmul.f32 %v384, %v2215
    %v2531 = vmul.f32 %v385, %v2219
    %v2532 = vmul.f32 %v386, %v2215
    %v2533 = vmul.f32 %v387, %v2219
    %v2534 = vmul.f32 %v388, %v2215
    %v2535 = vmul.f32 %v389, %v2219
    %v2536 = vmul.f32 %v390, %v2215
    %v2537 = vmul.f32 %v391, %v2219
    %v2538 = vmul.f32 %v392, %v2215
    %v2539 = vmul.f32 %v393, %v2219
    %v2540 = vmul.f32 %v394, %v2215
    %v2541 = vmul.f32 %v395, %v2219
    %v2542 = vmul.f32 %v396, %v2215
    %v2543 = vmul.f32 %v397, %v2219
    %v2544 = vmul.f32 %v398, %v2215
    %v2545 = vmul.f32 %v399, %v2219
    %v2546 = vmul.f32 %v400, %v2215
    %v2547 = vmul.f32 %v401, %v2219
    %v2548 = vmul.f32 %v402, %v2215
    %v2549 = vmul.f32 %v403, %v2219
    %v2550 = vmul.f32 %v404, %v2215
    %v2551 = vmul.f32 %v405, %v2219
    %v2552 = vmul.f32 %v406, %v2215
    %v2553 = vmul.f32 %v407, %v2219
    %v2554 = vmul.f32 %v408, %v2215
    %v2555 = vmul.f32 %v409, %v2219
    %v2556 = vmul.f32 %v410, %v2215
    %v2557 = vmul.f32 %v411, %v2219
    %v2558 = vmul.f32 %v412, %v2215
    %v2559 = vmul.f32 %v413, %v2219
    %v2560 = vmul.f32 %v414, %v2215
    %v2561 = vmul.f32 %v415, %v2219
    %v2562 = vmul.f32 %v416, %v2215
    %v2563 = vmul.f32 %v417, %v2219
    %v2564 = vmul.f32 %v418, %v2215
    %v2565 = vmul.f32 %v419, %v2219
    %v2566 = vmul.f32 %v420, %v2215
    %v2567 = vmul.f32 %v421, %v2219
    %v2568 = vmul.f32 %v422, %v2215
    %v2569 = vmul.f32 %v423, %v2219
    %v2570 = vmul.f32 %v424, %v2215
    %v2571 = vmul.f32 %v425, %v2219
    %v2572 = vmul.f32 %v426, %v2215
    %v2573 = vmul.f32 %v427, %v2219
    %v2574 = vmul.f32 %v428, %v2215
    %v2575 = vmul.f32 %v429, %v2219
    %v2576 = vmul.f32 %v430, %v2215
    %v2577 = vmul.f32 %v431, %v2219
    %v2578 = vmul.f32 %v432, %v2215
    %v2579 = vmul.f32 %v433, %v2219
    %v2580 = vmul.f32 %v434, %v2215
    %v2581 = vmul.f32 %v435, %v2219
    %v2582 = vmul.f32 %v436, %v2215
    %v2583 = vmul.f32 %v437, %v2219
    %v2584 = vmul.f32 %v438, %v2215
    %v2585 = vmul.f32 %v439, %v2219
    %v2586 = vmul.f32 %v440, %v2215
    %v2587 = vmul.f32 %v441, %v2219
    %v2588 = vmul.f32 %v442, %v2215
    %v2589 = vmul.f32 %v443, %v2219
    %v2590 = vmul.f32 %v444, %v2215
    %v2591 = vmul.f32 %v445, %v2219
    %v2592 = vmul.f32 %v446, %v2215
    %v2593 = vmul.f32 %v447, %v2219
    %v2594 = vmul.f32 %v448, %v2215
    %v2595 = vmul.f32 %v449, %v2219
    %v2596 = vmul.f32 %v450, %v2215
    %v2597 = vmul.f32 %v451, %v2219
    %v2598 = vmul.f32 %v452, %v2215
    %v2599 = vmul.f32 %v453, %v2219
    %v2600 = vmul.f32 %v454, %v2215
    %v2601 = vmul.f32 %v455, %v2219
    %v2602 = vmul.f32 %v456, %v2215
    %v2603 = vmul.f32 %v457, %v2219
    %v2604 = vmul.f32 %v458, %v2215
    %v2605 = vmul.f32 %v459, %v2219
    %v2606 = vmul.f32 %v460, %v2215
    %v2607 = vmul.f32 %v461, %v2219
    %v2608 = vmul.f32 %v462, %v2215
    %v2609 = vmul.f32 %v463, %v2219
    %v2610 = vmul.f32 %v464, %v2215
    %v2611 = vmul.f32 %v465, %v2219
    %v2612 = vmul.f32 %v466, %v2215
    %v2613 = vmul.f32 %v467, %v2219
    %v2614 = vmul.f32 %v468, %v2215
    %v2615 = vmul.f32 %v469, %v2219
    %v2616 = vmul.f32 %v470, %v2215
    %v2617 = vmul.f32 %v471, %v2219
    %v2618 = vmul.f32 %v472, %v2215
    %v2619 = vmul.f32 %v473, %v2219
    %v2620 = vmul.f32 %v474, %v2215
    %v2621 = vmul.f32 %v475, %v2219
    %v2622 = vmul.f32 %v476, %v2215
    %v2623 = vmul.f32 %v477, %v2219
    %v2624 = vmul.f32 %v478, %v2215
    %v2625 = vmul.f32 %v479, %v2219
    %v2626 = vmul.f32 %v480, %v2215
    %v2627 = vmul.f32 %v481, %v2219
    %v2628 = vmul.f32 %v482, %v2215
    %v2629 = vmul.f32 %v483, %v2219
    %v2630 = vmul.f32 %v484, %v2215
    %v2631 = vmul.f32 %v485, %v2219
    %v2632 = vmul.f32 %v486, %v2215
    %v2633 = vmul.f32 %v487, %v2219
    %v2634 = vmul.f32 %v488, %v2215
    %v2635 = vmul.f32 %v489, %v2219
    %v2636 = vmul.f32 %v490, %v2215
    %v2637 = vmul.f32 %v491, %v2219
    %v2638 = vmul.f32 %v492, %v2215
    %v2639 = vmul.f32 %v493, %v2219
    %v2640 = vmul.f32 %v494, %v2215
    %v2641 = vmul.f32 %v495, %v2219
    %v2642 = vmul.f32 %v496, %v2215
    %v2643 = vmul.f32 %v497, %v2219
    %v2644 = vmul.f32 %v498, %v2215
    %v2645 = vmul.f32 %v499, %v2219
    %v2646 = vmul.f32 %v500, %v2215
    %v2647 = vmul.f32 %v501, %v2219
    %v2648 = vmul.f32 %v502, %v2215
    %v2649 = vmul.f32 %v503, %v2219
    %v2650 = vmul.f32 %v504, %v2215
    %v2651 = vmul.f32 %v505, %v2219
    %v2652 = vmul.f32 %v506, %v2215
    %v2653 = vmul.f32 %v507, %v2219
    %v2654 = vmul.f32 %v508, %v2215
    %v2655 = vmul.f32 %v509, %v2219
    %v2656 = vmul.f32 %v510, %v2215
    %v2657 = vmul.f32 %v511, %v2219
    %v2658 = vmul.f32 %v512, %v2215
    %v2659 = vmul.f32 %v513, %v2219
    %v2660 = vmul.f32 %v514, %v2215
    %v2661 = vmul.f32 %v515, %v2219
    %v2662 = vmul.f32 %v516, %v2215
    %v2663 = vmul.f32 %v517, %v2219
    %v2664 = vmul.f32 %v518, %v2215
    %v2665 = vmul.f32 %v519, %v2219
    %v2666 = vmul.f32 %v520, %v2215
    %v2667 = vmul.f32 %v521, %v2219
    %v2668 = vmul.f32 %v522, %v2215
    %v2669 = vmul.f32 %v523, %v2219
    %v2670 = vmul.f32 %v524, %v2215
    %v2671 = vmul.f32 %v525, %v2219
    %v2672 = vmul.f32 %v526, %v2215
    %v2673 = vmul.f32 %v527, %v2219
    %v2674 = vmul.f32 %v528, %v2215
    %v2675 = vmul.f32 %v529, %v2219
    %v2676 = vmul.f32 %v530, %v2215
    %v2677 = vmul.f32 %v531, %v2219
    %v2678 = vmul.f32 %v532, %v2215
    %v2679 = vmul.f32 %v533, %v2219
    %v2680 = vmul.f32 %v534, %v2215
    %v2681 = vmul.f32 %v535, %v2219
    %v2682 = vmul.f32 %v536, %v2215
    %v2683 = vmul.f32 %v537, %v2219
    %v2684 = vmul.f32 %v538, %v2215
    %v2685 = vmul.f32 %v539, %v2219
    %v2686 = vmul.f32 %v540, %v2215
    %v2687 = vmul.f32 %v541, %v2219
    %v2688 = vmul.f32 %v542, %v2215
    %v2689 = vmul.f32 %v543, %v2219
    %v2690 = vmul.f32 %v544, %v2215
    %v2691 = vmul.f32 %v545, %v2219
    %v2692 = vmul.f32 %v546, %v2215
    %v2693 = vmul.f32 %v547, %v2219
    %v2694 = vmul.f32 %v548, %v2215
    %v2695 = vmul.f32 %v549, %v2219
    %v2696 = vmul.f32 %v550, %v2215
    %v2697 = vmul.f32 %v551, %v2219
    %v2698 = vmul.f32 %v552, %v2215
    %v2699 = vmul.f32 %v553, %v2219
    %v2700 = vmul.f32 %v554, %v2215
    %v2701 = vmul.f32 %v555, %v2219
    %v2702 = vmul.f32 %v556, %v2215
    %v2703 = vmul.f32 %v557, %v2219
    %v2704 = vmul.f32 %v558, %v2215
    %v2705 = vmul.f32 %v559, %v2219
    %v2706 = vmul.f32 %v560, %v2215
    %v2707 = vmul.f32 %v561, %v2219
    %v2708 = vmul.f32 %v562, %v2215
    %v2709 = vmul.f32 %v563, %v2219
    %v2710 = vmul.f32 %v564, %v2215
    %v2711 = vmul.f32 %v565, %v2219
    %v2712 = vmul.f32 %v566, %v2215
    %v2713 = vmul.f32 %v567, %v2219
    %v2714 = vmul.f32 %v568, %v2215
    %v2715 = vmul.f32 %v569, %v2219
    %v2716 = vmul.f32 %v570, %v2215
    %v2717 = vmul.f32 %v571, %v2219
    %v2718 = vmul.f32 %v572, %v2215
    %v2719 = vmul.f32 %v573, %v2219
    %v2720 = vmul.f32 %v574, %v2215
    %v2721 = vmul.f32 %v575, %v2219
    %v2722 = vmul.f32 %v576, %v2215
    %v2723 = vmul.f32 %v577, %v2219
    %v2724 = vmul.f32 %v578, %v2215
    %v2725 = vmul.f32 %v579, %v2219
    %v2726 = vmul.f32 %v580, %v2215
    %v2727 = vmul.f32 %v581, %v2219
    %v2728 = vmul.f32 %v582, %v2215
    %v2729 = vmul.f32 %v583, %v2219
    %v2730 = vmul.f32 %v584, %v2215
    %v2731 = vmul.f32 %v585, %v2219
    %v2732 = vmul.f32 %v586, %v2215
    %v2733 = vmul.f32 %v587, %v2219
    %v2734 = vmul.f32 %v588, %v2215
    %v2735 = vmul.f32 %v589, %v2219
    %v2736 = vmul.f32 %v590, %v2215
    %v2737 = vmul.f32 %v591, %v2219
    %v2738 = vmul.f32 %v592, %v2215
    %v2739 = vmul.f32 %v593, %v2219
    %v2740 = vmul.f32 %v594, %v2215
    %v2741 = vmul.f32 %v595, %v2219
    %v2742 = vmul.f32 %v596, %v2215
    %v2743 = vmul.f32 %v597, %v2219
    %v2744 = vmul.f32 %v598, %v2215
    %v2745 = vmul.f32 %v599, %v2219
    %v2746 = vmul.f32 %v600, %v2215
    %v2747 = vmul.f32 %v601, %v2219
    %v2748 = vmul.f32 %v602, %v2215
    %v2749 = vmul.f32 %v603, %v2219
    %v2750 = vmul.f32 %v604, %v2215
    %v2751 = vmul.f32 %v605, %v2219
    %v2752 = vmul.f32 %v606, %v2215
    %v2753 = vmul.f32 %v607, %v2219
    %v2754 = vmul.f32 %v608, %v2215
    %v2755 = vmul.f32 %v609, %v2219
    %v2756 = vmul.f32 %v610, %v2215
    %v2757 = vmul.f32 %v611, %v2219
    %v2758 = vmul.f32 %v612, %v2215
    %v2759 = vmul.f32 %v613, %v2219
    %v2760 = vmul.f32 %v614, %v2215
    %v2761 = vmul.f32 %v615, %v2219
    %v2762 = vmul.f32 %v616, %v2215
    %v2763 = vmul.f32 %v617, %v2219
    %v2764 = vmul.f32 %v618, %v2215
    %v2765 = vmul.f32 %v619, %v2219
    %v2766 = vmul.f32 %v620, %v2215
    %v2767 = vmul.f32 %v621, %v2219
    %v2768 = vmul.f32 %v622, %v2215
    %v2769 = vmul.f32 %v623, %v2219
    %v2770 = vmul.f32 %v624, %v2215
    %v2771 = vmul.f32 %v625, %v2219
    %v2772 = vmul.f32 %v626, %v2215
    %v2773 = vmul.f32 %v627, %v2219
    %v2774 = vmul.f32 %v628, %v2215
    %v2775 = vmul.f32 %v629, %v2219
    %v2776 = vmul.f32 %v630, %v2215
    %v2777 = vmul.f32 %v631, %v2219
    %v2778 = vmul.f32 %v632, %v2215
    %v2779 = vmul.f32 %v633, %v2219
    %v2780 = vmul.f32 %v634, %v2215
    %v2781 = vmul.f32 %v635, %v2219
    %v2782 = vmul.f32 %v636, %v2215
    %v2783 = vmul.f32 %v637, %v2219
    %v2784 = vmul.f32 %v638, %v2215
    %v2785 = vmul.f32 %v639, %v2219
    %v2786 = vmul.f32 %v640, %v2215
    %v2787 = vmul.f32 %v641, %v2219
    %v2788 = vmul.f32 %v642, %v2215
    %v2789 = vmul.f32 %v643, %v2219
    %v2790 = vmul.f32 %v644, %v2215
    %v2791 = vmul.f32 %v645, %v2219
    %v2792 = vmul.f32 %v646, %v2215
    %v2793 = vmul.f32 %v647, %v2219
    %v2794 = vmul.f32 %v648, %v2215
    %v2795 = vmul.f32 %v649, %v2219
    %v2796 = vmul.f32 %v650, %v2215
    %v2797 = vmul.f32 %v651, %v2219
    %v2798 = vmul.f32 %v652, %v2215
    %v2799 = vmul.f32 %v653, %v2219
    %v2800 = vmul.f32 %v654, %v2215
    %v2801 = vmul.f32 %v655, %v2219
    %v2802 = vmul.f32 %v656, %v2215
    %v2803 = vmul.f32 %v657, %v2219
    %v2804 = vmul.f32 %v658, %v2215
    %v2805 = vmul.f32 %v659, %v2219
    %v2806 = vmul.f32 %v660, %v2215
    %v2807 = vmul.f32 %v661, %v2219
    %v2808 = vmul.f32 %v662, %v2215
    %v2809 = vmul.f32 %v663, %v2219
    %v2810 = vmul.f32 %v664, %v2215
    %v2811 = vmul.f32 %v665, %v2219
    %v2812 = vmul.f32 %v666, %v2215
    %v2813 = vmul.f32 %v667, %v2219
    %v2814 = vmul.f32 %v668, %v2215
    %v2815 = vmul.f32 %v669, %v2219
    %v2816 = vmul.f32 %v670, %v2215
    %v2817 = vmul.f32 %v671, %v2219
    %v2818 = vmul.f32 %v672, %v2215
    %v2819 = vmul.f32 %v673, %v2219
    %v2820 = vmul.f32 %v674, %v2215
    %v2821 = vmul.f32 %v675, %v2219
    %v2822 = vmul.f32 %v676, %v2215
    %v2823 = vmul.f32 %v677, %v2219
    %v2824 = vmul.f32 %v678, %v2215
    %v2825 = vmul.f32 %v679, %v2219
    %v2826 = vmul.f32 %v680, %v2215
    %v2827 = vmul.f32 %v681, %v2219
    %v2828 = vmul.f32 %v682, %v2215
    %v2829 = vmul.f32 %v683, %v2219
    %v2830 = vmul.f32 %v684, %v2215
    %v2831 = vmul.f32 %v685, %v2219
    %v2832 = vmul.f32 %v686, %v2215
    %v2833 = vmul.f32 %v687, %v2219
    %v2834 = vmul.f32 %v688, %v2215
    %v2835 = vmul.f32 %v689, %v2219
    %v2836 = vmul.f32 %v690, %v2215
    %v2837 = vmul.f32 %v691, %v2219
    %v2838 = vmul.f32 %v692, %v2215
    %v2839 = vmul.f32 %v693, %v2219
    %v2840 = vmul.f32 %v694, %v2215
    %v2841 = vmul.f32 %v695, %v2219
    %v2842 = vmul.f32 %v696, %v2215
    %v2843 = vmul.f32 %v697, %v2219
    %v2844 = vmul.f32 %v698, %v2215
    %v2845 = vmul.f32 %v699, %v2219
    %v2846 = vmul.f32 %v700, %v2215
    %v2847 = vmul.f32 %v701, %v2219
    %v2848 = vmul.f32 %v702, %v2215
    %v2849 = vmul.f32 %v703, %v2219
    %v2850 = vmul.f32 %v704, %v2215
    %v2851 = vmul.f32 %v705, %v2219
    %v2852 = vmul.f32 %v706, %v2215
    %v2853 = vmul.f32 %v707, %v2219
    %v2854 = vmul.f32 %v708, %v2215
    %v2855 = vmul.f32 %v709, %v2219
    %v2856 = vmul.f32 %v710, %v2215
    %v2857 = vmul.f32 %v711, %v2219
    %v2858 = vmul.f32 %v712, %v2215
    %v2859 = vmul.f32 %v713, %v2219
    %v2860 = vmul.f32 %v714, %v2215
    %v2861 = vmul.f32 %v715, %v2219
    %v2862 = vmul.f32 %v716, %v2215
    %v2863 = vmul.f32 %v717, %v2219
    %v2864 = vmul.f32 %v718, %v2215
    %v2865 = vmul.f32 %v719, %v2219
    %v2866 = vmul.f32 %v720, %v2215
    %v2867 = vmul.f32 %v721, %v2219
    %v2868 = vmul.f32 %v722, %v2215
    %v2869 = vmul.f32 %v723, %v2219
    %v2870 = vmul.f32 %v724, %v2215
    %v2871 = vmul.f32 %v725, %v2219
    %v2872 = vmul.f32 %v726, %v2215
    %v2873 = vmul.f32 %v727, %v2219
    %v2874 = vmul.f32 %v728, %v2215
    %v2875 = vmul.f32 %v729, %v2219
    %v2876 = vmul.f32 %v730, %v2215
    %v2877 = vmul.f32 %v731, %v2219
    %v2878 = vmul.f32 %v732, %v2215
    %v2879 = vmul.f32 %v733, %v2219
    %v2880 = vmul.f32 %v734, %v2215
    %v2881 = vmul.f32 %v735, %v2219
    %v2882 = vmul.f32 %v736, %v2215
    %v2883 = vmul.f32 %v737, %v2219
    %v2884 = vmul.f32 %v738, %v2215
    %v2885 = vmul.f32 %v739, %v2219
    %v2886 = vmul.f32 %v740, %v2215
    %v2887 = vmul.f32 %v741, %v2219
    %v2888 = vmul.f32 %v742, %v2215
    %v2889 = vmul.f32 %v743, %v2219
    %v2890 = vmul.f32 %v744, %v2215
    %v2891 = vmul.f32 %v745, %v2219
    %v2892 = vmul.f32 %v746, %v2215
    %v2893 = vmul.f32 %v747, %v2219
    %v2894 = vmul.f32 %v748, %v2215
    %v2895 = vmul.f32 %v749, %v2219
    %v2896 = vmul.f32 %v750, %v2215
    %v2897 = vmul.f32 %v751, %v2219
    %v2898 = vmul.f32 %v752, %v2215
    %v2899 = vmul.f32 %v753, %v2219
    %v2900 = vmul.f32 %v754, %v2215
    %v2901 = vmul.f32 %v755, %v2219
    %v2902 = vmul.f32 %v756, %v2215
    %v2903 = vmul.f32 %v757, %v2219
    %v2904 = vmul.f32 %v758, %v2215
    %v2905 = vmul.f32 %v759, %v2219
    %v2906 = vmul.f32 %v760, %v2215
    %v2907 = vmul.f32 %v761, %v2219
    %v2908 = vmul.f32 %v762, %v2215
    %v2909 = vmul.f32 %v763, %v2219
    %v2910 = vmul.f32 %v764, %v2215
    %v2911 = vmul.f32 %v765, %v2219
    %v2912 = vmul.f32 %v766, %v2215
    %v2913 = vmul.f32 %v767, %v2219
    %v2914 = vmul.f32 %v768, %v2215
    %v2915 = vmul.f32 %v769, %v2219
    %v2916 = vmul.f32 %v770, %v2215
    %v2917 = vmul.f32 %v771, %v2219
    %v2918 = vmul.f32 %v772, %v2215
    %v2919 = vmul.f32 %v773, %v2219
    %v2920 = vmul.f32 %v774, %v2215
    %v2921 = vmul.f32 %v775, %v2219
    %v2922 = vmul.f32 %v776, %v2215
    %v2923 = vmul.f32 %v777, %v2219
    %v2924 = vmul.f32 %v778, %v2215
    %v2925 = vmul.f32 %v779, %v2219
    %v2926 = vmul.f32 %v780, %v2215
    %v2927 = vmul.f32 %v781, %v2219
    %v2928 = vmul.f32 %v782, %v2215
    %v2929 = vmul.f32 %v783, %v2219
    %v2930 = vmul.f32 %v784, %v2215
    %v2931 = vmul.f32 %v785, %v2219
    %v2932 = vmul.f32 %v786, %v2215
    %v2933 = vmul.f32 %v787, %v2219
    %v2934 = vmul.f32 %v788, %v2215
    %v2935 = vmul.f32 %v789, %v2219
    %v2936 = vmul.f32 %v790, %v2215
    %v2937 = vmul.f32 %v791, %v2219
    %v2938 = vmul.f32 %v792, %v2215
    %v2939 = vmul.f32 %v793, %v2219
    %v2940 = vmul.f32 %v794, %v2215
    %v2941 = vmul.f32 %v795, %v2219
    %v2942 = vmul.f32 %v796, %v2215
    %v2943 = vmul.f32 %v797, %v2219
    %v2944 = vmul.f32 %v798, %v2215
    %v2945 = vmul.f32 %v799, %v2219
    %v2946 = vmul.f32 %v800, %v2215
    %v2947 = vmul.f32 %v801, %v2219
    %v2948 = vmul.f32 %v802, %v2215
    %v2949 = vmul.f32 %v803, %v2219
    %v2950 = vmul.f32 %v804, %v2215
    %v2951 = vmul.f32 %v805, %v2219
    %v2952 = vmul.f32 %v806, %v2215
    %v2953 = vmul.f32 %v807, %v2219
    %v2954 = vmul.f32 %v808, %v2215
    %v2955 = vmul.f32 %v809, %v2219
    %v2956 = vmul.f32 %v810, %v2215
    %v2957 = vmul.f32 %v811, %v2219
    %v2958 = vmul.f32 %v812, %v2215
    %v2959 = vmul.f32 %v813, %v2219
    %v2960 = vmul.f32 %v814, %v2215
    %v2961 = vmul.f32 %v815, %v2219
    %v2962 = vmul.f32 %v816, %v2215
    %v2963 = vmul.f32 %v817, %v2219
    %v2964 = vmul.f32 %v818, %v2215
    %v2965 = vmul.f32 %v819, %v2219
    %v2966 = vmul.f32 %v820, %v2215
    %v2967 = vmul.f32 %v821, %v2219
    %v2968 = vmul.f32 %v822, %v2215
    %v2969 = vmul.f32 %v823, %v2219
    %v2970 = vmul.f32 %v824, %v2215
    %v2971 = vmul.f32 %v825, %v2219
    %v2972 = vmul.f32 %v826, %v2215
    %v2973 = vmul.f32 %v827, %v2219
    %v2974 = vmul.f32 %v828, %v2215
    %v2975 = vmul.f32 %v829, %v2219
    %v2976 = vmul.f32 %v830, %v2215
    %v2977 = vmul.f32 %v831, %v2219
    %v2978 = vmul.f32 %v832, %v2215
    %v2979 = vmul.f32 %v833, %v2219
    %v2980 = vmul.f32 %v834, %v2215
    %v2981 = vmul.f32 %v835, %v2219
    %v2982 = vmul.f32 %v836, %v2215
    %v2983 = vmul.f32 %v837, %v2219
    %v2984 = vmul.f32 %v838, %v2215
    %v2985 = vmul.f32 %v839, %v2219
    %v2986 = vmul.f32 %v840, %v2215
    %v2987 = vmul.f32 %v841, %v2219
    %v2988 = vmul.f32 %v842, %v2215
    %v2989 = vmul.f32 %v843, %v2219
    %v2990 = vmul.f32 %v844, %v2215
    %v2991 = vmul.f32 %v845, %v2219
    %v2992 = vmul.f32 %v846, %v2215
    %v2993 = vmul.f32 %v847, %v2219
    %v2994 = vmul.f32 %v848, %v2215
    %v2995 = vmul.f32 %v849, %v2219
    %v2996 = vmul.f32 %v850, %v2215
    %v2997 = vmul.f32 %v851, %v2219
    %v2998 = vmul.f32 %v852, %v2215
    %v2999 = vmul.f32 %v853, %v2219
    %v3000 = vmul.f32 %v854, %v2215
    %v3001 = vmul.f32 %v855, %v2219
    %v3002 = vmul.f32 %v856, %v2215
    %v3003 = vmul.f32 %v857, %v2219
    %v3004 = vmul.f32 %v858, %v2215
    %v3005 = vmul.f32 %v859, %v2219
    %v3006 = vmul.f32 %v860, %v2215
    %v3007 = vmul.f32 %v861, %v2219
    %v3008 = vmul.f32 %v862, %v2215
    %v3009 = vmul.f32 %v863, %v2219
    %v3010 = vmul.f32 %v864, %v2215
    %v3011 = vmul.f32 %v865, %v2219
    %v3012 = vmul.f32 %v866, %v2215
    %v3013 = vmul.f32 %v867, %v2219
    %v3014 = vmul.f32 %v868, %v2215
    %v3015 = vmul.f32 %v869, %v2219
    %v3016 = vmul.f32 %v870, %v2215
    %v3017 = vmul.f32 %v871, %v2219
    %v3018 = vmul.f32 %v872, %v2215
    %v3019 = vmul.f32 %v873, %v2219
    %v3020 = vmul.f32 %v874, %v2215
    %v3021 = vmul.f32 %v875, %v2219
    %v3022 = vmul.f32 %v876, %v2215
    %v3023 = vmul.f32 %v877, %v2219
    %v3024 = vmul.f32 %v878, %v2215
    %v3025 = vmul.f32 %v879, %v2219
    %v3026 = vmul.f32 %v880, %v2215
    %v3027 = vmul.f32 %v881, %v2219
    %v3028 = vmul.f32 %v882, %v2215
    %v3029 = vmul.f32 %v883, %v2219
    %v3030 = vmul.f32 %v884, %v2215
    %v3031 = vmul.f32 %v885, %v2219
    %v3032 = vmul.f32 %v886, %v2215
    %v3033 = vmul.f32 %v887, %v2219
    %v3034 = vmul.f32 %v888, %v2215
    %v3035 = vmul.f32 %v889, %v2219
    %v3036 = vmul.f32 %v890, %v2215
    %v3037 = vmul.f32 %v891, %v2219
    %v3038 = vmul.f32 %v892, %v2215
    %v3039 = vmul.f32 %v893, %v2219
    %v3040 = vmul.f32 %v894, %v2215
    %v3041 = vmul.f32 %v895, %v2219
    %v3042 = vmul.f32 %v896, %v2215
    %v3043 = vmul.f32 %v897, %v2219
    %v3044 = vmul.f32 %v898, %v2215
    %v3045 = vmul.f32 %v899, %v2219
    %v3046 = vmul.f32 %v900, %v2215
    %v3047 = vmul.f32 %v901, %v2219
    %v3048 = vmul.f32 %v902, %v2215
    %v3049 = vmul.f32 %v903, %v2219
    %v3050 = vmul.f32 %v904, %v2215
    %v3051 = vmul.f32 %v905, %v2219
    %v3052 = vmul.f32 %v906, %v2215
    %v3053 = vmul.f32 %v907, %v2219
    %v3054 = vmul.f32 %v908, %v2215
    %v3055 = vmul.f32 %v909, %v2219
    %v3056 = vmul.f32 %v910, %v2215
    %v3057 = vmul.f32 %v911, %v2219
    %v3058 = vmul.f32 %v912, %v2215
    %v3059 = vmul.f32 %v913, %v2219
    %v3060 = vmul.f32 %v914, %v2215
    %v3061 = vmul.f32 %v915, %v2219
    %v3062 = vmul.f32 %v916, %v2215
    %v3063 = vmul.f32 %v917, %v2219
    %v3064 = vmul.f32 %v918, %v2215
    %v3065 = vmul.f32 %v919, %v2219
    %v3066 = vmul.f32 %v920, %v2215
    %v3067 = vmul.f32 %v921, %v2219
    %v3068 = vmul.f32 %v922, %v2215
    %v3069 = vmul.f32 %v923, %v2219
    %v3070 = vmul.f32 %v924, %v2215
    %v3071 = vmul.f32 %v925, %v2219
    %v3072 = vmul.f32 %v926, %v2215
    %v3073 = vmul.f32 %v927, %v2219
    %v3074 = vmul.f32 %v928, %v2215
    %v3075 = vmul.f32 %v929, %v2219
    %v3076 = vmul.f32 %v930, %v2215
    %v3077 = vmul.f32 %v931, %v2219
    %v3078 = vmul.f32 %v932, %v2215
    %v3079 = vmul.f32 %v933, %v2219
    %v3080 = vmul.f32 %v934, %v2215
    %v3081 = vmul.f32 %v935, %v2219
    %v3082 = vmul.f32 %v936, %v2215
    %v3083 = vmul.f32 %v937, %v2219
    %v3084 = vmul.f32 %v938, %v2215
    %v3085 = vmul.f32 %v939, %v2219
    %v3086 = vmul.f32 %v940, %v2215
    %v3087 = vmul.f32 %v941, %v2219
    %v3088 = vmul.f32 %v942, %v2215
    %v3089 = vmul.f32 %v943, %v2219
    %v3090 = vmul.f32 %v944, %v2215
    %v3091 = vmul.f32 %v945, %v2219
    %v3092 = vmul.f32 %v946, %v2215
    %v3093 = vmul.f32 %v947, %v2219
    %v3094 = vmul.f32 %v948, %v2215
    %v3095 = vmul.f32 %v949, %v2219
    %v3096 = vmul.f32 %v950, %v2215
    %v3097 = vmul.f32 %v951, %v2219
    %v3098 = vmul.f32 %v952, %v2215
    %v3099 = vmul.f32 %v953, %v2219
    %v3100 = vmul.f32 %v954, %v2215
    %v3101 = vmul.f32 %v955, %v2219
    %v3102 = vmul.f32 %v956, %v2215
    %v3103 = vmul.f32 %v957, %v2219
    %v3104 = vmul.f32 %v958, %v2215
    %v3105 = vmul.f32 %v959, %v2219
    %v3106 = vmul.f32 %v960, %v2215
    %v3107 = vmul.f32 %v961, %v2219
    %v3108 = vmul.f32 %v962, %v2215
    %v3109 = vmul.f32 %v963, %v2219
    %v3110 = vmul.f32 %v964, %v2215
    %v3111 = vmul.f32 %v965, %v2219
    %v3112 = vmul.f32 %v966, %v2215
    %v3113 = vmul.f32 %v967, %v2219
    %v3114 = vmul.f32 %v968, %v2215
    %v3115 = vmul.f32 %v969, %v2219
    %v3116 = vmul.f32 %v970, %v2215
    %v3117 = vmul.f32 %v971, %v2219
    %v3118 = vmul.f32 %v972, %v2215
    %v3119 = vmul.f32 %v973, %v2219
    %v3120 = vmul.f32 %v974, %v2215
    %v3121 = vmul.f32 %v975, %v2219
    %v3122 = vmul.f32 %v976, %v2215
    %v3123 = vmul.f32 %v977, %v2219
    %v3124 = vmul.f32 %v978, %v2215
    %v3125 = vmul.f32 %v979, %v2219
    %v3126 = vmul.f32 %v980, %v2215
    %v3127 = vmul.f32 %v981, %v2219
    %v3128 = vmul.f32 %v982, %v2215
    %v3129 = vmul.f32 %v983, %v2219
    %v3130 = vmul.f32 %v984, %v2215
    %v3131 = vmul.f32 %v985, %v2219
    %v3132 = vmul.f32 %v986, %v2215
    %v3133 = vmul.f32 %v987, %v2219
    %v3134 = vmul.f32 %v988, %v2215
    %v3135 = vmul.f32 %v989, %v2219
    %v3136 = vmul.f32 %v990, %v2215
    %v3137 = vmul.f32 %v991, %v2219
    %v3138 = vmul.f32 %v992, %v2215
    %v3139 = vmul.f32 %v993, %v2219
    %v3140 = vmul.f32 %v994, %v2215
    %v3141 = vmul.f32 %v995, %v2219
    %v3142 = vmul.f32 %v996, %v2215
    %v3143 = vmul.f32 %v997, %v2219
    %v3144 = vmul.f32 %v998, %v2215
    %v3145 = vmul.f32 %v999, %v2219
    %v3146 = vmul.f32 %v1000, %v2215
    %v3147 = vmul.f32 %v1001, %v2219
    %v3148 = vmul.f32 %v1002, %v2215
    %v3149 = vmul.f32 %v1003, %v2219
    %v3150 = vmul.f32 %v1004, %v2215
    %v3151 = vmul.f32 %v1005, %v2219
    %v3152 = vmul.f32 %v1006, %v2215
    %v3153 = vmul.f32 %v1007, %v2219
    %v3154 = vmul.f32 %v1008, %v2215
    %v3155 = vmul.f32 %v1009, %v2219
    %v3156 = vmul.f32 %v1010, %v2215
    %v3157 = vmul.f32 %v1011, %v2219
    %v3158 = vmul.f32 %v1012, %v2215
    %v3159 = vmul.f32 %v1013, %v2219
    %v3160 = vmul.f32 %v1014, %v2215
    %v3161 = vmul.f32 %v1015, %v2219
    %v3162 = vmul.f32 %v1016, %v2215
    %v3163 = vmul.f32 %v1017, %v2219
    %v3164 = vmul.f32 %v1018, %v2215
    %v3165 = vmul.f32 %v1019, %v2219
    %v3166 = vmul.f32 %v1020, %v2215
    %v3167 = vmul.f32 %v1021, %v2219
    %v3168 = vmul.f32 %v1022, %v2215
    %v3169 = vmul.f32 %v1023, %v2219
    %v3170 = vmul.f32 %v1024, %v2215
    %v3171 = vmul.f32 %v1025, %v2219
    %v3172 = vmul.f32 %v1026, %v2215
    %v3173 = vmul.f32 %v1027, %v2219
    %v3174 = vmul.f32 %v1028, %v2215
    %v3175 = vmul.f32 %v1029, %v2219
    %v3176 = vmul.f32 %v1030, %v2215
    %v3177 = vmul.f32 %v1031, %v2219
    %v3178 = vmul.f32 %v1032, %v2215
    %v3179 = vmul.f32 %v1033, %v2219
    %v3180 = vmul.f32 %v1034, %v2215
    %v3181 = vmul.f32 %v1035, %v2219
    %v3182 = vmul.f32 %v1036, %v2215
    %v3183 = vmul.f32 %v1037, %v2219
    %v3184 = vmul.f32 %v1038, %v2215
    %v3185 = vmul.f32 %v1039, %v2219
    %v3186 = vmul.f32 %v1040, %v2215
    %v3187 = vmul.f32 %v1041, %v2219
    %v3188 = vmul.f32 %v1042, %v2215
    %v3189 = vmul.f32 %v1043, %v2219
    %v3190 = vmul.f32 %v1044, %v2215
    %v3191 = vmul.f32 %v1045, %v2219
    %v3192 = vmul.f32 %v1046, %v2215
    %v3193 = vmul.f32 %v1047, %v2219
    %v3194 = vmul.f32 %v1048, %v2215
    %v3195 = vmul.f32 %v1049, %v2219
    %v3196 = vmul.f32 %v1050, %v2215
    %v3197 = vmul.f32 %v1051, %v2219
    %v3198 = vmul.f32 %v1052, %v2215
    %v3199 = vmul.f32 %v1053, %v2219
    %v3200 = vmul.f32 %v1054, %v2215
    %v3201 = vmul.f32 %v1055, %v2219
    %v3202 = vmul.f32 %v1056, %v2215
    %v3203 = vmul.f32 %v1057, %v2219
    %v3204 = vmul.f32 %v1058, %v2215
    %v3205 = vmul.f32 %v1059, %v2219
    %v3206 = vmul.f32 %v1060, %v2215
    %v3207 = vmul.f32 %v1061, %v2219
    %v3208 = vmul.f32 %v1062, %v2215
    %v3209 = vmul.f32 %v1063, %v2219
    %v3210 = vmul.f32 %v1064, %v2215
    %v3211 = vmul.f32 %v1065, %v2219
    %v3212 = vmul.f32 %v1066, %v2215
    %v3213 = vmul.f32 %v1067, %v2219
    %v3214 = vmul.f32 %v1068, %v2215
    %v3215 = vmul.f32 %v1069, %v2219
    %v3216 = vmul.f32 %v1070, %v2215
    %v3217 = vmul.f32 %v1071, %v2219
    %v3218 = vmul.f32 %v1072, %v2215
    %v3219 = vmul.f32 %v1073, %v2219
    %v3220 = vmul.f32 %v1074, %v2215
    %v3221 = vmul.f32 %v1075, %v2219
    %v3222 = vmul.f32 %v1076, %v2215
    %v3223 = vmul.f32 %v1077, %v2219
    %v3224 = vmul.f32 %v1078, %v2215
    %v3225 = vmul.f32 %v1079, %v2219
    %v3226 = vmul.f32 %v1080, %v2215
    %v3227 = vmul.f32 %v1081, %v2219
    %v3228 = vmul.f32 %v1082, %v2215
    %v3229 = vmul.f32 %v1083, %v2219
    %v3230 = vmul.f32 %v1084, %v2215
    %v3231 = vmul.f32 %v1085, %v2219
    %v3232 = vmul.f32 %v1086, %v2215
    %v3233 = vmul.f32 %v1087, %v2219
    %v3234 = vmul.f32 %v1088, %v2215
    %v3235 = vmul.f32 %v1089, %v2219
    %v3236 = vmul.f32 %v1090, %v2215
    %v3237 = vmul.f32 %v1091, %v2219
    %v3238 = vmul.f32 %v1092, %v2215
    %v3239 = vmul.f32 %v1093, %v2219
    %v3240 = vmul.f32 %v1094, %v2215
    %v3241 = vmul.f32 %v1095, %v2219
    %v3242 = vmul.f32 %v1096, %v2215
    %v3243 = vmul.f32 %v1097, %v2219
    %3244 = vst [vmem:[#allocation10] sm:$0xff] %v2220
    %3245 = vst [vmem:[#allocation10 + $0x8] sm:$0xff] %v2221
    %3246 = vst [vmem:[#allocation10 + $0x10] sm:$0xff] %v2222
    %3247 = vst [vmem:[#allocation10 + $0x18] sm:$0xff] %v2223
    %3248 = vst [vmem:[#allocation10 + $0x20] sm:$0xff] %v2224
    %3249 = vst [vmem:[#allocation10 + $0x28] sm:$0xff] %v2225
    %3250 = vst [vmem:[#allocation10 + $0x30] sm:$0xff] %v2226
    %3251 = vst [vmem:[#allocation10 + $0x38] sm:$0xff] %v2227
    %3252 = vst [vmem:[#allocation10 + $0x40] sm:$0xff] %v2228
    %3253 = vst [vmem:[#allocation10 + $0x48] sm:$0xff] %v2229
    %3254 = vst [vmem:[#allocation10 + $0x50] sm:$0xff] %v2230
    %3255 = vst [vmem:[#allocation10 + $0x58] sm:$0xff] %v2231
    %3256 = vst [vmem:[#allocation10 + $0x60] sm:$0xff] %v2232
    %3257 = vst [vmem:[#allocation10 + $0x68] sm:$0xff] %v2233
    %3258 = vst [vmem:[#allocation10 + $0x70] sm:$0xff] %v2234
    %3259 = vst [vmem:[#allocation10 + $0x78] sm:$0xff] %v2235
    %3260 = vst [vmem:[#allocation10 + $0x80] sm:$0xff] %v2236
    %3261 = vst [vmem:[#allocation10 + $0x88] sm:$0xff] %v2237
    %3262 = vst [vmem:[#allocation10 + $0x90] sm:$0xff] %v2238
    %3263 = vst [vmem:[#allocation10 + $0x98] sm:$0xff] %v2239
    %3264 = vst [vmem:[#allocation10 + $0xa0] sm:$0xff] %v2240
    %3265 = vst [vmem:[#allocation10 + $0xa8] sm:$0xff] %v2241
    %3266 = vst [vmem:[#allocation10 + $0xb0] sm:$0xff] %v2242
    %3267 = vst [vmem:[#allocation10 + $0xb8] sm:$0xff] %v2243
    %3268 = vst [vmem:[#allocation10 + $0xc0] sm:$0xff] %v2244
    %3269 = vst [vmem:[#allocation10 + $0xc8] sm:$0xff] %v2245
    %3270 = vst [vmem:[#allocation10 + $0xd0] sm:$0xff] %v2246
    %3271 = vst [vmem:[#allocation10 + $0xd8] sm:$0xff] %v2247
    %3272 = vst [vmem:[#allocation10 + $0xe0] sm:$0xff] %v2248
    %3273 = vst [vmem:[#allocation10 + $0xe8] sm:$0xff] %v2249
    %3274 = vst [vmem:[#allocation10 + $0xf0] sm:$0xff] %v2250
    %3275 = vst [vmem:[#allocation10 + $0xf8] sm:$0xff] %v2251
    %3276 = vst [vmem:[#allocation10 + $0x100] sm:$0xff] %v2252
    %3277 = vst [vmem:[#allocation10 + $0x108] sm:$0xff] %v2253
    %3278 = vst [vmem:[#allocation10 + $0x110] sm:$0xff] %v2254
    %3279 = vst [vmem:[#allocation10 + $0x118] sm:$0xff] %v2255
    %3280 = vst [vmem:[#allocation10 + $0x120] sm:$0xff] %v2256
    %3281 = vst [vmem:[#allocation10 + $0x128] sm:$0xff] %v2257
    %3282 = vst [vmem:[#allocation10 + $0x130] sm:$0xff] %v2258
    %3283 = vst [vmem:[#allocation10 + $0x138] sm:$0xff] %v2259
    %3284 = vst [vmem:[#allocation10 + $0x140] sm:$0xff] %v2260
    %3285 = vst [vmem:[#allocation10 + $0x148] sm:$0xff] %v2261
    %3286 = vst [vmem:[#allocation10 + $0x150] sm:$0xff] %v2262
    %3287 = vst [vmem:[#allocation10 + $0x158] sm:$0xff] %v2263
    %3288 = vst [vmem:[#allocation10 + $0x160] sm:$0xff] %v2264
    %3289 = vst [vmem:[#allocation10 + $0x168] sm:$0xff] %v2265
    %3290 = vst [vmem:[#allocation10 + $0x170] sm:$0xff] %v2266
    %3291 = vst [vmem:[#allocation10 + $0x178] sm:$0xff] %v2267
    %3292 = vst [vmem:[#allocation10 + $0x180] sm:$0xff] %v2268
    %3293 = vst [vmem:[#allocation10 + $0x188] sm:$0xff] %v2269
    %3294 = vst [vmem:[#allocation10 + $0x190] sm:$0xff] %v2270
    %3295 = vst [vmem:[#allocation10 + $0x198] sm:$0xff] %v2271
    %3296 = vst [vmem:[#allocation10 + $0x1a0] sm:$0xff] %v2272
    %3297 = vst [vmem:[#allocation10 + $0x1a8] sm:$0xff] %v2273
    %3298 = vst [vmem:[#allocation10 + $0x1b0] sm:$0xff] %v2274
    %3299 = vst [vmem:[#allocation10 + $0x1b8] sm:$0xff] %v2275
    %3300 = vst [vmem:[#allocation10 + $0x1c0] sm:$0xff] %v2276
    %3301 = vst [vmem:[#allocation10 + $0x1c8] sm:$0xff] %v2277
    %3302 = vst [vmem:[#allocation10 + $0x1d0] sm:$0xff] %v2278
    %3303 = vst [vmem:[#allocation10 + $0x1d8] sm:$0xff] %v2279
    %3304 = vst [vmem:[#allocation10 + $0x1e0] sm:$0xff] %v2280
    %3305 = vst [vmem:[#allocation10 + $0x1e8] sm:$0xff] %v2281
    %3306 = vst [vmem:[#allocation10 + $0x1f0] sm:$0xff] %v2282
    %3307 = vst [vmem:[#allocation10 + $0x1f8] sm:$0xff] %v2283
    %3308 = vst [vmem:[#allocation10 + $0x200] sm:$0xff] %v2284
    %3309 = vst [vmem:[#allocation10 + $0x208] sm:$0xff] %v2285
    %3310 = vst [vmem:[#allocation10 + $0x210] sm:$0xff] %v2286
    %3311 = vst [vmem:[#allocation10 + $0x218] sm:$0xff] %v2287
    %3312 = vst [vmem:[#allocation10 + $0x220] sm:$0xff] %v2288
    %3313 = vst [vmem:[#allocation10 + $0x228] sm:$0xff] %v2289
    %3314 = vst [vmem:[#allocation10 + $0x230] sm:$0xff] %v2290
    %3315 = vst [vmem:[#allocation10 + $0x238] sm:$0xff] %v2291
    %3316 = vst [vmem:[#allocation10 + $0x240] sm:$0xff] %v2292
    %3317 = vst [vmem:[#allocation10 + $0x248] sm:$0xff] %v2293
    %3318 = vst [vmem:[#allocation10 + $0x250] sm:$0xff] %v2294
    %3319 = vst [vmem:[#allocation10 + $0x258] sm:$0xff] %v2295
    %3320 = vst [vmem:[#allocation10 + $0x260] sm:$0xff] %v2296
    %3321 = vst [vmem:[#allocation10 + $0x268] sm:$0xff] %v2297
    %3322 = vst [vmem:[#allocation10 + $0x270] sm:$0xff] %v2298
    %3323 = vst [vmem:[#allocation10 + $0x278] sm:$0xff] %v2299
    %3324 = vst [vmem:[#allocation10 + $0x280] sm:$0xff] %v2300
    %3325 = vst [vmem:[#allocation10 + $0x288] sm:$0xff] %v2301
    %3326 = vst [vmem:[#allocation10 + $0x290] sm:$0xff] %v2302
    %3327 = vst [vmem:[#allocation10 + $0x298] sm:$0xff] %v2303
    %3328 = vst [vmem:[#allocation10 + $0x2a0] sm:$0xff] %v2304
    %3329 = vst [vmem:[#allocation10 + $0x2a8] sm:$0xff] %v2305
    %3330 = vst [vmem:[#allocation10 + $0x2b0] sm:$0xff] %v2306
    %3331 = vst [vmem:[#allocation10 + $0x2b8] sm:$0xff] %v2307
    %3332 = vst [vmem:[#allocation10 + $0x2c0] sm:$0xff] %v2308
    %3333 = vst [vmem:[#allocation10 + $0x2c8] sm:$0xff] %v2309
    %3334 = vst [vmem:[#allocation10 + $0x2d0] sm:$0xff] %v2310
    %3335 = vst [vmem:[#allocation10 + $0x2d8] sm:$0xff] %v2311
    %3336 = vst [vmem:[#allocation10 + $0x2e0] sm:$0xff] %v2312
    %3337 = vst [vmem:[#allocation10 + $0x2e8] sm:$0xff] %v2313
    %3338 = vst [vmem:[#allocation10 + $0x2f0] sm:$0xff] %v2314
    %3339 = vst [vmem:[#allocation10 + $0x2f8] sm:$0xff] %v2315
    %3340 = vst [vmem:[#allocation10 + $0x300] sm:$0xff] %v2316
    %3341 = vst [vmem:[#allocation10 + $0x308] sm:$0xff] %v2317
    %3342 = vst [vmem:[#allocation10 + $0x310] sm:$0xff] %v2318
    %3343 = vst [vmem:[#allocation10 + $0x318] sm:$0xff] %v2319
    %3344 = vst [vmem:[#allocation10 + $0x320] sm:$0xff] %v2320
    %3345 = vst [vmem:[#allocation10 + $0x328] sm:$0xff] %v2321
    %3346 = vst [vmem:[#allocation10 + $0x330] sm:$0xff] %v2322
    %3347 = vst [vmem:[#allocation10 + $0x338] sm:$0xff] %v2323
    %3348 = vst [vmem:[#allocation10 + $0x340] sm:$0xff] %v2324
    %3349 = vst [vmem:[#allocation10 + $0x348] sm:$0xff] %v2325
    %3350 = vst [vmem:[#allocation10 + $0x350] sm:$0xff] %v2326
    %3351 = vst [vmem:[#allocation10 + $0x358] sm:$0xff] %v2327
    %3352 = vst [vmem:[#allocation10 + $0x360] sm:$0xff] %v2328
    %3353 = vst [vmem:[#allocation10 + $0x368] sm:$0xff] %v2329
    %3354 = vst [vmem:[#allocation10 + $0x370] sm:$0xff] %v2330
    %3355 = vst [vmem:[#allocation10 + $0x378] sm:$0xff] %v2331
    %3356 = vst [vmem:[#allocation10 + $0x380] sm:$0xff] %v2332
    %3357 = vst [vmem:[#allocation10 + $0x388] sm:$0xff] %v2333
    %3358 = vst [vmem:[#allocation10 + $0x390] sm:$0xff] %v2334
    %3359 = vst [vmem:[#allocation10 + $0x398] sm:$0xff] %v2335
    %3360 = vst [vmem:[#allocation10 + $0x3a0] sm:$0xff] %v2336
    %3361 = vst [vmem:[#allocation10 + $0x3a8] sm:$0xff] %v2337
    %3362 = vst [vmem:[#allocation10 + $0x3b0] sm:$0xff] %v2338
    %3363 = vst [vmem:[#allocation10 + $0x3b8] sm:$0xff] %v2339
    %3364 = vst [vmem:[#allocation10 + $0x3c0] sm:$0xff] %v2340
    %3365 = vst [vmem:[#allocation10 + $0x3c8] sm:$0xff] %v2341
    %3366 = vst [vmem:[#allocation10 + $0x3d0] sm:$0xff] %v2342
    %3367 = vst [vmem:[#allocation10 + $0x3d8] sm:$0xff] %v2343
    %3368 = vst [vmem:[#allocation10 + $0x3e0] sm:$0xff] %v2344
    %3369 = vst [vmem:[#allocation10 + $0x3e8] sm:$0xff] %v2345
    %3370 = vst [vmem:[#allocation10 + $0x3f0] sm:$0xff] %v2346
    %3371 = vst [vmem:[#allocation10 + $0x3f8] sm:$0xff] %v2347
    %3372 = vst [vmem:[#allocation10 + $0x400] sm:$0xff] %v2348
    %3373 = vst [vmem:[#allocation10 + $0x408] sm:$0xff] %v2349
    %3374 = vst [vmem:[#allocation10 + $0x410] sm:$0xff] %v2350
    %3375 = vst [vmem:[#allocation10 + $0x418] sm:$0xff] %v2351
    %3376 = vst [vmem:[#allocation10 + $0x420] sm:$0xff] %v2352
    %3377 = vst [vmem:[#allocation10 + $0x428] sm:$0xff] %v2353
    %3378 = vst [vmem:[#allocation10 + $0x430] sm:$0xff] %v2354
    %3379 = vst [vmem:[#allocation10 + $0x438] sm:$0xff] %v2355
    %3380 = vst [vmem:[#allocation10 + $0x440] sm:$0xff] %v2356
    %3381 = vst [vmem:[#allocation10 + $0x448] sm:$0xff] %v2357
    %3382 = vst [vmem:[#allocation10 + $0x450] sm:$0xff] %v2358
    %3383 = vst [vmem:[#allocation10 + $0x458] sm:$0xff] %v2359
    %3384 = vst [vmem:[#allocation10 + $0x460] sm:$0xff] %v2360
    %3385 = vst [vmem:[#allocation10 + $0x468] sm:$0xff] %v2361
    %3386 = vst [vmem:[#allocation10 + $0x470] sm:$0xff] %v2362
    %3387 = vst [vmem:[#allocation10 + $0x478] sm:$0xff] %v2363
    %3388 = vst [vmem:[#allocation10 + $0x480] sm:$0xff] %v2364
    %3389 = vst [vmem:[#allocation10 + $0x488] sm:$0xff] %v2365
    %3390 = vst [vmem:[#allocation10 + $0x490] sm:$0xff] %v2366
    %3391 = vst [vmem:[#allocation10 + $0x498] sm:$0xff] %v2367
    %3392 = vst [vmem:[#allocation10 + $0x4a0] sm:$0xff] %v2368
    %3393 = vst [vmem:[#allocation10 + $0x4a8] sm:$0xff] %v2369
    %3394 = vst [vmem:[#allocation10 + $0x4b0] sm:$0xff] %v2370
    %3395 = vst [vmem:[#allocation10 + $0x4b8] sm:$0xff] %v2371
    %3396 = vst [vmem:[#allocation10 + $0x4c0] sm:$0xff] %v2372
    %3397 = vst [vmem:[#allocation10 + $0x4c8] sm:$0xff] %v2373
    %3398 = vst [vmem:[#allocation10 + $0x4d0] sm:$0xff] %v2374
    %3399 = vst [vmem:[#allocation10 + $0x4d8] sm:$0xff] %v2375
    %3400 = vst [vmem:[#allocation10 + $0x4e0] sm:$0xff] %v2376
    %3401 = vst [vmem:[#allocation10 + $0x4e8] sm:$0xff] %v2377
    %3402 = vst [vmem:[#allocation10 + $0x4f0] sm:$0xff] %v2378
    %3403 = vst [vmem:[#allocation10 + $0x4f8] sm:$0xff] %v2379
    %3404 = vst [vmem:[#allocation10 + $0x500] sm:$0xff] %v2380
    %3405 = vst [vmem:[#allocation10 + $0x508] sm:$0xff] %v2381
    %3406 = vst [vmem:[#allocation10 + $0x510] sm:$0xff] %v2382
    %3407 = vst [vmem:[#allocation10 + $0x518] sm:$0xff] %v2383
    %3408 = vst [vmem:[#allocation10 + $0x520] sm:$0xff] %v2384
    %3409 = vst [vmem:[#allocation10 + $0x528] sm:$0xff] %v2385
    %3410 = vst [vmem:[#allocation10 + $0x530] sm:$0xff] %v2386
    %3411 = vst [vmem:[#allocation10 + $0x538] sm:$0xff] %v2387
    %3412 = vst [vmem:[#allocation10 + $0x540] sm:$0xff] %v2388
    %3413 = vst [vmem:[#allocation10 + $0x548] sm:$0xff] %v2389
    %3414 = vst [vmem:[#allocation10 + $0x550] sm:$0xff] %v2390
    %3415 = vst [vmem:[#allocation10 + $0x558] sm:$0xff] %v2391
    %3416 = vst [vmem:[#allocation10 + $0x560] sm:$0xff] %v2392
    %3417 = vst [vmem:[#allocation10 + $0x568] sm:$0xff] %v2393
    %3418 = vst [vmem:[#allocation10 + $0x570] sm:$0xff] %v2394
    %3419 = vst [vmem:[#allocation10 + $0x578] sm:$0xff] %v2395
    %3420 = vst [vmem:[#allocation10 + $0x580] sm:$0xff] %v2396
    %3421 = vst [vmem:[#allocation10 + $0x588] sm:$0xff] %v2397
    %3422 = vst [vmem:[#allocation10 + $0x590] sm:$0xff] %v2398
    %3423 = vst [vmem:[#allocation10 + $0x598] sm:$0xff] %v2399
    %3424 = vst [vmem:[#allocation10 + $0x5a0] sm:$0xff] %v2400
    %3425 = vst [vmem:[#allocation10 + $0x5a8] sm:$0xff] %v2401
    %3426 = vst [vmem:[#allocation10 + $0x5b0] sm:$0xff] %v2402
    %3427 = vst [vmem:[#allocation10 + $0x5b8] sm:$0xff] %v2403
    %3428 = vst [vmem:[#allocation10 + $0x5c0] sm:$0xff] %v2404
    %3429 = vst [vmem:[#allocation10 + $0x5c8] sm:$0xff] %v2405
    %3430 = vst [vmem:[#allocation10 + $0x5d0] sm:$0xff] %v2406
    %3431 = vst [vmem:[#allocation10 + $0x5d8] sm:$0xff] %v2407
    %3432 = vst [vmem:[#allocation10 + $0x5e0] sm:$0xff] %v2408
    %3433 = vst [vmem:[#allocation10 + $0x5e8] sm:$0xff] %v2409
    %3434 = vst [vmem:[#allocation10 + $0x5f0] sm:$0xff] %v2410
    %3435 = vst [vmem:[#allocation10 + $0x5f8] sm:$0xff] %v2411
    %3436 = vst [vmem:[#allocation10 + $0x600] sm:$0xff] %v2412
    %3437 = vst [vmem:[#allocation10 + $0x608] sm:$0xff] %v2413
    %3438 = vst [vmem:[#allocation10 + $0x610] sm:$0xff] %v2414
    %3439 = vst [vmem:[#allocation10 + $0x618] sm:$0xff] %v2415
    %3440 = vst [vmem:[#allocation10 + $0x620] sm:$0xff] %v2416
    %3441 = vst [vmem:[#allocation10 + $0x628] sm:$0xff] %v2417
    %3442 = vst [vmem:[#allocation10 + $0x630] sm:$0xff] %v2418
    %3443 = vst [vmem:[#allocation10 + $0x638] sm:$0xff] %v2419
    %3444 = vst [vmem:[#allocation10 + $0x640] sm:$0xff] %v2420
    %3445 = vst [vmem:[#allocation10 + $0x648] sm:$0xff] %v2421
    %3446 = vst [vmem:[#allocation10 + $0x650] sm:$0xff] %v2422
    %3447 = vst [vmem:[#allocation10 + $0x658] sm:$0xff] %v2423
    %3448 = vst [vmem:[#allocation10 + $0x660] sm:$0xff] %v2424
    %3449 = vst [vmem:[#allocation10 + $0x668] sm:$0xff] %v2425
    %3450 = vst [vmem:[#allocation10 + $0x670] sm:$0xff] %v2426
    %3451 = vst [vmem:[#allocation10 + $0x678] sm:$0xff] %v2427
    %3452 = vst [vmem:[#allocation10 + $0x680] sm:$0xff] %v2428
    %3453 = vst [vmem:[#allocation10 + $0x688] sm:$0xff] %v2429
    %3454 = vst [vmem:[#allocation10 + $0x690] sm:$0xff] %v2430
    %3455 = vst [vmem:[#allocation10 + $0x698] sm:$0xff] %v2431
    %3456 = vst [vmem:[#allocation10 + $0x6a0] sm:$0xff] %v2432
    %3457 = vst [vmem:[#allocation10 + $0x6a8] sm:$0xff] %v2433
    %3458 = vst [vmem:[#allocation10 + $0x6b0] sm:$0xff] %v2434
    %3459 = vst [vmem:[#allocation10 + $0x6b8] sm:$0xff] %v2435
    %3460 = vst [vmem:[#allocation10 + $0x6c0] sm:$0xff] %v2436
    %3461 = vst [vmem:[#allocation10 + $0x6c8] sm:$0xff] %v2437
    %3462 = vst [vmem:[#allocation10 + $0x6d0] sm:$0xff] %v2438
    %3463 = vst [vmem:[#allocation10 + $0x6d8] sm:$0xff] %v2439
    %3464 = vst [vmem:[#allocation10 + $0x6e0] sm:$0xff] %v2440
    %3465 = vst [vmem:[#allocation10 + $0x6e8] sm:$0xff] %v2441
    %3466 = vst [vmem:[#allocation10 + $0x6f0] sm:$0xff] %v2442
    %3467 = vst [vmem:[#allocation10 + $0x6f8] sm:$0xff] %v2443
    %3468 = vst [vmem:[#allocation10 + $0x700] sm:$0xff] %v2444
    %3469 = vst [vmem:[#allocation10 + $0x708] sm:$0xff] %v2445
    %3470 = vst [vmem:[#allocation10 + $0x710] sm:$0xff] %v2446
    %3471 = vst [vmem:[#allocation10 + $0x718] sm:$0xff] %v2447
    %3472 = vst [vmem:[#allocation10 + $0x720] sm:$0xff] %v2448
    %3473 = vst [vmem:[#allocation10 + $0x728] sm:$0xff] %v2449
    %3474 = vst [vmem:[#allocation10 + $0x730] sm:$0xff] %v2450
    %3475 = vst [vmem:[#allocation10 + $0x738] sm:$0xff] %v2451
    %3476 = vst [vmem:[#allocation10 + $0x740] sm:$0xff] %v2452
    %3477 = vst [vmem:[#allocation10 + $0x748] sm:$0xff] %v2453
    %3478 = vst [vmem:[#allocation10 + $0x750] sm:$0xff] %v2454
    %3479 = vst [vmem:[#allocation10 + $0x758] sm:$0xff] %v2455
    %3480 = vst [vmem:[#allocation10 + $0x760] sm:$0xff] %v2456
    %3481 = vst [vmem:[#allocation10 + $0x768] sm:$0xff] %v2457
    %3482 = vst [vmem:[#allocation10 + $0x770] sm:$0xff] %v2458
    %3483 = vst [vmem:[#allocation10 + $0x778] sm:$0xff] %v2459
    %3484 = vst [vmem:[#allocation10 + $0x780] sm:$0xff] %v2460
    %3485 = vst [vmem:[#allocation10 + $0x788] sm:$0xff] %v2461
    %3486 = vst [vmem:[#allocation10 + $0x790] sm:$0xff] %v2462
    %3487 = vst [vmem:[#allocation10 + $0x798] sm:$0xff] %v2463
    %3488 = vst [vmem:[#allocation10 + $0x7a0] sm:$0xff] %v2464
    %3489 = vst [vmem:[#allocation10 + $0x7a8] sm:$0xff] %v2465
    %3490 = vst [vmem:[#allocation10 + $0x7b0] sm:$0xff] %v2466
    %3491 = vst [vmem:[#allocation10 + $0x7b8] sm:$0xff] %v2467
    %3492 = vst [vmem:[#allocation10 + $0x7c0] sm:$0xff] %v2468
    %3493 = vst [vmem:[#allocation10 + $0x7c8] sm:$0xff] %v2469
    %3494 = vst [vmem:[#allocation10 + $0x7d0] sm:$0xff] %v2470
    %3495 = vst [vmem:[#allocation10 + $0x7d8] sm:$0xff] %v2471
    %3496 = vst [vmem:[#allocation10 + $0x7e0] sm:$0xff] %v2472
    %3497 = vst [vmem:[#allocation10 + $0x7e8] sm:$0xff] %v2473
    %3498 = vst [vmem:[#allocation10 + $0x7f0] sm:$0xff] %v2474
    %3499 = vst [vmem:[#allocation10 + $0x7f8] sm:$0xff] %v2475
    %3500 = vst [vmem:[#allocation10 + $0x800] sm:$0xff] %v2476
    %3501 = vst [vmem:[#allocation10 + $0x808] sm:$0xff] %v2477
    %3502 = vst [vmem:[#allocation10 + $0x810] sm:$0xff] %v2478
    %3503 = vst [vmem:[#allocation10 + $0x818] sm:$0xff] %v2479
    %3504 = vst [vmem:[#allocation10 + $0x820] sm:$0xff] %v2480
    %3505 = vst [vmem:[#allocation10 + $0x828] sm:$0xff] %v2481
    %3506 = vst [vmem:[#allocation10 + $0x830] sm:$0xff] %v2482
    %3507 = vst [vmem:[#allocation10 + $0x838] sm:$0xff] %v2483
    %3508 = vst [vmem:[#allocation10 + $0x840] sm:$0xff] %v2484
    %3509 = vst [vmem:[#allocation10 + $0x848] sm:$0xff] %v2485
    %3510 = vst [vmem:[#allocation10 + $0x850] sm:$0xff] %v2486
    %3511 = vst [vmem:[#allocation10 + $0x858] sm:$0xff] %v2487
    %3512 = vst [vmem:[#allocation10 + $0x860] sm:$0xff] %v2488
    %3513 = vst [vmem:[#allocation10 + $0x868] sm:$0xff] %v2489
    %3514 = vst [vmem:[#allocation10 + $0x870] sm:$0xff] %v2490
    %3515 = vst [vmem:[#allocation10 + $0x878] sm:$0xff] %v2491
    %3516 = vst [vmem:[#allocation10 + $0x880] sm:$0xff] %v2492
    %3517 = vst [vmem:[#allocation10 + $0x888] sm:$0xff] %v2493
    %3518 = vst [vmem:[#allocation10 + $0x890] sm:$0xff] %v2494
    %3519 = vst [vmem:[#allocation10 + $0x898] sm:$0xff] %v2495
    %3520 = vst [vmem:[#allocation10 + $0x8a0] sm:$0xff] %v2496
    %3521 = vst [vmem:[#allocation10 + $0x8a8] sm:$0xff] %v2497
    %3522 = vst [vmem:[#allocation10 + $0x8b0] sm:$0xff] %v2498
    %3523 = vst [vmem:[#allocation10 + $0x8b8] sm:$0xff] %v2499
    %3524 = vst [vmem:[#allocation10 + $0x8c0] sm:$0xff] %v2500
    %3525 = vst [vmem:[#allocation10 + $0x8c8] sm:$0xff] %v2501
    %3526 = vst [vmem:[#allocation10 + $0x8d0] sm:$0xff] %v2502
    %3527 = vst [vmem:[#allocation10 + $0x8d8] sm:$0xff] %v2503
    %3528 = vst [vmem:[#allocation10 + $0x8e0] sm:$0xff] %v2504
    %3529 = vst [vmem:[#allocation10 + $0x8e8] sm:$0xff] %v2505
    %3530 = vst [vmem:[#allocation10 + $0x8f0] sm:$0xff] %v2506
    %3531 = vst [vmem:[#allocation10 + $0x8f8] sm:$0xff] %v2507
    %3532 = vst [vmem:[#allocation10 + $0x900] sm:$0xff] %v2508
    %3533 = vst [vmem:[#allocation10 + $0x908] sm:$0xff] %v2509
    %3534 = vst [vmem:[#allocation10 + $0x910] sm:$0xff] %v2510
    %3535 = vst [vmem:[#allocation10 + $0x918] sm:$0xff] %v2511
    %3536 = vst [vmem:[#allocation10 + $0x920] sm:$0xff] %v2512
    %3537 = vst [vmem:[#allocation10 + $0x928] sm:$0xff] %v2513
    %3538 = vst [vmem:[#allocation10 + $0x930] sm:$0xff] %v2514
    %3539 = vst [vmem:[#allocation10 + $0x938] sm:$0xff] %v2515
    %3540 = vst [vmem:[#allocation10 + $0x940] sm:$0xff] %v2516
    %3541 = vst [vmem:[#allocation10 + $0x948] sm:$0xff] %v2517
    %3542 = vst [vmem:[#allocation10 + $0x950] sm:$0xff] %v2518
    %3543 = vst [vmem:[#allocation10 + $0x958] sm:$0xff] %v2519
    %3544 = vst [vmem:[#allocation10 + $0x960] sm:$0xff] %v2520
    %3545 = vst [vmem:[#allocation10 + $0x968] sm:$0xff] %v2521
    %3546 = vst [vmem:[#allocation10 + $0x970] sm:$0xff] %v2522
    %3547 = vst [vmem:[#allocation10 + $0x978] sm:$0xff] %v2523
    %3548 = vst [vmem:[#allocation10 + $0x980] sm:$0xff] %v2524
    %3549 = vst [vmem:[#allocation10 + $0x988] sm:$0xff] %v2525
    %3550 = vst [vmem:[#allocation10 + $0x990] sm:$0xff] %v2526
    %3551 = vst [vmem:[#allocation10 + $0x998] sm:$0xff] %v2527
    %3552 = vst [vmem:[#allocation10 + $0x9a0] sm:$0xff] %v2528
    %3553 = vst [vmem:[#allocation10 + $0x9a8] sm:$0xff] %v2529
    %3554 = vst [vmem:[#allocation10 + $0x9b0] sm:$0xff] %v2530
    %3555 = vst [vmem:[#allocation10 + $0x9b8] sm:$0xff] %v2531
    %3556 = vst [vmem:[#allocation10 + $0x9c0] sm:$0xff] %v2532
    %3557 = vst [vmem:[#allocation10 + $0x9c8] sm:$0xff] %v2533
    %3558 = vst [vmem:[#allocation10 + $0x9d0] sm:$0xff] %v2534
    %3559 = vst [vmem:[#allocation10 + $0x9d8] sm:$0xff] %v2535
    %3560 = vst [vmem:[#allocation10 + $0x9e0] sm:$0xff] %v2536
    %3561 = vst [vmem:[#allocation10 + $0x9e8] sm:$0xff] %v2537
    %3562 = vst [vmem:[#allocation10 + $0x9f0] sm:$0xff] %v2538
    %3563 = vst [vmem:[#allocation10 + $0x9f8] sm:$0xff] %v2539
    %3564 = vst [vmem:[#allocation10 + $0xa00] sm:$0xff] %v2540
    %3565 = vst [vmem:[#allocation10 + $0xa08] sm:$0xff] %v2541
    %3566 = vst [vmem:[#allocation10 + $0xa10] sm:$0xff] %v2542
    %3567 = vst [vmem:[#allocation10 + $0xa18] sm:$0xff] %v2543
    %3568 = vst [vmem:[#allocation10 + $0xa20] sm:$0xff] %v2544
    %3569 = vst [vmem:[#allocation10 + $0xa28] sm:$0xff] %v2545
    %3570 = vst [vmem:[#allocation10 + $0xa30] sm:$0xff] %v2546
    %3571 = vst [vmem:[#allocation10 + $0xa38] sm:$0xff] %v2547
    %3572 = vst [vmem:[#allocation10 + $0xa40] sm:$0xff] %v2548
    %3573 = vst [vmem:[#allocation10 + $0xa48] sm:$0xff] %v2549
    %3574 = vst [vmem:[#allocation10 + $0xa50] sm:$0xff] %v2550
    %3575 = vst [vmem:[#allocation10 + $0xa58] sm:$0xff] %v2551
    %3576 = vst [vmem:[#allocation10 + $0xa60] sm:$0xff] %v2552
    %3577 = vst [vmem:[#allocation10 + $0xa68] sm:$0xff] %v2553
    %3578 = vst [vmem:[#allocation10 + $0xa70] sm:$0xff] %v2554
    %3579 = vst [vmem:[#allocation10 + $0xa78] sm:$0xff] %v2555
    %3580 = vst [vmem:[#allocation10 + $0xa80] sm:$0xff] %v2556
    %3581 = vst [vmem:[#allocation10 + $0xa88] sm:$0xff] %v2557
    %3582 = vst [vmem:[#allocation10 + $0xa90] sm:$0xff] %v2558
    %3583 = vst [vmem:[#allocation10 + $0xa98] sm:$0xff] %v2559
    %3584 = vst [vmem:[#allocation10 + $0xaa0] sm:$0xff] %v2560
    %3585 = vst [vmem:[#allocation10 + $0xaa8] sm:$0xff] %v2561
    %3586 = vst [vmem:[#allocation10 + $0xab0] sm:$0xff] %v2562
    %3587 = vst [vmem:[#allocation10 + $0xab8] sm:$0xff] %v2563
    %3588 = vst [vmem:[#allocation10 + $0xac0] sm:$0xff] %v2564
    %3589 = vst [vmem:[#allocation10 + $0xac8] sm:$0xff] %v2565
    %3590 = vst [vmem:[#allocation10 + $0xad0] sm:$0xff] %v2566
    %3591 = vst [vmem:[#allocation10 + $0xad8] sm:$0xff] %v2567
    %3592 = vst [vmem:[#allocation10 + $0xae0] sm:$0xff] %v2568
    %3593 = vst [vmem:[#allocation10 + $0xae8] sm:$0xff] %v2569
    %3594 = vst [vmem:[#allocation10 + $0xaf0] sm:$0xff] %v2570
    %3595 = vst [vmem:[#allocation10 + $0xaf8] sm:$0xff] %v2571
    %3596 = vst [vmem:[#allocation10 + $0xb00] sm:$0xff] %v2572
    %3597 = vst [vmem:[#allocation10 + $0xb08] sm:$0xff] %v2573
    %3598 = vst [vmem:[#allocation10 + $0xb10] sm:$0xff] %v2574
    %3599 = vst [vmem:[#allocation10 + $0xb18] sm:$0xff] %v2575
    %3600 = vst [vmem:[#allocation10 + $0xb20] sm:$0xff] %v2576
    %3601 = vst [vmem:[#allocation10 + $0xb28] sm:$0xff] %v2577
    %3602 = vst [vmem:[#allocation10 + $0xb30] sm:$0xff] %v2578
    %3603 = vst [vmem:[#allocation10 + $0xb38] sm:$0xff] %v2579
    %3604 = vst [vmem:[#allocation10 + $0xb40] sm:$0xff] %v2580
    %3605 = vst [vmem:[#allocation10 + $0xb48] sm:$0xff] %v2581
    %3606 = vst [vmem:[#allocation10 + $0xb50] sm:$0xff] %v2582
    %3607 = vst [vmem:[#allocation10 + $0xb58] sm:$0xff] %v2583
    %3608 = vst [vmem:[#allocation10 + $0xb60] sm:$0xff] %v2584
    %3609 = vst [vmem:[#allocation10 + $0xb68] sm:$0xff] %v2585
    %3610 = vst [vmem:[#allocation10 + $0xb70] sm:$0xff] %v2586
    %3611 = vst [vmem:[#allocation10 + $0xb78] sm:$0xff] %v2587
    %3612 = vst [vmem:[#allocation10 + $0xb80] sm:$0xff] %v2588
    %3613 = vst [vmem:[#allocation10 + $0xb88] sm:$0xff] %v2589
    %3614 = vst [vmem:[#allocation10 + $0xb90] sm:$0xff] %v2590
    %3615 = vst [vmem:[#allocation10 + $0xb98] sm:$0xff] %v2591
    %3616 = vst [vmem:[#allocation10 + $0xba0] sm:$0xff] %v2592
    %3617 = vst [vmem:[#allocation10 + $0xba8] sm:$0xff] %v2593
    %3618 = vst [vmem:[#allocation10 + $0xbb0] sm:$0xff] %v2594
    %3619 = vst [vmem:[#allocation10 + $0xbb8] sm:$0xff] %v2595
    %3620 = vst [vmem:[#allocation10 + $0xbc0] sm:$0xff] %v2596
    %3621 = vst [vmem:[#allocation10 + $0xbc8] sm:$0xff] %v2597
    %3622 = vst [vmem:[#allocation10 + $0xbd0] sm:$0xff] %v2598
    %3623 = vst [vmem:[#allocation10 + $0xbd8] sm:$0xff] %v2599
    %3624 = vst [vmem:[#allocation10 + $0xbe0] sm:$0xff] %v2600
    %3625 = vst [vmem:[#allocation10 + $0xbe8] sm:$0xff] %v2601
    %3626 = vst [vmem:[#allocation10 + $0xbf0] sm:$0xff] %v2602
    %3627 = vst [vmem:[#allocation10 + $0xbf8] sm:$0xff] %v2603
    %3628 = vst [vmem:[#allocation10 + $0xc00] sm:$0xff] %v2604
    %3629 = vst [vmem:[#allocation10 + $0xc08] sm:$0xff] %v2605
    %3630 = vst [vmem:[#allocation10 + $0xc10] sm:$0xff] %v2606
    %3631 = vst [vmem:[#allocation10 + $0xc18] sm:$0xff] %v2607
    %3632 = vst [vmem:[#allocation10 + $0xc20] sm:$0xff] %v2608
    %3633 = vst [vmem:[#allocation10 + $0xc28] sm:$0xff] %v2609
    %3634 = vst [vmem:[#allocation10 + $0xc30] sm:$0xff] %v2610
    %3635 = vst [vmem:[#allocation10 + $0xc38] sm:$0xff] %v2611
    %3636 = vst [vmem:[#allocation10 + $0xc40] sm:$0xff] %v2612
    %3637 = vst [vmem:[#allocation10 + $0xc48] sm:$0xff] %v2613
    %3638 = vst [vmem:[#allocation10 + $0xc50] sm:$0xff] %v2614
    %3639 = vst [vmem:[#allocation10 + $0xc58] sm:$0xff] %v2615
    %3640 = vst [vmem:[#allocation10 + $0xc60] sm:$0xff] %v2616
    %3641 = vst [vmem:[#allocation10 + $0xc68] sm:$0xff] %v2617
    %3642 = vst [vmem:[#allocation10 + $0xc70] sm:$0xff] %v2618
    %3643 = vst [vmem:[#allocation10 + $0xc78] sm:$0xff] %v2619
    %3644 = vst [vmem:[#allocation10 + $0xc80] sm:$0xff] %v2620
    %3645 = vst [vmem:[#allocation10 + $0xc88] sm:$0xff] %v2621
    %3646 = vst [vmem:[#allocation10 + $0xc90] sm:$0xff] %v2622
    %3647 = vst [vmem:[#allocation10 + $0xc98] sm:$0xff] %v2623
    %3648 = vst [vmem:[#allocation10 + $0xca0] sm:$0xff] %v2624
    %3649 = vst [vmem:[#allocation10 + $0xca8] sm:$0xff] %v2625
    %3650 = vst [vmem:[#allocation10 + $0xcb0] sm:$0xff] %v2626
    %3651 = vst [vmem:[#allocation10 + $0xcb8] sm:$0xff] %v2627
    %3652 = vst [vmem:[#allocation10 + $0xcc0] sm:$0xff] %v2628
    %3653 = vst [vmem:[#allocation10 + $0xcc8] sm:$0xff] %v2629
    %3654 = vst [vmem:[#allocation10 + $0xcd0] sm:$0xff] %v2630
    %3655 = vst [vmem:[#allocation10 + $0xcd8] sm:$0xff] %v2631
    %3656 = vst [vmem:[#allocation10 + $0xce0] sm:$0xff] %v2632
    %3657 = vst [vmem:[#allocation10 + $0xce8] sm:$0xff] %v2633
    %3658 = vst [vmem:[#allocation10 + $0xcf0] sm:$0xff] %v2634
    %3659 = vst [vmem:[#allocation10 + $0xcf8] sm:$0xff] %v2635
    %3660 = vst [vmem:[#allocation10 + $0xd00] sm:$0xff] %v2636
    %3661 = vst [vmem:[#allocation10 + $0xd08] sm:$0xff] %v2637
    %3662 = vst [vmem:[#allocation10 + $0xd10] sm:$0xff] %v2638
    %3663 = vst [vmem:[#allocation10 + $0xd18] sm:$0xff] %v2639
    %3664 = vst [vmem:[#allocation10 + $0xd20] sm:$0xff] %v2640
    %3665 = vst [vmem:[#allocation10 + $0xd28] sm:$0xff] %v2641
    %3666 = vst [vmem:[#allocation10 + $0xd30] sm:$0xff] %v2642
    %3667 = vst [vmem:[#allocation10 + $0xd38] sm:$0xff] %v2643
    %3668 = vst [vmem:[#allocation10 + $0xd40] sm:$0xff] %v2644
    %3669 = vst [vmem:[#allocation10 + $0xd48] sm:$0xff] %v2645
    %3670 = vst [vmem:[#allocation10 + $0xd50] sm:$0xff] %v2646
    %3671 = vst [vmem:[#allocation10 + $0xd58] sm:$0xff] %v2647
    %3672 = vst [vmem:[#allocation10 + $0xd60] sm:$0xff] %v2648
    %3673 = vst [vmem:[#allocation10 + $0xd68] sm:$0xff] %v2649
    %3674 = vst [vmem:[#allocation10 + $0xd70] sm:$0xff] %v2650
    %3675 = vst [vmem:[#allocation10 + $0xd78] sm:$0xff] %v2651
    %3676 = vst [vmem:[#allocation10 + $0xd80] sm:$0xff] %v2652
    %3677 = vst [vmem:[#allocation10 + $0xd88] sm:$0xff] %v2653
    %3678 = vst [vmem:[#allocation10 + $0xd90] sm:$0xff] %v2654
    %3679 = vst [vmem:[#allocation10 + $0xd98] sm:$0xff] %v2655
    %3680 = vst [vmem:[#allocation10 + $0xda0] sm:$0xff] %v2656
    %3681 = vst [vmem:[#allocation10 + $0xda8] sm:$0xff] %v2657
    %3682 = vst [vmem:[#allocation10 + $0xdb0] sm:$0xff] %v2658
    %3683 = vst [vmem:[#allocation10 + $0xdb8] sm:$0xff] %v2659
    %3684 = vst [vmem:[#allocation10 + $0xdc0] sm:$0xff] %v2660
    %3685 = vst [vmem:[#allocation10 + $0xdc8] sm:$0xff] %v2661
    %3686 = vst [vmem:[#allocation10 + $0xdd0] sm:$0xff] %v2662
    %3687 = vst [vmem:[#allocation10 + $0xdd8] sm:$0xff] %v2663
    %3688 = vst [vmem:[#allocation10 + $0xde0] sm:$0xff] %v2664
    %3689 = vst [vmem:[#allocation10 + $0xde8] sm:$0xff] %v2665
    %3690 = vst [vmem:[#allocation10 + $0xdf0] sm:$0xff] %v2666
    %3691 = vst [vmem:[#allocation10 + $0xdf8] sm:$0xff] %v2667
    %3692 = vst [vmem:[#allocation10 + $0xe00] sm:$0xff] %v2668
    %3693 = vst [vmem:[#allocation10 + $0xe08] sm:$0xff] %v2669
    %3694 = vst [vmem:[#allocation10 + $0xe10] sm:$0xff] %v2670
    %3695 = vst [vmem:[#allocation10 + $0xe18] sm:$0xff] %v2671
    %3696 = vst [vmem:[#allocation10 + $0xe20] sm:$0xff] %v2672
    %3697 = vst [vmem:[#allocation10 + $0xe28] sm:$0xff] %v2673
    %3698 = vst [vmem:[#allocation10 + $0xe30] sm:$0xff] %v2674
    %3699 = vst [vmem:[#allocation10 + $0xe38] sm:$0xff] %v2675
    %3700 = vst [vmem:[#allocation10 + $0xe40] sm:$0xff] %v2676
    %3701 = vst [vmem:[#allocation10 + $0xe48] sm:$0xff] %v2677
    %3702 = vst [vmem:[#allocation10 + $0xe50] sm:$0xff] %v2678
    %3703 = vst [vmem:[#allocation10 + $0xe58] sm:$0xff] %v2679
    %3704 = vst [vmem:[#allocation10 + $0xe60] sm:$0xff] %v2680
    %3705 = vst [vmem:[#allocation10 + $0xe68] sm:$0xff] %v2681
    %3706 = vst [vmem:[#allocation10 + $0xe70] sm:$0xff] %v2682
    %3707 = vst [vmem:[#allocation10 + $0xe78] sm:$0xff] %v2683
    %3708 = vst [vmem:[#allocation10 + $0xe80] sm:$0xff] %v2684
    %3709 = vst [vmem:[#allocation10 + $0xe88] sm:$0xff] %v2685
    %3710 = vst [vmem:[#allocation10 + $0xe90] sm:$0xff] %v2686
    %3711 = vst [vmem:[#allocation10 + $0xe98] sm:$0xff] %v2687
    %3712 = vst [vmem:[#allocation10 + $0xea0] sm:$0xff] %v2688
    %3713 = vst [vmem:[#allocation10 + $0xea8] sm:$0xff] %v2689
    %3714 = vst [vmem:[#allocation10 + $0xeb0] sm:$0xff] %v2690
    %3715 = vst [vmem:[#allocation10 + $0xeb8] sm:$0xff] %v2691
    %3716 = vst [vmem:[#allocation10 + $0xec0] sm:$0xff] %v2692
    %3717 = vst [vmem:[#allocation10 + $0xec8] sm:$0xff] %v2693
    %3718 = vst [vmem:[#allocation10 + $0xed0] sm:$0xff] %v2694
    %3719 = vst [vmem:[#allocation10 + $0xed8] sm:$0xff] %v2695
    %3720 = vst [vmem:[#allocation10 + $0xee0] sm:$0xff] %v2696
    %3721 = vst [vmem:[#allocation10 + $0xee8] sm:$0xff] %v2697
    %3722 = vst [vmem:[#allocation10 + $0xef0] sm:$0xff] %v2698
    %3723 = vst [vmem:[#allocation10 + $0xef8] sm:$0xff] %v2699
    %3724 = vst [vmem:[#allocation10 + $0xf00] sm:$0xff] %v2700
    %3725 = vst [vmem:[#allocation10 + $0xf08] sm:$0xff] %v2701
    %3726 = vst [vmem:[#allocation10 + $0xf10] sm:$0xff] %v2702
    %3727 = vst [vmem:[#allocation10 + $0xf18] sm:$0xff] %v2703
    %3728 = vst [vmem:[#allocation10 + $0xf20] sm:$0xff] %v2704
    %3729 = vst [vmem:[#allocation10 + $0xf28] sm:$0xff] %v2705
    %3730 = vst [vmem:[#allocation10 + $0xf30] sm:$0xff] %v2706
    %3731 = vst [vmem:[#allocation10 + $0xf38] sm:$0xff] %v2707
    %3732 = vst [vmem:[#allocation10 + $0xf40] sm:$0xff] %v2708
    %3733 = vst [vmem:[#allocation10 + $0xf48] sm:$0xff] %v2709
    %3734 = vst [vmem:[#allocation10 + $0xf50] sm:$0xff] %v2710
    %3735 = vst [vmem:[#allocation10 + $0xf58] sm:$0xff] %v2711
    %3736 = vst [vmem:[#allocation10 + $0xf60] sm:$0xff] %v2712
    %3737 = vst [vmem:[#allocation10 + $0xf68] sm:$0xff] %v2713
    %3738 = vst [vmem:[#allocation10 + $0xf70] sm:$0xff] %v2714
    %3739 = vst [vmem:[#allocation10 + $0xf78] sm:$0xff] %v2715
    %3740 = vst [vmem:[#allocation10 + $0xf80] sm:$0xff] %v2716
    %3741 = vst [vmem:[#allocation10 + $0xf88] sm:$0xff] %v2717
    %3742 = vst [vmem:[#allocation10 + $0xf90] sm:$0xff] %v2718
    %3743 = vst [vmem:[#allocation10 + $0xf98] sm:$0xff] %v2719
    %3744 = vst [vmem:[#allocation10 + $0xfa0] sm:$0xff] %v2720
    %3745 = vst [vmem:[#allocation10 + $0xfa8] sm:$0xff] %v2721
    %3746 = vst [vmem:[#allocation10 + $0xfb0] sm:$0xff] %v2722
    %3747 = vst [vmem:[#allocation10 + $0xfb8] sm:$0xff] %v2723
    %3748 = vst [vmem:[#allocation10 + $0xfc0] sm:$0xff] %v2724
    %3749 = vst [vmem:[#allocation10 + $0xfc8] sm:$0xff] %v2725
    %3750 = vst [vmem:[#allocation10 + $0xfd0] sm:$0xff] %v2726
    %3751 = vst [vmem:[#allocation10 + $0xfd8] sm:$0xff] %v2727
    %3752 = vst [vmem:[#allocation10 + $0xfe0] sm:$0xff] %v2728
    %3753 = vst [vmem:[#allocation10 + $0xfe8] sm:$0xff] %v2729
    %3754 = vst [vmem:[#allocation10 + $0xff0] sm:$0xff] %v2730
    %3755 = vst [vmem:[#allocation10 + $0xff8] sm:$0xff] %v2731
    %3756 = vst [vmem:[#allocation10 + $0x1000] sm:$0xff] %v2732
    %3757 = vst [vmem:[#allocation10 + $0x1008] sm:$0xff] %v2733
    %3758 = vst [vmem:[#allocation10 + $0x1010] sm:$0xff] %v2734
    %3759 = vst [vmem:[#allocation10 + $0x1018] sm:$0xff] %v2735
    %3760 = vst [vmem:[#allocation10 + $0x1020] sm:$0xff] %v2736
    %3761 = vst [vmem:[#allocation10 + $0x1028] sm:$0xff] %v2737
    %3762 = vst [vmem:[#allocation10 + $0x1030] sm:$0xff] %v2738
    %3763 = vst [vmem:[#allocation10 + $0x1038] sm:$0xff] %v2739
    %3764 = vst [vmem:[#allocation10 + $0x1040] sm:$0xff] %v2740
    %3765 = vst [vmem:[#allocation10 + $0x1048] sm:$0xff] %v2741
    %3766 = vst [vmem:[#allocation10 + $0x1050] sm:$0xff] %v2742
    %3767 = vst [vmem:[#allocation10 + $0x1058] sm:$0xff] %v2743
    %3768 = vst [vmem:[#allocation10 + $0x1060] sm:$0xff] %v2744
    %3769 = vst [vmem:[#allocation10 + $0x1068] sm:$0xff] %v2745
    %3770 = vst [vmem:[#allocation10 + $0x1070] sm:$0xff] %v2746
    %3771 = vst [vmem:[#allocation10 + $0x1078] sm:$0xff] %v2747
    %3772 = vst [vmem:[#allocation10 + $0x1080] sm:$0xff] %v2748
    %3773 = vst [vmem:[#allocation10 + $0x1088] sm:$0xff] %v2749
    %3774 = vst [vmem:[#allocation10 + $0x1090] sm:$0xff] %v2750
    %3775 = vst [vmem:[#allocation10 + $0x1098] sm:$0xff] %v2751
    %3776 = vst [vmem:[#allocation10 + $0x10a0] sm:$0xff] %v2752
    %3777 = vst [vmem:[#allocation10 + $0x10a8] sm:$0xff] %v2753
    %3778 = vst [vmem:[#allocation10 + $0x10b0] sm:$0xff] %v2754
    %3779 = vst [vmem:[#allocation10 + $0x10b8] sm:$0xff] %v2755
    %3780 = vst [vmem:[#allocation10 + $0x10c0] sm:$0xff] %v2756
    %3781 = vst [vmem:[#allocation10 + $0x10c8] sm:$0xff] %v2757
    %3782 = vst [vmem:[#allocation10 + $0x10d0] sm:$0xff] %v2758
    %3783 = vst [vmem:[#allocation10 + $0x10d8] sm:$0xff] %v2759
    %3784 = vst [vmem:[#allocation10 + $0x10e0] sm:$0xff] %v2760
    %3785 = vst [vmem:[#allocation10 + $0x10e8] sm:$0xff] %v2761
    %3786 = vst [vmem:[#allocation10 + $0x10f0] sm:$0xff] %v2762
    %3787 = vst [vmem:[#allocation10 + $0x10f8] sm:$0xff] %v2763
    %3788 = vst [vmem:[#allocation10 + $0x1100] sm:$0xff] %v2764
    %3789 = vst [vmem:[#allocation10 + $0x1108] sm:$0xff] %v2765
    %3790 = vst [vmem:[#allocation10 + $0x1110] sm:$0xff] %v2766
    %3791 = vst [vmem:[#allocation10 + $0x1118] sm:$0xff] %v2767
    %3792 = vst [vmem:[#allocation10 + $0x1120] sm:$0xff] %v2768
    %3793 = vst [vmem:[#allocation10 + $0x1128] sm:$0xff] %v2769
    %3794 = vst [vmem:[#allocation10 + $0x1130] sm:$0xff] %v2770
    %3795 = vst [vmem:[#allocation10 + $0x1138] sm:$0xff] %v2771
    %3796 = vst [vmem:[#allocation10 + $0x1140] sm:$0xff] %v2772
    %3797 = vst [vmem:[#allocation10 + $0x1148] sm:$0xff] %v2773
    %3798 = vst [vmem:[#allocation10 + $0x1150] sm:$0xff] %v2774
    %3799 = vst [vmem:[#allocation10 + $0x1158] sm:$0xff] %v2775
    %3800 = vst [vmem:[#allocation10 + $0x1160] sm:$0xff] %v2776
    %3801 = vst [vmem:[#allocation10 + $0x1168] sm:$0xff] %v2777
    %3802 = vst [vmem:[#allocation10 + $0x1170] sm:$0xff] %v2778
    %3803 = vst [vmem:[#allocation10 + $0x1178] sm:$0xff] %v2779
    %3804 = vst [vmem:[#allocation10 + $0x1180] sm:$0xff] %v2780
    %3805 = vst [vmem:[#allocation10 + $0x1188] sm:$0xff] %v2781
    %3806 = vst [vmem:[#allocation10 + $0x1190] sm:$0xff] %v2782
    %3807 = vst [vmem:[#allocation10 + $0x1198] sm:$0xff] %v2783
    %3808 = vst [vmem:[#allocation10 + $0x11a0] sm:$0xff] %v2784
    %3809 = vst [vmem:[#allocation10 + $0x11a8] sm:$0xff] %v2785
    %3810 = vst [vmem:[#allocation10 + $0x11b0] sm:$0xff] %v2786
    %3811 = vst [vmem:[#allocation10 + $0x11b8] sm:$0xff] %v2787
    %3812 = vst [vmem:[#allocation10 + $0x11c0] sm:$0xff] %v2788
    %3813 = vst [vmem:[#allocation10 + $0x11c8] sm:$0xff] %v2789
    %3814 = vst [vmem:[#allocation10 + $0x11d0] sm:$0xff] %v2790
    %3815 = vst [vmem:[#allocation10 + $0x11d8] sm:$0xff] %v2791
    %3816 = vst [vmem:[#allocation10 + $0x11e0] sm:$0xff] %v2792
    %3817 = vst [vmem:[#allocation10 + $0x11e8] sm:$0xff] %v2793
    %3818 = vst [vmem:[#allocation10 + $0x11f0] sm:$0xff] %v2794
    %3819 = vst [vmem:[#allocation10 + $0x11f8] sm:$0xff] %v2795
    %3820 = vst [vmem:[#allocation10 + $0x1200] sm:$0xff] %v2796
    %3821 = vst [vmem:[#allocation10 + $0x1208] sm:$0xff] %v2797
    %3822 = vst [vmem:[#allocation10 + $0x1210] sm:$0xff] %v2798
    %3823 = vst [vmem:[#allocation10 + $0x1218] sm:$0xff] %v2799
    %3824 = vst [vmem:[#allocation10 + $0x1220] sm:$0xff] %v2800
    %3825 = vst [vmem:[#allocation10 + $0x1228] sm:$0xff] %v2801
    %3826 = vst [vmem:[#allocation10 + $0x1230] sm:$0xff] %v2802
    %3827 = vst [vmem:[#allocation10 + $0x1238] sm:$0xff] %v2803
    %3828 = vst [vmem:[#allocation10 + $0x1240] sm:$0xff] %v2804
    %3829 = vst [vmem:[#allocation10 + $0x1248] sm:$0xff] %v2805
    %3830 = vst [vmem:[#allocation10 + $0x1250] sm:$0xff] %v2806
    %3831 = vst [vmem:[#allocation10 + $0x1258] sm:$0xff] %v2807
    %3832 = vst [vmem:[#allocation10 + $0x1260] sm:$0xff] %v2808
    %3833 = vst [vmem:[#allocation10 + $0x1268] sm:$0xff] %v2809
    %3834 = vst [vmem:[#allocation10 + $0x1270] sm:$0xff] %v2810
    %3835 = vst [vmem:[#allocation10 + $0x1278] sm:$0xff] %v2811
    %3836 = vst [vmem:[#allocation10 + $0x1280] sm:$0xff] %v2812
    %3837 = vst [vmem:[#allocation10 + $0x1288] sm:$0xff] %v2813
    %3838 = vst [vmem:[#allocation10 + $0x1290] sm:$0xff] %v2814
    %3839 = vst [vmem:[#allocation10 + $0x1298] sm:$0xff] %v2815
    %3840 = vst [vmem:[#allocation10 + $0x12a0] sm:$0xff] %v2816
    %3841 = vst [vmem:[#allocation10 + $0x12a8] sm:$0xff] %v2817
    %3842 = vst [vmem:[#allocation10 + $0x12b0] sm:$0xff] %v2818
    %3843 = vst [vmem:[#allocation10 + $0x12b8] sm:$0xff] %v2819
    %3844 = vst [vmem:[#allocation10 + $0x12c0] sm:$0xff] %v2820
    %3845 = vst [vmem:[#allocation10 + $0x12c8] sm:$0xff] %v2821
    %3846 = vst [vmem:[#allocation10 + $0x12d0] sm:$0xff] %v2822
    %3847 = vst [vmem:[#allocation10 + $0x12d8] sm:$0xff] %v2823
    %3848 = vst [vmem:[#allocation10 + $0x12e0] sm:$0xff] %v2824
    %3849 = vst [vmem:[#allocation10 + $0x12e8] sm:$0xff] %v2825
    %3850 = vst [vmem:[#allocation10 + $0x12f0] sm:$0xff] %v2826
    %3851 = vst [vmem:[#allocation10 + $0x12f8] sm:$0xff] %v2827
    %3852 = vst [vmem:[#allocation10 + $0x1300] sm:$0xff] %v2828
    %3853 = vst [vmem:[#allocation10 + $0x1308] sm:$0xff] %v2829
    %3854 = vst [vmem:[#allocation10 + $0x1310] sm:$0xff] %v2830
    %3855 = vst [vmem:[#allocation10 + $0x1318] sm:$0xff] %v2831
    %3856 = vst [vmem:[#allocation10 + $0x1320] sm:$0xff] %v2832
    %3857 = vst [vmem:[#allocation10 + $0x1328] sm:$0xff] %v2833
    %3858 = vst [vmem:[#allocation10 + $0x1330] sm:$0xff] %v2834
    %3859 = vst [vmem:[#allocation10 + $0x1338] sm:$0xff] %v2835
    %3860 = vst [vmem:[#allocation10 + $0x1340] sm:$0xff] %v2836
    %3861 = vst [vmem:[#allocation10 + $0x1348] sm:$0xff] %v2837
    %3862 = vst [vmem:[#allocation10 + $0x1350] sm:$0xff] %v2838
    %3863 = vst [vmem:[#allocation10 + $0x1358] sm:$0xff] %v2839
    %3864 = vst [vmem:[#allocation10 + $0x1360] sm:$0xff] %v2840
    %3865 = vst [vmem:[#allocation10 + $0x1368] sm:$0xff] %v2841
    %3866 = vst [vmem:[#allocation10 + $0x1370] sm:$0xff] %v2842
    %3867 = vst [vmem:[#allocation10 + $0x1378] sm:$0xff] %v2843
    %3868 = vst [vmem:[#allocation10 + $0x1380] sm:$0xff] %v2844
    %3869 = vst [vmem:[#allocation10 + $0x1388] sm:$0xff] %v2845
    %3870 = vst [vmem:[#allocation10 + $0x1390] sm:$0xff] %v2846
    %3871 = vst [vmem:[#allocation10 + $0x1398] sm:$0xff] %v2847
    %3872 = vst [vmem:[#allocation10 + $0x13a0] sm:$0xff] %v2848
    %3873 = vst [vmem:[#allocation10 + $0x13a8] sm:$0xff] %v2849
    %3874 = vst [vmem:[#allocation10 + $0x13b0] sm:$0xff] %v2850
    %3875 = vst [vmem:[#allocation10 + $0x13b8] sm:$0xff] %v2851
    %3876 = vst [vmem:[#allocation10 + $0x13c0] sm:$0xff] %v2852
    %3877 = vst [vmem:[#allocation10 + $0x13c8] sm:$0xff] %v2853
    %3878 = vst [vmem:[#allocation10 + $0x13d0] sm:$0xff] %v2854
    %3879 = vst [vmem:[#allocation10 + $0x13d8] sm:$0xff] %v2855
    %3880 = vst [vmem:[#allocation10 + $0x13e0] sm:$0xff] %v2856
    %3881 = vst [vmem:[#allocation10 + $0x13e8] sm:$0xff] %v2857
    %3882 = vst [vmem:[#allocation10 + $0x13f0] sm:$0xff] %v2858
    %3883 = vst [vmem:[#allocation10 + $0x13f8] sm:$0xff] %v2859
    %3884 = vst [vmem:[#allocation10 + $0x1400] sm:$0xff] %v2860
    %3885 = vst [vmem:[#allocation10 + $0x1408] sm:$0xff] %v2861
    %3886 = vst [vmem:[#allocation10 + $0x1410] sm:$0xff] %v2862
    %3887 = vst [vmem:[#allocation10 + $0x1418] sm:$0xff] %v2863
    %3888 = vst [vmem:[#allocation10 + $0x1420] sm:$0xff] %v2864
    %3889 = vst [vmem:[#allocation10 + $0x1428] sm:$0xff] %v2865
    %3890 = vst [vmem:[#allocation10 + $0x1430] sm:$0xff] %v2866
    %3891 = vst [vmem:[#allocation10 + $0x1438] sm:$0xff] %v2867
    %3892 = vst [vmem:[#allocation10 + $0x1440] sm:$0xff] %v2868
    %3893 = vst [vmem:[#allocation10 + $0x1448] sm:$0xff] %v2869
    %3894 = vst [vmem:[#allocation10 + $0x1450] sm:$0xff] %v2870
    %3895 = vst [vmem:[#allocation10 + $0x1458] sm:$0xff] %v2871
    %3896 = vst [vmem:[#allocation10 + $0x1460] sm:$0xff] %v2872
    %3897 = vst [vmem:[#allocation10 + $0x1468] sm:$0xff] %v2873
    %3898 = vst [vmem:[#allocation10 + $0x1470] sm:$0xff] %v2874
    %3899 = vst [vmem:[#allocation10 + $0x1478] sm:$0xff] %v2875
    %3900 = vst [vmem:[#allocation10 + $0x1480] sm:$0xff] %v2876
    %3901 = vst [vmem:[#allocation10 + $0x1488] sm:$0xff] %v2877
    %3902 = vst [vmem:[#allocation10 + $0x1490] sm:$0xff] %v2878
    %3903 = vst [vmem:[#allocation10 + $0x1498] sm:$0xff] %v2879
    %3904 = vst [vmem:[#allocation10 + $0x14a0] sm:$0xff] %v2880
    %3905 = vst [vmem:[#allocation10 + $0x14a8] sm:$0xff] %v2881
    %3906 = vst [vmem:[#allocation10 + $0x14b0] sm:$0xff] %v2882
    %3907 = vst [vmem:[#allocation10 + $0x14b8] sm:$0xff] %v2883
    %3908 = vst [vmem:[#allocation10 + $0x14c0] sm:$0xff] %v2884
    %3909 = vst [vmem:[#allocation10 + $0x14c8] sm:$0xff] %v2885
    %3910 = vst [vmem:[#allocation10 + $0x14d0] sm:$0xff] %v2886
    %3911 = vst [vmem:[#allocation10 + $0x14d8] sm:$0xff] %v2887
    %3912 = vst [vmem:[#allocation10 + $0x14e0] sm:$0xff] %v2888
    %3913 = vst [vmem:[#allocation10 + $0x14e8] sm:$0xff] %v2889
    %3914 = vst [vmem:[#allocation10 + $0x14f0] sm:$0xff] %v2890
    %3915 = vst [vmem:[#allocation10 + $0x14f8] sm:$0xff] %v2891
    %3916 = vst [vmem:[#allocation10 + $0x1500] sm:$0xff] %v2892
    %3917 = vst [vmem:[#allocation10 + $0x1508] sm:$0xff] %v2893
    %3918 = vst [vmem:[#allocation10 + $0x1510] sm:$0xff] %v2894
    %3919 = vst [vmem:[#allocation10 + $0x1518] sm:$0xff] %v2895
    %3920 = vst [vmem:[#allocation10 + $0x1520] sm:$0xff] %v2896
    %3921 = vst [vmem:[#allocation10 + $0x1528] sm:$0xff] %v2897
    %3922 = vst [vmem:[#allocation10 + $0x1530] sm:$0xff] %v2898
    %3923 = vst [vmem:[#allocation10 + $0x1538] sm:$0xff] %v2899
    %3924 = vst [vmem:[#allocation10 + $0x1540] sm:$0xff] %v2900
    %3925 = vst [vmem:[#allocation10 + $0x1548] sm:$0xff] %v2901
    %3926 = vst [vmem:[#allocation10 + $0x1550] sm:$0xff] %v2902
    %3927 = vst [vmem:[#allocation10 + $0x1558] sm:$0xff] %v2903
    %3928 = vst [vmem:[#allocation10 + $0x1560] sm:$0xff] %v2904
    %3929 = vst [vmem:[#allocation10 + $0x1568] sm:$0xff] %v2905
    %3930 = vst [vmem:[#allocation10 + $0x1570] sm:$0xff] %v2906
    %3931 = vst [vmem:[#allocation10 + $0x1578] sm:$0xff] %v2907
    %3932 = vst [vmem:[#allocation10 + $0x1580] sm:$0xff] %v2908
    %3933 = vst [vmem:[#allocation10 + $0x1588] sm:$0xff] %v2909
    %3934 = vst [vmem:[#allocation10 + $0x1590] sm:$0xff] %v2910
    %3935 = vst [vmem:[#allocation10 + $0x1598] sm:$0xff] %v2911
    %3936 = vst [vmem:[#allocation10 + $0x15a0] sm:$0xff] %v2912
    %3937 = vst [vmem:[#allocation10 + $0x15a8] sm:$0xff] %v2913
    %3938 = vst [vmem:[#allocation10 + $0x15b0] sm:$0xff] %v2914
    %3939 = vst [vmem:[#allocation10 + $0x15b8] sm:$0xff] %v2915
    %3940 = vst [vmem:[#allocation10 + $0x15c0] sm:$0xff] %v2916
    %3941 = vst [vmem:[#allocation10 + $0x15c8] sm:$0xff] %v2917
    %3942 = vst [vmem:[#allocation10 + $0x15d0] sm:$0xff] %v2918
    %3943 = vst [vmem:[#allocation10 + $0x15d8] sm:$0xff] %v2919
    %3944 = vst [vmem:[#allocation10 + $0x15e0] sm:$0xff] %v2920
    %3945 = vst [vmem:[#allocation10 + $0x15e8] sm:$0xff] %v2921
    %3946 = vst [vmem:[#allocation10 + $0x15f0] sm:$0xff] %v2922
    %3947 = vst [vmem:[#allocation10 + $0x15f8] sm:$0xff] %v2923
    %3948 = vst [vmem:[#allocation10 + $0x1600] sm:$0xff] %v2924
    %3949 = vst [vmem:[#allocation10 + $0x1608] sm:$0xff] %v2925
    %3950 = vst [vmem:[#allocation10 + $0x1610] sm:$0xff] %v2926
    %3951 = vst [vmem:[#allocation10 + $0x1618] sm:$0xff] %v2927
    %3952 = vst [vmem:[#allocation10 + $0x1620] sm:$0xff] %v2928
    %3953 = vst [vmem:[#allocation10 + $0x1628] sm:$0xff] %v2929
    %3954 = vst [vmem:[#allocation10 + $0x1630] sm:$0xff] %v2930
    %3955 = vst [vmem:[#allocation10 + $0x1638] sm:$0xff] %v2931
    %3956 = vst [vmem:[#allocation10 + $0x1640] sm:$0xff] %v2932
    %3957 = vst [vmem:[#allocation10 + $0x1648] sm:$0xff] %v2933
    %3958 = vst [vmem:[#allocation10 + $0x1650] sm:$0xff] %v2934
    %3959 = vst [vmem:[#allocation10 + $0x1658] sm:$0xff] %v2935
    %3960 = vst [vmem:[#allocation10 + $0x1660] sm:$0xff] %v2936
    %3961 = vst [vmem:[#allocation10 + $0x1668] sm:$0xff] %v2937
    %3962 = vst [vmem:[#allocation10 + $0x1670] sm:$0xff] %v2938
    %3963 = vst [vmem:[#allocation10 + $0x1678] sm:$0xff] %v2939
    %3964 = vst [vmem:[#allocation10 + $0x1680] sm:$0xff] %v2940
    %3965 = vst [vmem:[#allocation10 + $0x1688] sm:$0xff] %v2941
    %3966 = vst [vmem:[#allocation10 + $0x1690] sm:$0xff] %v2942
    %3967 = vst [vmem:[#allocation10 + $0x1698] sm:$0xff] %v2943
    %3968 = vst [vmem:[#allocation10 + $0x16a0] sm:$0xff] %v2944
    %3969 = vst [vmem:[#allocation10 + $0x16a8] sm:$0xff] %v2945
    %3970 = vst [vmem:[#allocation10 + $0x16b0] sm:$0xff] %v2946
    %3971 = vst [vmem:[#allocation10 + $0x16b8] sm:$0xff] %v2947
    %3972 = vst [vmem:[#allocation10 + $0x16c0] sm:$0xff] %v2948
    %3973 = vst [vmem:[#allocation10 + $0x16c8] sm:$0xff] %v2949
    %3974 = vst [vmem:[#allocation10 + $0x16d0] sm:$0xff] %v2950
    %3975 = vst [vmem:[#allocation10 + $0x16d8] sm:$0xff] %v2951
    %3976 = vst [vmem:[#allocation10 + $0x16e0] sm:$0xff] %v2952
    %3977 = vst [vmem:[#allocation10 + $0x16e8] sm:$0xff] %v2953
    %3978 = vst [vmem:[#allocation10 + $0x16f0] sm:$0xff] %v2954
    %3979 = vst [vmem:[#allocation10 + $0x16f8] sm:$0xff] %v2955
    %3980 = vst [vmem:[#allocation10 + $0x1700] sm:$0xff] %v2956
    %3981 = vst [vmem:[#allocation10 + $0x1708] sm:$0xff] %v2957
    %3982 = vst [vmem:[#allocation10 + $0x1710] sm:$0xff] %v2958
    %3983 = vst [vmem:[#allocation10 + $0x1718] sm:$0xff] %v2959
    %3984 = vst [vmem:[#allocation10 + $0x1720] sm:$0xff] %v2960
    %3985 = vst [vmem:[#allocation10 + $0x1728] sm:$0xff] %v2961
    %3986 = vst [vmem:[#allocation10 + $0x1730] sm:$0xff] %v2962
    %3987 = vst [vmem:[#allocation10 + $0x1738] sm:$0xff] %v2963
    %3988 = vst [vmem:[#allocation10 + $0x1740] sm:$0xff] %v2964
    %3989 = vst [vmem:[#allocation10 + $0x1748] sm:$0xff] %v2965
    %3990 = vst [vmem:[#allocation10 + $0x1750] sm:$0xff] %v2966
    %3991 = vst [vmem:[#allocation10 + $0x1758] sm:$0xff] %v2967
    %3992 = vst [vmem:[#allocation10 + $0x1760] sm:$0xff] %v2968
    %3993 = vst [vmem:[#allocation10 + $0x1768] sm:$0xff] %v2969
    %3994 = vst [vmem:[#allocation10 + $0x1770] sm:$0xff] %v2970
    %3995 = vst [vmem:[#allocation10 + $0x1778] sm:$0xff] %v2971
    %3996 = vst [vmem:[#allocation10 + $0x1780] sm:$0xff] %v2972
    %3997 = vst [vmem:[#allocation10 + $0x1788] sm:$0xff] %v2973
    %3998 = vst [vmem:[#allocation10 + $0x1790] sm:$0xff] %v2974
    %3999 = vst [vmem:[#allocation10 + $0x1798] sm:$0xff] %v2975
    %4000 = vst [vmem:[#allocation10 + $0x17a0] sm:$0xff] %v2976
    %4001 = vst [vmem:[#allocation10 + $0x17a8] sm:$0xff] %v2977
    %4002 = vst [vmem:[#allocation10 + $0x17b0] sm:$0xff] %v2978
    %4003 = vst [vmem:[#allocation10 + $0x17b8] sm:$0xff] %v2979
    %4004 = vst [vmem:[#allocation10 + $0x17c0] sm:$0xff] %v2980
    %4005 = vst [vmem:[#allocation10 + $0x17c8] sm:$0xff] %v2981
    %4006 = vst [vmem:[#allocation10 + $0x17d0] sm:$0xff] %v2982
    %4007 = vst [vmem:[#allocation10 + $0x17d8] sm:$0xff] %v2983
    %4008 = vst [vmem:[#allocation10 + $0x17e0] sm:$0xff] %v2984
    %4009 = vst [vmem:[#allocation10 + $0x17e8] sm:$0xff] %v2985
    %4010 = vst [vmem:[#allocation10 + $0x17f0] sm:$0xff] %v2986
    %4011 = vst [vmem:[#allocation10 + $0x17f8] sm:$0xff] %v2987
    %4012 = vst [vmem:[#allocation10 + $0x1800] sm:$0xff] %v2988
    %4013 = vst [vmem:[#allocation10 + $0x1808] sm:$0xff] %v2989
    %4014 = vst [vmem:[#allocation10 + $0x1810] sm:$0xff] %v2990
    %4015 = vst [vmem:[#allocation10 + $0x1818] sm:$0xff] %v2991
    %4016 = vst [vmem:[#allocation10 + $0x1820] sm:$0xff] %v2992
    %4017 = vst [vmem:[#allocation10 + $0x1828] sm:$0xff] %v2993
    %4018 = vst [vmem:[#allocation10 + $0x1830] sm:$0xff] %v2994
    %4019 = vst [vmem:[#allocation10 + $0x1838] sm:$0xff] %v2995
    %4020 = vst [vmem:[#allocation10 + $0x1840] sm:$0xff] %v2996
    %4021 = vst [vmem:[#allocation10 + $0x1848] sm:$0xff] %v2997
    %4022 = vst [vmem:[#allocation10 + $0x1850] sm:$0xff] %v2998
    %4023 = vst [vmem:[#allocation10 + $0x1858] sm:$0xff] %v2999
    %4024 = vst [vmem:[#allocation10 + $0x1860] sm:$0xff] %v3000
    %4025 = vst [vmem:[#allocation10 + $0x1868] sm:$0xff] %v3001
    %4026 = vst [vmem:[#allocation10 + $0x1870] sm:$0xff] %v3002
    %4027 = vst [vmem:[#allocation10 + $0x1878] sm:$0xff] %v3003
    %4028 = vst [vmem:[#allocation10 + $0x1880] sm:$0xff] %v3004
    %4029 = vst [vmem:[#allocation10 + $0x1888] sm:$0xff] %v3005
    %4030 = vst [vmem:[#allocation10 + $0x1890] sm:$0xff] %v3006
    %4031 = vst [vmem:[#allocation10 + $0x1898] sm:$0xff] %v3007
    %4032 = vst [vmem:[#allocation10 + $0x18a0] sm:$0xff] %v3008
    %4033 = vst [vmem:[#allocation10 + $0x18a8] sm:$0xff] %v3009
    %4034 = vst [vmem:[#allocation10 + $0x18b0] sm:$0xff] %v3010
    %4035 = vst [vmem:[#allocation10 + $0x18b8] sm:$0xff] %v3011
    %4036 = vst [vmem:[#allocation10 + $0x18c0] sm:$0xff] %v3012
    %4037 = vst [vmem:[#allocation10 + $0x18c8] sm:$0xff] %v3013
    %4038 = vst [vmem:[#allocation10 + $0x18d0] sm:$0xff] %v3014
    %4039 = vst [vmem:[#allocation10 + $0x18d8] sm:$0xff] %v3015
    %4040 = vst [vmem:[#allocation10 + $0x18e0] sm:$0xff] %v3016
    %4041 = vst [vmem:[#allocation10 + $0x18e8] sm:$0xff] %v3017
    %4042 = vst [vmem:[#allocation10 + $0x18f0] sm:$0xff] %v3018
    %4043 = vst [vmem:[#allocation10 + $0x18f8] sm:$0xff] %v3019
    %4044 = vst [vmem:[#allocation10 + $0x1900] sm:$0xff] %v3020
    %4045 = vst [vmem:[#allocation10 + $0x1908] sm:$0xff] %v3021
    %4046 = vst [vmem:[#allocation10 + $0x1910] sm:$0xff] %v3022
    %4047 = vst [vmem:[#allocation10 + $0x1918] sm:$0xff] %v3023
    %4048 = vst [vmem:[#allocation10 + $0x1920] sm:$0xff] %v3024
    %4049 = vst [vmem:[#allocation10 + $0x1928] sm:$0xff] %v3025
    %4050 = vst [vmem:[#allocation10 + $0x1930] sm:$0xff] %v3026
    %4051 = vst [vmem:[#allocation10 + $0x1938] sm:$0xff] %v3027
    %4052 = vst [vmem:[#allocation10 + $0x1940] sm:$0xff] %v3028
    %4053 = vst [vmem:[#allocation10 + $0x1948] sm:$0xff] %v3029
    %4054 = vst [vmem:[#allocation10 + $0x1950] sm:$0xff] %v3030
    %4055 = vst [vmem:[#allocation10 + $0x1958] sm:$0xff] %v3031
    %4056 = vst [vmem:[#allocation10 + $0x1960] sm:$0xff] %v3032
    %4057 = vst [vmem:[#allocation10 + $0x1968] sm:$0xff] %v3033
    %4058 = vst [vmem:[#allocation10 + $0x1970] sm:$0xff] %v3034
    %4059 = vst [vmem:[#allocation10 + $0x1978] sm:$0xff] %v3035
    %4060 = vst [vmem:[#allocation10 + $0x1980] sm:$0xff] %v3036
    %4061 = vst [vmem:[#allocation10 + $0x1988] sm:$0xff] %v3037
    %4062 = vst [vmem:[#allocation10 + $0x1990] sm:$0xff] %v3038
    %4063 = vst [vmem:[#allocation10 + $0x1998] sm:$0xff] %v3039
    %4064 = vst [vmem:[#allocation10 + $0x19a0] sm:$0xff] %v3040
    %4065 = vst [vmem:[#allocation10 + $0x19a8] sm:$0xff] %v3041
    %4066 = vst [vmem:[#allocation10 + $0x19b0] sm:$0xff] %v3042
    %4067 = vst [vmem:[#allocation10 + $0x19b8] sm:$0xff] %v3043
    %4068 = vst [vmem:[#allocation10 + $0x19c0] sm:$0xff] %v3044
    %4069 = vst [vmem:[#allocation10 + $0x19c8] sm:$0xff] %v3045
    %4070 = vst [vmem:[#allocation10 + $0x19d0] sm:$0xff] %v3046
    %4071 = vst [vmem:[#allocation10 + $0x19d8] sm:$0xff] %v3047
    %4072 = vst [vmem:[#allocation10 + $0x19e0] sm:$0xff] %v3048
    %4073 = vst [vmem:[#allocation10 + $0x19e8] sm:$0xff] %v3049
    %4074 = vst [vmem:[#allocation10 + $0x19f0] sm:$0xff] %v3050
    %4075 = vst [vmem:[#allocation10 + $0x19f8] sm:$0xff] %v3051
    %4076 = vst [vmem:[#allocation10 + $0x1a00] sm:$0xff] %v3052
    %4077 = vst [vmem:[#allocation10 + $0x1a08] sm:$0xff] %v3053
    %4078 = vst [vmem:[#allocation10 + $0x1a10] sm:$0xff] %v3054
    %4079 = vst [vmem:[#allocation10 + $0x1a18] sm:$0xff] %v3055
    %4080 = vst [vmem:[#allocation10 + $0x1a20] sm:$0xff] %v3056
    %4081 = vst [vmem:[#allocation10 + $0x1a28] sm:$0xff] %v3057
    %4082 = vst [vmem:[#allocation10 + $0x1a30] sm:$0xff] %v3058
    %4083 = vst [vmem:[#allocation10 + $0x1a38] sm:$0xff] %v3059
    %4084 = vst [vmem:[#allocation10 + $0x1a40] sm:$0xff] %v3060
    %4085 = vst [vmem:[#allocation10 + $0x1a48] sm:$0xff] %v3061
    %4086 = vst [vmem:[#allocation10 + $0x1a50] sm:$0xff] %v3062
    %4087 = vst [vmem:[#allocation10 + $0x1a58] sm:$0xff] %v3063
    %4088 = vst [vmem:[#allocation10 + $0x1a60] sm:$0xff] %v3064
    %4089 = vst [vmem:[#allocation10 + $0x1a68] sm:$0xff] %v3065
    %4090 = vst [vmem:[#allocation10 + $0x1a70] sm:$0xff] %v3066
    %4091 = vst [vmem:[#allocation10 + $0x1a78] sm:$0xff] %v3067
    %4092 = vst [vmem:[#allocation10 + $0x1a80] sm:$0xff] %v3068
    %4093 = vst [vmem:[#allocation10 + $0x1a88] sm:$0xff] %v3069
    %4094 = vst [vmem:[#allocation10 + $0x1a90] sm:$0xff] %v3070
    %4095 = vst [vmem:[#allocation10 + $0x1a98] sm:$0xff] %v3071
    %4096 = vst [vmem:[#allocation10 + $0x1aa0] sm:$0xff] %v3072
    %4097 = vst [vmem:[#allocation10 + $0x1aa8] sm:$0xff] %v3073
    %4098 = vst [vmem:[#allocation10 + $0x1ab0] sm:$0xff] %v3074
    %4099 = vst [vmem:[#allocation10 + $0x1ab8] sm:$0xff] %v3075
    %4100 = vst [vmem:[#allocation10 + $0x1ac0] sm:$0xff] %v3076
    %4101 = vst [vmem:[#allocation10 + $0x1ac8] sm:$0xff] %v3077
    %4102 = vst [vmem:[#allocation10 + $0x1ad0] sm:$0xff] %v3078
    %4103 = vst [vmem:[#allocation10 + $0x1ad8] sm:$0xff] %v3079
    %4104 = vst [vmem:[#allocation10 + $0x1ae0] sm:$0xff] %v3080
    %4105 = vst [vmem:[#allocation10 + $0x1ae8] sm:$0xff] %v3081
    %4106 = vst [vmem:[#allocation10 + $0x1af0] sm:$0xff] %v3082
    %4107 = vst [vmem:[#allocation10 + $0x1af8] sm:$0xff] %v3083
    %4108 = vst [vmem:[#allocation10 + $0x1b00] sm:$0xff] %v3084
    %4109 = vst [vmem:[#allocation10 + $0x1b08] sm:$0xff] %v3085
    %4110 = vst [vmem:[#allocation10 + $0x1b10] sm:$0xff] %v3086
    %4111 = vst [vmem:[#allocation10 + $0x1b18] sm:$0xff] %v3087
    %4112 = vst [vmem:[#allocation10 + $0x1b20] sm:$0xff] %v3088
    %4113 = vst [vmem:[#allocation10 + $0x1b28] sm:$0xff] %v3089
    %4114 = vst [vmem:[#allocation10 + $0x1b30] sm:$0xff] %v3090
    %4115 = vst [vmem:[#allocation10 + $0x1b38] sm:$0xff] %v3091
    %4116 = vst [vmem:[#allocation10 + $0x1b40] sm:$0xff] %v3092
    %4117 = vst [vmem:[#allocation10 + $0x1b48] sm:$0xff] %v3093
    %4118 = vst [vmem:[#allocation10 + $0x1b50] sm:$0xff] %v3094
    %4119 = vst [vmem:[#allocation10 + $0x1b58] sm:$0xff] %v3095
    %4120 = vst [vmem:[#allocation10 + $0x1b60] sm:$0xff] %v3096
    %4121 = vst [vmem:[#allocation10 + $0x1b68] sm:$0xff] %v3097
    %4122 = vst [vmem:[#allocation10 + $0x1b70] sm:$0xff] %v3098
    %4123 = vst [vmem:[#allocation10 + $0x1b78] sm:$0xff] %v3099
    %4124 = vst [vmem:[#allocation10 + $0x1b80] sm:$0xff] %v3100
    %4125 = vst [vmem:[#allocation10 + $0x1b88] sm:$0xff] %v3101
    %4126 = vst [vmem:[#allocation10 + $0x1b90] sm:$0xff] %v3102
    %4127 = vst [vmem:[#allocation10 + $0x1b98] sm:$0xff] %v3103
    %4128 = vst [vmem:[#allocation10 + $0x1ba0] sm:$0xff] %v3104
    %4129 = vst [vmem:[#allocation10 + $0x1ba8] sm:$0xff] %v3105
    %4130 = vst [vmem:[#allocation10 + $0x1bb0] sm:$0xff] %v3106
    %4131 = vst [vmem:[#allocation10 + $0x1bb8] sm:$0xff] %v3107
    %4132 = vst [vmem:[#allocation10 + $0x1bc0] sm:$0xff] %v3108
    %4133 = vst [vmem:[#allocation10 + $0x1bc8] sm:$0xff] %v3109
    %4134 = vst [vmem:[#allocation10 + $0x1bd0] sm:$0xff] %v3110
    %4135 = vst [vmem:[#allocation10 + $0x1bd8] sm:$0xff] %v3111
    %4136 = vst [vmem:[#allocation10 + $0x1be0] sm:$0xff] %v3112
    %4137 = vst [vmem:[#allocation10 + $0x1be8] sm:$0xff] %v3113
    %4138 = vst [vmem:[#allocation10 + $0x1bf0] sm:$0xff] %v3114
    %4139 = vst [vmem:[#allocation10 + $0x1bf8] sm:$0xff] %v3115
    %4140 = vst [vmem:[#allocation10 + $0x1c00] sm:$0xff] %v3116
    %4141 = vst [vmem:[#allocation10 + $0x1c08] sm:$0xff] %v3117
    %4142 = vst [vmem:[#allocation10 + $0x1c10] sm:$0xff] %v3118
    %4143 = vst [vmem:[#allocation10 + $0x1c18] sm:$0xff] %v3119
    %4144 = vst [vmem:[#allocation10 + $0x1c20] sm:$0xff] %v3120
    %4145 = vst [vmem:[#allocation10 + $0x1c28] sm:$0xff] %v3121
    %4146 = vst [vmem:[#allocation10 + $0x1c30] sm:$0xff] %v3122
    %4147 = vst [vmem:[#allocation10 + $0x1c38] sm:$0xff] %v3123
    %4148 = vst [vmem:[#allocation10 + $0x1c40] sm:$0xff] %v3124
    %4149 = vst [vmem:[#allocation10 + $0x1c48] sm:$0xff] %v3125
    %4150 = vst [vmem:[#allocation10 + $0x1c50] sm:$0xff] %v3126
    %4151 = vst [vmem:[#allocation10 + $0x1c58] sm:$0xff] %v3127
    %4152 = vst [vmem:[#allocation10 + $0x1c60] sm:$0xff] %v3128
    %4153 = vst [vmem:[#allocation10 + $0x1c68] sm:$0xff] %v3129
    %4154 = vst [vmem:[#allocation10 + $0x1c70] sm:$0xff] %v3130
    %4155 = vst [vmem:[#allocation10 + $0x1c78] sm:$0xff] %v3131
    %4156 = vst [vmem:[#allocation10 + $0x1c80] sm:$0xff] %v3132
    %4157 = vst [vmem:[#allocation10 + $0x1c88] sm:$0xff] %v3133
    %4158 = vst [vmem:[#allocation10 + $0x1c90] sm:$0xff] %v3134
    %4159 = vst [vmem:[#allocation10 + $0x1c98] sm:$0xff] %v3135
    %4160 = vst [vmem:[#allocation10 + $0x1ca0] sm:$0xff] %v3136
    %4161 = vst [vmem:[#allocation10 + $0x1ca8] sm:$0xff] %v3137
    %4162 = vst [vmem:[#allocation10 + $0x1cb0] sm:$0xff] %v3138
    %4163 = vst [vmem:[#allocation10 + $0x1cb8] sm:$0xff] %v3139
    %4164 = vst [vmem:[#allocation10 + $0x1cc0] sm:$0xff] %v3140
    %4165 = vst [vmem:[#allocation10 + $0x1cc8] sm:$0xff] %v3141
    %4166 = vst [vmem:[#allocation10 + $0x1cd0] sm:$0xff] %v3142
    %4167 = vst [vmem:[#allocation10 + $0x1cd8] sm:$0xff] %v3143
    %4168 = vst [vmem:[#allocation10 + $0x1ce0] sm:$0xff] %v3144
    %4169 = vst [vmem:[#allocation10 + $0x1ce8] sm:$0xff] %v3145
    %4170 = vst [vmem:[#allocation10 + $0x1cf0] sm:$0xff] %v3146
    %4171 = vst [vmem:[#allocation10 + $0x1cf8] sm:$0xff] %v3147
    %4172 = vst [vmem:[#allocation10 + $0x1d00] sm:$0xff] %v3148
    %4173 = vst [vmem:[#allocation10 + $0x1d08] sm:$0xff] %v3149
    %4174 = vst [vmem:[#allocation10 + $0x1d10] sm:$0xff] %v3150
    %4175 = vst [vmem:[#allocation10 + $0x1d18] sm:$0xff] %v3151
    %4176 = vst [vmem:[#allocation10 + $0x1d20] sm:$0xff] %v3152
    %4177 = vst [vmem:[#allocation10 + $0x1d28] sm:$0xff] %v3153
    %4178 = vst [vmem:[#allocation10 + $0x1d30] sm:$0xff] %v3154
    %4179 = vst [vmem:[#allocation10 + $0x1d38] sm:$0xff] %v3155
    %4180 = vst [vmem:[#allocation10 + $0x1d40] sm:$0xff] %v3156
    %4181 = vst [vmem:[#allocation10 + $0x1d48] sm:$0xff] %v3157
    %4182 = vst [vmem:[#allocation10 + $0x1d50] sm:$0xff] %v3158
    %4183 = vst [vmem:[#allocation10 + $0x1d58] sm:$0xff] %v3159
    %4184 = vst [vmem:[#allocation10 + $0x1d60] sm:$0xff] %v3160
    %4185 = vst [vmem:[#allocation10 + $0x1d68] sm:$0xff] %v3161
    %4186 = vst [vmem:[#allocation10 + $0x1d70] sm:$0xff] %v3162
    %4187 = vst [vmem:[#allocation10 + $0x1d78] sm:$0xff] %v3163
    %4188 = vst [vmem:[#allocation10 + $0x1d80] sm:$0xff] %v3164
    %4189 = vst [vmem:[#allocation10 + $0x1d88] sm:$0xff] %v3165
    %4190 = vst [vmem:[#allocation10 + $0x1d90] sm:$0xff] %v3166
    %4191 = vst [vmem:[#allocation10 + $0x1d98] sm:$0xff] %v3167
    %4192 = vst [vmem:[#allocation10 + $0x1da0] sm:$0xff] %v3168
    %4193 = vst [vmem:[#allocation10 + $0x1da8] sm:$0xff] %v3169
    %4194 = vst [vmem:[#allocation10 + $0x1db0] sm:$0xff] %v3170
    %4195 = vst [vmem:[#allocation10 + $0x1db8] sm:$0xff] %v3171
    %4196 = vst [vmem:[#allocation10 + $0x1dc0] sm:$0xff] %v3172
    %4197 = vst [vmem:[#allocation10 + $0x1dc8] sm:$0xff] %v3173
    %4198 = vst [vmem:[#allocation10 + $0x1dd0] sm:$0xff] %v3174
    %4199 = vst [vmem:[#allocation10 + $0x1dd8] sm:$0xff] %v3175
    %4200 = vst [vmem:[#allocation10 + $0x1de0] sm:$0xff] %v3176
    %4201 = vst [vmem:[#allocation10 + $0x1de8] sm:$0xff] %v3177
    %4202 = vst [vmem:[#allocation10 + $0x1df0] sm:$0xff] %v3178
    %4203 = vst [vmem:[#allocation10 + $0x1df8] sm:$0xff] %v3179
    %4204 = vst [vmem:[#allocation10 + $0x1e00] sm:$0xff] %v3180
    %4205 = vst [vmem:[#allocation10 + $0x1e08] sm:$0xff] %v3181
    %4206 = vst [vmem:[#allocation10 + $0x1e10] sm:$0xff] %v3182
    %4207 = vst [vmem:[#allocation10 + $0x1e18] sm:$0xff] %v3183
    %4208 = vst [vmem:[#allocation10 + $0x1e20] sm:$0xff] %v3184
    %4209 = vst [vmem:[#allocation10 + $0x1e28] sm:$0xff] %v3185
    %4210 = vst [vmem:[#allocation10 + $0x1e30] sm:$0xff] %v3186
    %4211 = vst [vmem:[#allocation10 + $0x1e38] sm:$0xff] %v3187
    %4212 = vst [vmem:[#allocation10 + $0x1e40] sm:$0xff] %v3188
    %4213 = vst [vmem:[#allocation10 + $0x1e48] sm:$0xff] %v3189
    %4214 = vst [vmem:[#allocation10 + $0x1e50] sm:$0xff] %v3190
    %4215 = vst [vmem:[#allocation10 + $0x1e58] sm:$0xff] %v3191
    %4216 = vst [vmem:[#allocation10 + $0x1e60] sm:$0xff] %v3192
    %4217 = vst [vmem:[#allocation10 + $0x1e68] sm:$0xff] %v3193
    %4218 = vst [vmem:[#allocation10 + $0x1e70] sm:$0xff] %v3194
    %4219 = vst [vmem:[#allocation10 + $0x1e78] sm:$0xff] %v3195
    %4220 = vst [vmem:[#allocation10 + $0x1e80] sm:$0xff] %v3196
    %4221 = vst [vmem:[#allocation10 + $0x1e88] sm:$0xff] %v3197
    %4222 = vst [vmem:[#allocation10 + $0x1e90] sm:$0xff] %v3198
    %4223 = vst [vmem:[#allocation10 + $0x1e98] sm:$0xff] %v3199
    %4224 = vst [vmem:[#allocation10 + $0x1ea0] sm:$0xff] %v3200
    %4225 = vst [vmem:[#allocation10 + $0x1ea8] sm:$0xff] %v3201
    %4226 = vst [vmem:[#allocation10 + $0x1eb0] sm:$0xff] %v3202
    %4227 = vst [vmem:[#allocation10 + $0x1eb8] sm:$0xff] %v3203
    %4228 = vst [vmem:[#allocation10 + $0x1ec0] sm:$0xff] %v3204
    %4229 = vst [vmem:[#allocation10 + $0x1ec8] sm:$0xff] %v3205
    %4230 = vst [vmem:[#allocation10 + $0x1ed0] sm:$0xff] %v3206
    %4231 = vst [vmem:[#allocation10 + $0x1ed8] sm:$0xff] %v3207
    %4232 = vst [vmem:[#allocation10 + $0x1ee0] sm:$0xff] %v3208
    %4233 = vst [vmem:[#allocation10 + $0x1ee8] sm:$0xff] %v3209
    %4234 = vst [vmem:[#allocation10 + $0x1ef0] sm:$0xff] %v3210
    %4235 = vst [vmem:[#allocation10 + $0x1ef8] sm:$0xff] %v3211
    %4236 = vst [vmem:[#allocation10 + $0x1f00] sm:$0xff] %v3212
    %4237 = vst [vmem:[#allocation10 + $0x1f08] sm:$0xff] %v3213
    %4238 = vst [vmem:[#allocation10 + $0x1f10] sm:$0xff] %v3214
    %4239 = vst [vmem:[#allocation10 + $0x1f18] sm:$0xff] %v3215
    %4240 = vst [vmem:[#allocation10 + $0x1f20] sm:$0xff] %v3216
    %4241 = vst [vmem:[#allocation10 + $0x1f28] sm:$0xff] %v3217
    %4242 = vst [vmem:[#allocation10 + $0x1f30] sm:$0xff] %v3218
    %4243 = vst [vmem:[#allocation10 + $0x1f38] sm:$0xff] %v3219
    %4244 = vst [vmem:[#allocation10 + $0x1f40] sm:$0xff] %v3220
    %4245 = vst [vmem:[#allocation10 + $0x1f48] sm:$0xff] %v3221
    %4246 = vst [vmem:[#allocation10 + $0x1f50] sm:$0xff] %v3222
    %4247 = vst [vmem:[#allocation10 + $0x1f58] sm:$0xff] %v3223
    %4248 = vst [vmem:[#allocation10 + $0x1f60] sm:$0xff] %v3224
    %4249 = vst [vmem:[#allocation10 + $0x1f68] sm:$0xff] %v3225
    %4250 = vst [vmem:[#allocation10 + $0x1f70] sm:$0xff] %v3226
    %4251 = vst [vmem:[#allocation10 + $0x1f78] sm:$0xff] %v3227
    %4252 = vst [vmem:[#allocation10 + $0x1f80] sm:$0xff] %v3228
    %4253 = vst [vmem:[#allocation10 + $0x1f88] sm:$0xff] %v3229
    %4254 = vst [vmem:[#allocation10 + $0x1f90] sm:$0xff] %v3230
    %4255 = vst [vmem:[#allocation10 + $0x1f98] sm:$0xff] %v3231
    %4256 = vst [vmem:[#allocation10 + $0x1fa0] sm:$0xff] %v3232
    %4257 = vst [vmem:[#allocation10 + $0x1fa8] sm:$0xff] %v3233
    %4258 = vst [vmem:[#allocation10 + $0x1fb0] sm:$0xff] %v3234
    %4259 = vst [vmem:[#allocation10 + $0x1fb8] sm:$0xff] %v3235
    %4260 = vst [vmem:[#allocation10 + $0x1fc0] sm:$0xff] %v3236
    %4261 = vst [vmem:[#allocation10 + $0x1fc8] sm:$0xff] %v3237
    %4262 = vst [vmem:[#allocation10 + $0x1fd0] sm:$0xff] %v3238
    %4263 = vst [vmem:[#allocation10 + $0x1fd8] sm:$0xff] %v3239
    %4264 = vst [vmem:[#allocation10 + $0x1fe0] sm:$0xff] %v3240
    %4265 = vst [vmem:[#allocation10 + $0x1fe8] sm:$0xff] %v3241
    %4266 = vst [vmem:[#allocation10 + $0x1ff0] sm:$0xff] %v3242
    %4267 = vst [vmem:[#allocation10 + $0x1ff8] sm:$0xff] %v3243
    // Predicated region
    $region38: #{se_block.1} parent=1 // pred_check
      _
    $region39: #{se_block.1} parent=1 // pred_check_branch
      %4269 = sbr.rel (0) target = $region41
    $region40: #{se_block.1} parent=1 // pred_region
      %s4271 = ssub.s32 131072, 131072
      %4272 = vsyncadd [#allocation4], %s4271
      %s4273 = sshll.u32 [#allocation10], 4
      %s4274 = int_to_ptr.vmem [resolvable:$true] %s4273
      %4279 = dma.vmem_to_hbm [thread:$0]  %s4274, 131072, %s5, [#allocation4], 256, 256, 16
    $region41: #{se_block.1} parent=1 // pred_fallthru
      _
    // Predicated region
    $region42: #{se_block.1} parent=1 // pred_check
      _
    $region43: #{se_block.1} parent=1 // pred_check_branch
      %4281 = sbr.rel (0) target = $region45
    $region44: #{se_block.1} parent=1 // pred_region
      %4282 = dma.done [#allocation4], 131072
    $region45: #{se_block.1} parent=1 // pred_fallthru
      _
    %4283 = vsyncpa [#allocation3], 1
    %4284 = vsyncpa [#allocation6], 1
    %4285 = vsyncpa [#allocation9], 1
    %4286 = vsyncpa [#allocation4], 1

</llo_original>
